<compile_context>
chip_gen: v6e
topology: v6e:2x2x1
jax: 0.10.0
libtpu: 0.0.40
codegen_flags: <defaults>
</compile_context>

<pallas_src>
import jax
import jax.numpy as jnp
from jax.experimental import pallas as pl
from jax.experimental.pallas import tpu as pltpu


def _round_up(a, b):
    return ((a + b - 1) // b) * b


def _vmem_tile_bytes(block_shape, dtype):
    """Rough padded-VMEM footprint of one block (lane/sublane padding)."""
    *lead, sub, lane = block_shape
    n = 1
    for d in lead:
        n *= d
    return n * _round_up(sub, 8) * _round_up(lane, 128) * jnp.dtype(dtype).itemsize


def conv2d_relu_pallas(x, w, b, *, stride=1, padding=0,
                       compute_dtype=jnp.bfloat16):
    """PyTorch-equivalent nn.Conv2d(stride, padding) followed by ReLU.

    x: (N, Cin, H, W)   w: (Cout, Cin, KH, KW)   b: (Cout,)
    returns: (N, Cout, Ho, Wo)  (NCHW, same as PyTorch)
    """
    N, Cin, H, W = x.shape
    Cout, Cin_w, KH, KW = w.shape
    assert Cin_w == Cin
    s, p = int(stride), int(padding)
    Ho = (H + 2 * p - KH) // s + 1
    Wo = (W + 2 * p - KW) // s + 1
    assert Ho > 0 and Wo > 0
    HW = Ho * Wo

    # ---- single-pass layout plumbing (no im2col expansion) -----------------
    # NCHW -> NHWC, spatial zero-pad, then phase-split by the stride so every
    # kernel tap (kh, kw) becomes a *unit-stride* window of one phase slab:
    #   xph[n*s*s + (kh%s)*s + (kw%s), ho + kh//s, wo + kw//s, ci]
    #     == x_padded[n, ho*s + kh, wo*s + kw, ci]
    xt = jnp.transpose(x, (0, 2, 3, 1))                              # (N,H,W,Cin)
    Hp, Wp = H + 2 * p, W + 2 * p
    Hs, Ws = _round_up(Hp, s) // s, _round_up(Wp, s) // s
    xp = jnp.pad(xt, ((0, 0),
                      (p, Hs * s - Hp + p),
                      (p, Ws * s - Wp + p),
                      (0, 0)))
    xph = xp.reshape(N, Hs, s, Ws, s, Cin).transpose(0, 2, 4, 1, 3, 5)
    xph = xph.reshape(N * s * s, Hs, Ws, Cin).astype(compute_dtype)

    # Weights (Cout,Cin,KH,KW) -> (KH*KW, Cin, Np); bias -> (1, Np) in f32.
    Np = _round_up(Cout, 128)
    wk = jnp.transpose(w, (2, 3, 1, 0)).reshape(KH * KW, Cin, Cout)
    wk = jnp.pad(wk, ((0, 0), (0, 0), (0, Np - Cout))).astype(compute_dtype)
    bias = jnp.pad(b.astype(jnp.float32), (0, Np - Cout)).reshape(1, Np)

    tn = Np if Np <= 512 else 256          # lane-dense output tiles (>=128)
    J = Np // tn

    # ---- kernel: implicit GEMM over the KH*KW taps --------------------------
    def kernel(x_ref, w_ref, b_ref, o_ref):
        # x_ref: (s*s, Hs, Ws, Cin)  one phase-split padded image (VMEM resident)
        # w_ref: (KH*KW, Cin, tn)    weights for this Cout tile (VMEM resident)
        # b_ref: (1, tn) f32         o_ref: (1, HW, tn)
        acc = jnp.broadcast_to(b_ref[...], (HW, tn)).astype(jnp.float32)
        for kh in range(KH):
            for kw in range(KW):
                a = x_ref[(kh % s) * s + (kw % s),
                          kh // s: kh // s + Ho,
                          kw // s: kw // s + Wo, :]
                acc = acc + jnp.dot(a.reshape(HW, Cin),
                                    w_ref[kh * KW + kw],
                                    preferred_element_type=jnp.float32)
        o_ref[0] = jnp.maximum(acc, 0.0).astype(o_ref.dtype)

    # ---- VMEM budget (double-buffered blocks + live f32 accumulator) --------
    x_blk = (s * s, Hs, Ws, Cin)
    w_blk = (KH * KW, Cin, tn)
    b_blk = (1, tn)
    o_blk = (1, HW, tn)
    est = 2 * (_vmem_tile_bytes(x_blk, compute_dtype)
               + _vmem_tile_bytes(w_blk, compute_dtype)
               + _vmem_tile_bytes(b_blk, jnp.float32)
               + _vmem_tile_bytes(o_blk, x.dtype)) \
        + _round_up(HW, 8) * _round_up(tn, 128) * 4
    vmem_limit = int(min(max(2 * est, 32 * 1024 * 1024), 48 * 1024 * 1024))

    out = pl.pallas_call(
        kernel,
        out_shape=jax.ShapeDtypeStruct((N, HW, Np), x.dtype),
        grid_spec=pltpu.PrefetchScalarGridSpec(
            num_scalar_prefetch=0,
            grid=(N, J),
            in_specs=[
                pl.BlockSpec(x_blk, lambda n, j: (n, 0, 0, 0)),   # activation
                pl.BlockSpec(w_blk, lambda n, j: (0, 0, j)),      # weights
                pl.BlockSpec(b_blk, lambda n, j: (0, j)),         # bias
            ],
            out_specs=pl.BlockSpec(o_blk, lambda n, j: (n, 0, j)),
        ),
        compiler_params=pltpu.CompilerParams(
            dimension_semantics=("parallel", "parallel"),
            vmem_limit_bytes=vmem_limit),
    )(xph, wk, bias)

    # Strip Cout padding and restore PyTorch's NCHW layout.
    out = out[:, :, :Cout].reshape(N, Ho, Wo, Cout)
    return jnp.transpose(out, (0, 3, 1, 2))


if __name__ == "__main__":
    key = jax.random.PRNGKey(0)
    k1, k2, k3 = jax.random.split(key, 3)

    # Small shapes consistent with the module's forward.
    N, Cin, H, W = 2, 4, 16, 16
    Cout, KH, KW = 8, 3, 3
    stride, padding = 1, 1

    x = jax.random.normal(k1, (N, Cin, H, W), dtype=jnp.float32)
    w = jax.random.normal(k2, (Cout, Cin, KH, KW), dtype=jnp.float32) * 0.1
    b = jax.random.normal(k3, (Cout,), dtype=jnp.float32)

    y = conv2d_relu_pallas(x, w, b, stride=stride, padding=padding)
    y = jax.block_until_ready(y)

    # Reference: XLA conv + bias + ReLU (PyTorch nn.Conv2d + ReLU semantics).
    ref = jax.lax.conv_general_dilated(
        x, w, window_strides=(stride, stride),
        padding=((padding, padding), (padding, padding)),
        dimension_numbers=("NCHW", "OIHW", "NCHW"))
    ref = jnp.maximum(ref + b.reshape(1, -1, 1, 1), 0.0)

    assert y.shape == ref.shape, (y.shape, ref.shape)
    assert y.dtype == x.dtype
    # bf16 matmul operands (f32 accumulation) -> bf16-class tolerance.
    assert bool(jnp.allclose(y, ref, atol=2e-2, rtol=2e-2)), (
        "Conv2d+ReLU kernel output mismatch, max abs err = %f"
        % float(jnp.max(jnp.abs(y - ref))))

    print("KERNEL_OK")
</pallas_src>

<mosaic_0001>
module attributes {stable_mosaic.version = 11 : i64} {
  func.func @kernel(%arg0: i32, %arg1: i32, %arg2: memref<1x18x18x4xbf16, #tpu.memory_space<vmem>>, %arg3: memref<9x4x128xbf16, #tpu.memory_space<vmem>>, %arg4: memref<1x128xf32, #tpu.memory_space<vmem>>, %arg5: memref<1x256x128xf32, #tpu.memory_space<vmem>>) attributes {dimension_semantics = [#tpu.dimension_semantics<parallel>, #tpu.dimension_semantics<parallel>], iteration_bounds = array<i64: 2, 1>, scalar_prefetch = 0 : i64, scratch_operands = 0 : i64, tpu.core_type = #tpu.core_type<tc>, window_params = [{transform_indices = @transform_0, window_bounds = array<i64: 1, 18, 18, 4>}, {transform_indices = @transform_1, window_bounds = array<i64: 9, 4, 128>}, {transform_indices = @transform_2, window_bounds = array<i64: 1, 128>}, {transform_indices = @transform_3, window_bounds = array<i64: 1, 256, 128>}]} {
    %c0 = arith.constant 0 : index
    %c0_0 = arith.constant 0 : index
    %0 = vector.load %arg4[%c0, %c0_0] : memref<1x128xf32, #tpu.memory_space<vmem>>, vector<1x128xf32>
    %1 = vector.shape_cast %0 : vector<1x128xf32> to vector<1x128xf32>
    %2 = vector.broadcast %1 : vector<1x128xf32> to vector<256x128xf32>
    %c0_1 = arith.constant 0 : index
    %c0_2 = arith.constant 0 : index
    %c0_3 = arith.constant 0 : index
    %c0_4 = arith.constant 0 : index
    %3 = vector.load %arg2[%c0_1, %c0_2, %c0_3, %c0_4] : memref<1x18x18x4xbf16, #tpu.memory_space<vmem>>, vector<1x16x16x4xbf16>
    %4 = vector.shape_cast %3 : vector<1x16x16x4xbf16> to vector<16x16x4xbf16>
    %5 = vector.shape_cast %4 : vector<16x16x4xbf16> to vector<256x4xbf16>
    %c0_5 = arith.constant 0 : index
    %c0_6 = arith.constant 0 : index
    %c0_7 = arith.constant 0 : index
    %6 = vector.load %arg3[%c0_5, %c0_6, %c0_7] : memref<9x4x128xbf16, #tpu.memory_space<vmem>>, vector<1x4x128xbf16>
    %7 = vector.shape_cast %6 : vector<1x4x128xbf16> to vector<4x128xbf16>
    %cst = arith.constant dense<0.000000e+00> : vector<256x128xf32>
    %8 = tpu.matmul %5, %7, %cst {dimension_numbers = #tpu.dot_dimension_numbers<[1], [0], [0], [1], [0, 0, 1, 1], [], []>} : vector<256x4xbf16>, vector<4x128xbf16>, vector<256x128xf32> -> vector<256x128xf32>
    %9 = arith.addf %2, %8 : vector<256x128xf32>
    %c0_8 = arith.constant 0 : index
    %c0_9 = arith.constant 0 : index
    %c1 = arith.constant 1 : index
    %c0_10 = arith.constant 0 : index
    %10 = vector.load %arg2[%c0_8, %c0_9, %c1, %c0_10] : memref<1x18x18x4xbf16, #tpu.memory_space<vmem>>, vector<1x16x16x4xbf16>
    %11 = vector.shape_cast %10 : vector<1x16x16x4xbf16> to vector<16x16x4xbf16>
    %12 = vector.shape_cast %11 : vector<16x16x4xbf16> to vector<256x4xbf16>
    %c1_11 = arith.constant 1 : index
    %c0_12 = arith.constant 0 : index
    %c0_13 = arith.constant 0 : index
    %13 = vector.load %arg3[%c1_11, %c0_12, %c0_13] : memref<9x4x128xbf16, #tpu.memory_space<vmem>>, vector<1x4x128xbf16>
    %14 = vector.shape_cast %13 : vector<1x4x128xbf16> to vector<4x128xbf16>
    %cst_14 = arith.constant dense<0.000000e+00> : vector<256x128xf32>
    %15 = tpu.matmul %12, %14, %cst_14 {dimension_numbers = #tpu.dot_dimension_numbers<[1], [0], [0], [1], [0, 0, 1, 1], [], []>} : vector<256x4xbf16>, vector<4x128xbf16>, vector<256x128xf32> -> vector<256x128xf32>
    %16 = arith.addf %9, %15 : vector<256x128xf32>
    %c0_15 = arith.constant 0 : index
    %c0_16 = arith.constant 0 : index
    %c2 = arith.constant 2 : index
    %c0_17 = arith.constant 0 : index
    %17 = vector.load %arg2[%c0_15, %c0_16, %c2, %c0_17] : memref<1x18x18x4xbf16, #tpu.memory_space<vmem>>, vector<1x16x16x4xbf16>
    %18 = vector.shape_cast %17 : vector<1x16x16x4xbf16> to vector<16x16x4xbf16>
    %19 = vector.shape_cast %18 : vector<16x16x4xbf16> to vector<256x4xbf16>
    %c2_18 = arith.constant 2 : index
    %c0_19 = arith.constant 0 : index
    %c0_20 = arith.constant 0 : index
    %20 = vector.load %arg3[%c2_18, %c0_19, %c0_20] : memref<9x4x128xbf16, #tpu.memory_space<vmem>>, vector<1x4x128xbf16>
    %21 = vector.shape_cast %20 : vector<1x4x128xbf16> to vector<4x128xbf16>
    %cst_21 = arith.constant dense<0.000000e+00> : vector<256x128xf32>
    %22 = tpu.matmul %19, %21, %cst_21 {dimension_numbers = #tpu.dot_dimension_numbers<[1], [0], [0], [1], [0, 0, 1, 1], [], []>} : vector<256x4xbf16>, vector<4x128xbf16>, vector<256x128xf32> -> vector<256x128xf32>
    %23 = arith.addf %16, %22 : vector<256x128xf32>
    %c0_22 = arith.constant 0 : index
    %c1_23 = arith.constant 1 : index
    %c0_24 = arith.constant 0 : index
    %c0_25 = arith.constant 0 : index
    %24 = vector.load %arg2[%c0_22, %c1_23, %c0_24, %c0_25] : memref<1x18x18x4xbf16, #tpu.memory_space<vmem>>, vector<1x16x16x4xbf16>
    %25 = vector.shape_cast %24 : vector<1x16x16x4xbf16> to vector<16x16x4xbf16>
    %26 = vector.shape_cast %25 : vector<16x16x4xbf16> to vector<256x4xbf16>
    %c3 = arith.constant 3 : index
    %c0_26 = arith.constant 0 : index
    %c0_27 = arith.constant 0 : index
    %27 = vector.load %arg3[%c3, %c0_26, %c0_27] : memref<9x4x128xbf16, #tpu.memory_space<vmem>>, vector<1x4x128xbf16>
    %28 = vector.shape_cast %27 : vector<1x4x128xbf16> to vector<4x128xbf16>
    %cst_28 = arith.constant dense<0.000000e+00> : vector<256x128xf32>
    %29 = tpu.matmul %26, %28, %cst_28 {dimension_numbers = #tpu.dot_dimension_numbers<[1], [0], [0], [1], [0, 0, 1, 1], [], []>} : vector<256x4xbf16>, vector<4x128xbf16>, vector<256x128xf32> -> vector<256x128xf32>
    %30 = arith.addf %23, %29 : vector<256x128xf32>
    %c0_29 = arith.constant 0 : index
    %c1_30 = arith.constant 1 : index
    %c1_31 = arith.constant 1 : index
    %c0_32 = arith.constant 0 : index
    %31 = vector.load %arg2[%c0_29, %c1_30, %c1_31, %c0_32] : memref<1x18x18x4xbf16, #tpu.memory_space<vmem>>, vector<1x16x16x4xbf16>
    %32 = vector.shape_cast %31 : vector<1x16x16x4xbf16> to vector<16x16x4xbf16>
    %33 = vector.shape_cast %32 : vector<16x16x4xbf16> to vector<256x4xbf16>
    %c4 = arith.constant 4 : index
    %c0_33 = arith.constant 0 : index
    %c0_34 = arith.constant 0 : index
    %34 = vector.load %arg3[%c4, %c0_33, %c0_34] : memref<9x4x128xbf16, #tpu.memory_space<vmem>>, vector<1x4x128xbf16>
    %35 = vector.shape_cast %34 : vector<1x4x128xbf16> to vector<4x128xbf16>
    %cst_35 = arith.constant dense<0.000000e+00> : vector<256x128xf32>
    %36 = tpu.matmul %33, %35, %cst_35 {dimension_numbers = #tpu.dot_dimension_numbers<[1], [0], [0], [1], [0, 0, 1, 1], [], []>} : vector<256x4xbf16>, vector<4x128xbf16>, vector<256x128xf32> -> vector<256x128xf32>
    %37 = arith.addf %30, %36 : vector<256x128xf32>
    %c0_36 = arith.constant 0 : index
    %c1_37 = arith.constant 1 : index
    %c2_38 = arith.constant 2 : index
    %c0_39 = arith.constant 0 : index
    %38 = vector.load %arg2[%c0_36, %c1_37, %c2_38, %c0_39] : memref<1x18x18x4xbf16, #tpu.memory_space<vmem>>, vector<1x16x16x4xbf16>
    %39 = vector.shape_cast %38 : vector<1x16x16x4xbf16> to vector<16x16x4xbf16>
    %40 = vector.shape_cast %39 : vector<16x16x4xbf16> to vector<256x4xbf16>
    %c5 = arith.constant 5 : index
    %c0_40 = arith.constant 0 : index
    %c0_41 = arith.constant 0 : index
    %41 = vector.load %arg3[%c5, %c0_40, %c0_41] : memref<9x4x128xbf16, #tpu.memory_space<vmem>>, vector<1x4x128xbf16>
    %42 = vector.shape_cast %41 : vector<1x4x128xbf16> to vector<4x128xbf16>
    %cst_42 = arith.constant dense<0.000000e+00> : vector<256x128xf32>
    %43 = tpu.matmul %40, %42, %cst_42 {dimension_numbers = #tpu.dot_dimension_numbers<[1], [0], [0], [1], [0, 0, 1, 1], [], []>} : vector<256x4xbf16>, vector<4x128xbf16>, vector<256x128xf32> -> vector<256x128xf32>
    %44 = arith.addf %37, %43 : vector<256x128xf32>
    %c0_43 = arith.constant 0 : index
    %c2_44 = arith.constant 2 : index
    %c0_45 = arith.constant 0 : index
    %c0_46 = arith.constant 0 : index
    %45 = vector.load %arg2[%c0_43, %c2_44, %c0_45, %c0_46] : memref<1x18x18x4xbf16, #tpu.memory_space<vmem>>, vector<1x16x16x4xbf16>
    %46 = vector.shape_cast %45 : vector<1x16x16x4xbf16> to vector<16x16x4xbf16>
    %47 = vector.shape_cast %46 : vector<16x16x4xbf16> to vector<256x4xbf16>
    %c6 = arith.constant 6 : index
    %c0_47 = arith.constant 0 : index
    %c0_48 = arith.constant 0 : index
    %48 = vector.load %arg3[%c6, %c0_47, %c0_48] : memref<9x4x128xbf16, #tpu.memory_space<vmem>>, vector<1x4x128xbf16>
    %49 = vector.shape_cast %48 : vector<1x4x128xbf16> to vector<4x128xbf16>
    %cst_49 = arith.constant dense<0.000000e+00> : vector<256x128xf32>
    %50 = tpu.matmul %47, %49, %cst_49 {dimension_numbers = #tpu.dot_dimension_numbers<[1], [0], [0], [1], [0, 0, 1, 1], [], []>} : vector<256x4xbf16>, vector<4x128xbf16>, vector<256x128xf32> -> vector<256x128xf32>
    %51 = arith.addf %44, %50 : vector<256x128xf32>
    %c0_50 = arith.constant 0 : index
    %c2_51 = arith.constant 2 : index
    %c1_52 = arith.constant 1 : index
    %c0_53 = arith.constant 0 : index
    %52 = vector.load %arg2[%c0_50, %c2_51, %c1_52, %c0_53] : memref<1x18x18x4xbf16, #tpu.memory_space<vmem>>, vector<1x16x16x4xbf16>
    %53 = vector.shape_cast %52 : vector<1x16x16x4xbf16> to vector<16x16x4xbf16>
    %54 = vector.shape_cast %53 : vector<16x16x4xbf16> to vector<256x4xbf16>
    %c7 = arith.constant 7 : index
    %c0_54 = arith.constant 0 : index
    %c0_55 = arith.constant 0 : index
    %55 = vector.load %arg3[%c7, %c0_54, %c0_55] : memref<9x4x128xbf16, #tpu.memory_space<vmem>>, vector<1x4x128xbf16>
    %56 = vector.shape_cast %55 : vector<1x4x128xbf16> to vector<4x128xbf16>
    %cst_56 = arith.constant dense<0.000000e+00> : vector<256x128xf32>
    %57 = tpu.matmul %54, %56, %cst_56 {dimension_numbers = #tpu.dot_dimension_numbers<[1], [0], [0], [1], [0, 0, 1, 1], [], []>} : vector<256x4xbf16>, vector<4x128xbf16>, vector<256x128xf32> -> vector<256x128xf32>
    %58 = arith.addf %51, %57 : vector<256x128xf32>
    %c0_57 = arith.constant 0 : index
    %c2_58 = arith.constant 2 : index
    %c2_59 = arith.constant 2 : index
    %c0_60 = arith.constant 0 : index
    %59 = vector.load %arg2[%c0_57, %c2_58, %c2_59, %c0_60] : memref<1x18x18x4xbf16, #tpu.memory_space<vmem>>, vector<1x16x16x4xbf16>
    %60 = vector.shape_cast %59 : vector<1x16x16x4xbf16> to vector<16x16x4xbf16>
    %61 = vector.shape_cast %60 : vector<16x16x4xbf16> to vector<256x4xbf16>
    %c8 = arith.constant 8 : index
    %c0_61 = arith.constant 0 : index
    %c0_62 = arith.constant 0 : index
    %62 = vector.load %arg3[%c8, %c0_61, %c0_62] : memref<9x4x128xbf16, #tpu.memory_space<vmem>>, vector<1x4x128xbf16>
    %63 = vector.shape_cast %62 : vector<1x4x128xbf16> to vector<4x128xbf16>
    %cst_63 = arith.constant dense<0.000000e+00> : vector<256x128xf32>
    %64 = tpu.matmul %61, %63, %cst_63 {dimension_numbers = #tpu.dot_dimension_numbers<[1], [0], [0], [1], [0, 0, 1, 1], [], []>} : vector<256x4xbf16>, vector<4x128xbf16>, vector<256x128xf32> -> vector<256x128xf32>
    %65 = arith.addf %58, %64 : vector<256x128xf32>
    %cst_64 = arith.constant 0.000000e+00 : f32
    %66 = vector.broadcast %cst_64 : f32 to vector<256x128xf32>
    %67 = arith.maximumf %65, %66 : vector<256x128xf32>
    %c0_65 = arith.constant 0 : index
    %c0_66 = arith.constant 0 : index
    %c0_67 = arith.constant 0 : index
    %68 = vector.load %arg5[%c0_65, %c0_66, %c0_67] : memref<1x256x128xf32, #tpu.memory_space<vmem>>, vector<1x256x128xf32>
    %69 = vector.shape_cast %68 : vector<1x256x128xf32> to vector<256x128xf32>
    %70 = vector.shape_cast %67 : vector<256x128xf32> to vector<1x256x128xf32>
    tpu.vector_store %arg5[%c0_65, %c0_66, %c0_67], %70 {strides = array<i32>} : memref<1x256x128xf32, #tpu.memory_space<vmem>>, vector<1x256x128xf32>,
    return
  }
  func.func @transform_0(%arg0: i32, %arg1: i32) -> (i32, i32, i32, i32) {
    %c0_i32 = arith.constant 0 : i32
    %c0_i32_0 = arith.constant 0 : i32
    %c0_i32_1 = arith.constant 0 : i32
    %c0_i32_2 = arith.constant 0 : i32
    return %arg0, %c0_i32, %c0_i32_0, %c0_i32_1 : i32, i32, i32, i32
  }
  func.func @transform_1(%arg0: i32, %arg1: i32) -> (i32, i32, i32) {
    %c0_i32 = arith.constant 0 : i32
    %c0_i32_0 = arith.constant 0 : i32
    %c0_i32_1 = arith.constant 0 : i32
    return %c0_i32, %c0_i32_0, %arg1 : i32, i32, i32
  }
  func.func @transform_2(%arg0: i32, %arg1: i32) -> (i32, i32) {
    %c0_i32 = arith.constant 0 : i32
    %c0_i32_0 = arith.constant 0 : i32
    return %c0_i32, %arg1 : i32, i32
  }
  func.func @transform_3(%arg0: i32, %arg1: i32) -> (i32, i32, i32) {
    %c0_i32 = arith.constant 0 : i32
    %c0_i32_0 = arith.constant 0 : i32
    return %arg0, %c0_i32, %arg1 : i32, i32, i32
  }
}

</mosaic_0001>

<llo_original>
// kernel: tpu_custom_call.1
$region0: #{tpu_custom_call.1}
  #allocation0 [shape = 'u32[]', space=smem, size = 0x4, offset = 0x4, fixed_abs, tag = 'smem constant byte address 0x4 - core index']
  #allocation1 [shape = 'u32[144,128]{1,0:T(1,128)}', space=vmem, size = 0x12000, scoped, tag = 'internal scratch']
  %s0 = inlined_call_operand.vmem [shape: bf16[2,18,18,4], index: 0, kind: input, shape index: {}]
  %s1 = inlined_call_operand.vmem [shape: bf16[9,4,128], index: 1, kind: input, shape index: {}]
  %s2 = inlined_call_operand.vmem [shape: f32[1,128], index: 2, kind: input, shape index: {}]
  %s3 = inlined_call_operand.hbm [shape: f32[2,256,128], index: 3, kind: output, shape index: {}]
  %s4 = sld [smem:[#allocation0]]
  $region45: #{tpu_custom_call.1} parent=0
    _
  %s6 = ssub.s32 1, %s4
  %s7 = scalar_select 0, %s6, %s4
  $region1: #{tpu_custom_call.1} parent=0
    #allocation2 [shape = 'u8[262144]{0}', space=vmem, size = 0x40000, scoped, tag = 'output window, operand 0']
    #allocation3 [shape = 's32[2]{0}', space=sflag, size = 0x8, scoped, tag = 'scoped memory for tpu_custom_call.1']
    %8 = vsyncpa [#allocation3], 0
    %s9 = scalar_lea.sflag [#allocation3], 1
    %10 = vsyncpa %s9, 0
    loop: start=0, step=1, limit=4
    $region2: #{tpu_custom_call.1} parent=1 // loop_pre_header
      _
    $region3: #{tpu_custom_call.1} parent=1 // loop_header
      %s12 = sphi 0, %s16
      %p13 = scmp.ge.s32.totalorder %s12, 4
      %s19 = sphi 0, %s31
      %s20 = sphi 0, %s27
      %s21 = sphi 0, %s19
      %s22 = sphi 0, %s20
      %s23 = sphi 0, %s21
      %s24 = sphi 0, %s22
      %s34 = sphi 0, %s36
      %s37 = sphi 0, %s34
      %s38 = sphi 0, %s37
      %s54 = sphi 0, %s38
      %s60 = sphi 0, %s62
      %s63 = sphi 0, %s60
      %s64 = sphi 0, %s63
      %s80 = sphi 0, %s64
      %s86 = sphi 0, %s88
      %s89 = sphi 0, %s86
      %s90 = sphi 0, %s89
      %s106 = sphi 0, %s90
      %s114 = sphi 0, %s116
      %s117 = sphi 0, %s114
      %s118 = sphi 0, %s117
      %s134 = sphi 0, %s118
    $region4: #{tpu_custom_call.1} parent=1 // loop_header_branch
      %15 = sbr.rel (%p13) target = $region8
    $region5: #{tpu_custom_call.1} parent=1 // loop_body
      %s17 = ssub.s32 %s12, 1
      %s18 = ssub.s32 %s12, 2
      %s25 = sadd.s32 1, %s20
      %p26 = scmp.ge.s32.totalorder %s25, 1
      %s27 = scalar_select %p26, 0, %s25
      %s28 = sadd.s32 1, %s19
      %s29 = scalar_select %p26, %s28, %s19
      %p30 = scmp.ge.s32.totalorder %s29, 2
      %s31 = scalar_select %p30, 0, %s29
      %s32 = ssub.s32 %s19, %s31
      %p33 = scmp.eq.s32.totalorder %s32, 0
      %s35 = sadd.s32 %s34, 1
      %s36 = scalar_select %p33, %s34, %s35
      %p39 = pneg %p33
      %p40 = scmp.eq.s32.totalorder %s12, 1
      %p41 = por %p39, %p40
      %p42 = scmp.ne.s32.totalorder %s34, %s37
      %p43 = scmp.eq.s32.totalorder %s12, 0
      %p44 = por %p42, %p43
      %p45 = scmp.ne.s32.totalorder %s34, %s37
      %p46 = scmp.eq.s32.totalorder %s17, 1
      %p47 = por %p45, %p46
      %p48 = scmp.ne.s32.totalorder %s37, %s38
      %p49 = scmp.eq.s32.totalorder %s17, 0
      %p50 = por %p48, %p49
      %p51 = scmp.ne.s32.totalorder %s37, %s38
      %p52 = scmp.eq.s32.totalorder %s18, 1
      %p53 = por %p51, %p52
      %p55 = scmp.ne.s32.totalorder %s38, %s54
      %p56 = scmp.eq.s32.totalorder %s18, 0
      %p57 = por %p55, %p56
      %s58 = ssub.s32 %s20, %s27
      %p59 = scmp.eq.s32.totalorder %s58, 0
      %s61 = sadd.s32 %s60, 1
      %s62 = scalar_select %p59, %s60, %s61
      %p65 = pneg %p59
      %p66 = scmp.eq.s32.totalorder %s12, 1
      %p67 = por %p65, %p66
      %p68 = scmp.ne.s32.totalorder %s60, %s63
      %p69 = scmp.eq.s32.totalorder %s12, 0
      %p70 = por %p68, %p69
      %p71 = scmp.ne.s32.totalorder %s60, %s63
      %p72 = scmp.eq.s32.totalorder %s17, 1
      %p73 = por %p71, %p72
      %p74 = scmp.ne.s32.totalorder %s63, %s64
      %p75 = scmp.eq.s32.totalorder %s17, 0
      %p76 = por %p74, %p75
      %p77 = scmp.ne.s32.totalorder %s63, %s64
      %p78 = scmp.eq.s32.totalorder %s18, 1
      %p79 = por %p77, %p78
      %p81 = scmp.ne.s32.totalorder %s64, %s80
      %p82 = scmp.eq.s32.totalorder %s18, 0
      %p83 = por %p81, %p82
      %s84 = ssub.s32 %s20, %s27
      %p85 = scmp.eq.s32.totalorder %s84, 0
      %s87 = sadd.s32 %s86, 1
      %s88 = scalar_select %p85, %s86, %s87
      %p91 = pneg %p85
      %p92 = scmp.eq.s32.totalorder %s12, 1
      %p93 = por %p91, %p92
      %p94 = scmp.ne.s32.totalorder %s86, %s89
      %p95 = scmp.eq.s32.totalorder %s12, 0
      %p96 = por %p94, %p95
      %p97 = scmp.ne.s32.totalorder %s86, %s89
      %p98 = scmp.eq.s32.totalorder %s17, 1
      %p99 = por %p97, %p98
      %p100 = scmp.ne.s32.totalorder %s89, %s90
      %p101 = scmp.eq.s32.totalorder %s17, 0
      %p102 = por %p100, %p101
      %p103 = scmp.ne.s32.totalorder %s89, %s90
      %p104 = scmp.eq.s32.totalorder %s18, 1
      %p105 = por %p103, %p104
      %p107 = scmp.ne.s32.totalorder %s90, %s106
      %p108 = scmp.eq.s32.totalorder %s18, 0
      %p109 = por %p107, %p108
      %s110 = ssub.s32 %s19, %s31
      %s111 = ssub.s32 %s20, %s27
      %s112 = sor.u32 %s110, %s111
      %p113 = scmp.eq.s32.totalorder %s112, 0
      %s115 = sadd.s32 %s114, 1
      %s116 = scalar_select %p113, %s114, %s115
      %p119 = pneg %p113
      %p120 = scmp.eq.s32.totalorder %s12, 1
      %p121 = por %p119, %p120
      %p122 = scmp.ne.s32.totalorder %s114, %s117
      %p123 = scmp.eq.s32.totalorder %s12, 0
      %p124 = por %p122, %p123
      %p125 = scmp.ne.s32.totalorder %s114, %s117
      %p126 = scmp.eq.s32.totalorder %s17, 1
      %p127 = por %p125, %p126
      %p128 = scmp.ne.s32.totalorder %s117, %s118
      %p129 = scmp.eq.s32.totalorder %s17, 0
      %p130 = por %p128, %p129
      %p131 = scmp.ne.s32.totalorder %s117, %s118
      %p132 = scmp.eq.s32.totalorder %s18, 1
      %p133 = por %p131, %p132
      %p135 = scmp.ne.s32.totalorder %s118, %s134
      %p136 = scmp.eq.s32.totalorder %s18, 0
      %p137 = por %p135, %p136
      %p138 = scmp.le.s32.totalorder 1, %s12
      %p139 = scmp.lt.s32.totalorder %s12, 3
      %p140 = pnand %p138, %p139
      %p141 = pneg %p140
      // Predicated region
      $region9: #{tpu_custom_call.1} parent=5 // pred_check
        _
      $region10: #{tpu_custom_call.1} parent=5 // pred_check_branch
        %143 = sbr.rel (%p140) target = $region12
      $region11: #{tpu_custom_call.1} parent=5 // pred_region
        %s144 = ssub.s32 %s12, 1
        // Predicated region
        $region13: #{tpu_custom_call.1} parent=11 // pred_check
          %p145 = pneg %p76
        $region14: #{tpu_custom_call.1} parent=11 // pred_check_branch
          %147 = sbr.rel (%p145) target = $region16
        $region15: #{tpu_custom_call.1} parent=11 // pred_region
          %p148 = scmp.lt.s32.totalorder %s22, 0
          %s149 = scalar_select %p148, %s22, 0
          %s150 = smul.addr %s149, 2
          %s151 = scalar_lea.vmem %s1, %s150
        $region16: #{tpu_custom_call.1} parent=11 // pred_fallthru
          _
        // Predicated region
        $region17: #{tpu_custom_call.1} parent=11 // pred_check
          %p152 = pneg %p102
        $region18: #{tpu_custom_call.1} parent=11 // pred_check_branch
          %154 = sbr.rel (%p152) target = $region20
        $region19: #{tpu_custom_call.1} parent=11 // pred_region
          %p155 = scmp.lt.s32.totalorder %s22, 0
          %s156 = scalar_select %p155, %s22, 0
          %s157 = scalar_lea.vmem %s2, %s156
        $region20: #{tpu_custom_call.1} parent=11 // pred_fallthru
          _
      $region12: #{tpu_custom_call.1} parent=5 // pred_fallthru
        _
      %p158 = scmp.lt.s32.totalorder %s12, 2
      // Predicated region
      $region21: #{tpu_custom_call.1} parent=5 // pred_check
        %p159 = pneg %p158
      $region22: #{tpu_custom_call.1} parent=5 // pred_check_branch
        %161 = sbr.rel (%p159) target = $region24
      $region23: #{tpu_custom_call.1} parent=5 // pred_region
        // Predicated region
        $region25: #{tpu_custom_call.1} parent=23 // pred_check
          %p162 = pneg %p44
        $region26: #{tpu_custom_call.1} parent=23 // pred_check_branch
          %164 = sbr.rel (%p162) target = $region28
        $region27: #{tpu_custom_call.1} parent=23 // pred_region
          %p165 = scmp.lt.s32.totalorder %s19, 1
          %s166 = scalar_select %p165, %s19, 1
          %s167 = smul.addr %s166, 54
          %s168 = smul.addr %s167, 4
          %s169 = scalar_lea.vmem %s0, %s168
        $region28: #{tpu_custom_call.1} parent=23 // pred_fallthru
          _
      $region24: #{tpu_custom_call.1} parent=5 // pred_fallthru
        _
      %p170 = scmp.le.s32.totalorder 1, %s12
      %p171 = scmp.lt.s32.totalorder %s12, 3
      %p172 = pnand %p170, %p171
      %p173 = pneg %p172
      // Predicated region
      $region29: #{tpu_custom_call.1} parent=5 // pred_check
        _
      $region30: #{tpu_custom_call.1} parent=5 // pred_check_branch
        %175 = sbr.rel (%p172) target = $region32
      $region31: #{tpu_custom_call.1} parent=5 // pred_region
        %s176 = ssub.s32 %s12, 1
        %p177 = scmp.lt.s32.totalorder %s21, 1
        %s178 = scalar_select %p177, %s21, 1
        %s179 = smul.addr %s178, 54
        %s180 = smul.addr %s179, 4
        %s181 = scalar_lea.vmem %s0, %s180
        %p182 = pneg %p50
        %p183 = pneg %p47
        %p184 = scmp.lt.s32.totalorder %s22, 0
        %s185 = scalar_select %p184, %s22, 0
        %s186 = smul.addr %s185, 2
        %s187 = scalar_lea.vmem %s1, %s186
        %p188 = pneg %p76
        %p189 = pneg %p73
        %p190 = scmp.lt.s32.totalorder %s22, 0
        %s191 = scalar_select %p190, %s22, 0
        %s192 = scalar_lea.vmem %s2, %s191
        %p193 = pneg %p102
        %p194 = pneg %p99
        %p195 = pneg %p130
        %p196 = pneg %p127
        %s197 = sand.u32 %s117, 1
        %s198 = scalar_lea.sflag [#allocation3], %s197
        %s199 = sand.u32 %s117, 1
        %s200 = smul.addr %s199, 256
        %s201 = scalar_lea.vmem [#allocation2], %s200
        %p202 = scmp.lt.s32.totalorder %s21, 1
        %s203 = scalar_select %p202, %s21, 1
        %s204 = smul.addr %s203, 54
        %s205 = smul.addr %s204, 4
        %s206 = scalar_lea.vmem %s0, %s205
        %p207 = scmp.lt.s32.totalorder %s22, 0
        %s208 = scalar_select %p207, %s22, 0
        %s209 = smul.addr %s208, 2
        %s210 = scalar_lea.vmem %s1, %s209
        %p211 = scmp.lt.s32.totalorder %s22, 0
        %s212 = scalar_select %p211, %s22, 0
        %s213 = scalar_lea.vmem %s2, %s212
        %v215 = vld [vmem:[%s213] sm:$0x1]
        %v217 = vlaneseq
        %v218 = vshrl.u32 %v217, 7
        %v219 = vsub.s32 0, %v218
        %v220 = vrot.slane %v215, %v219
        %v222 = vld [vmem:[%s206] sm:$0xf]
        %v223 = vld [vmem:[%s206 + $0x4] sm:$0xf]
        %v224 = vld [vmem:[%s206 + $0xc] sm:$0xf]
        %v225 = vld [vmem:[%s206 + $0x10] sm:$0xf]
        %v226 = vld [vmem:[%s206 + $0x18] sm:$0xf]
        %v227 = vld [vmem:[%s206 + $0x1c] sm:$0xf]
        %v228 = vld [vmem:[%s206 + $0x24] sm:$0xf]
        %v229 = vld [vmem:[%s206 + $0x28] sm:$0xf]
        %v230 = vld [vmem:[%s206 + $0x30] sm:$0xf]
        %v231 = vld [vmem:[%s206 + $0x34] sm:$0xf]
        %v232 = vld [vmem:[%s206 + $0x3c] sm:$0xf]
        %v233 = vld [vmem:[%s206 + $0x40] sm:$0xf]
        %v234 = vld [vmem:[%s206 + $0x48] sm:$0xf]
        %v235 = vld [vmem:[%s206 + $0x4c] sm:$0xf]
        %v236 = vld [vmem:[%s206 + $0x54] sm:$0xf]
        %v237 = vld [vmem:[%s206 + $0x58] sm:$0xf]
        %v238 = vld [vmem:[%s206 + $0x60] sm:$0xf]
        %v239 = vld [vmem:[%s206 + $0x64] sm:$0xf]
        %v240 = vld [vmem:[%s206 + $0x6c] sm:$0xf]
        %v241 = vld [vmem:[%s206 + $0x70] sm:$0xf]
        %v242 = vld [vmem:[%s206 + $0x78] sm:$0xf]
        %v243 = vld [vmem:[%s206 + $0x7c] sm:$0xf]
        %v244 = vld [vmem:[%s206 + $0x84] sm:$0xf]
        %v245 = vld [vmem:[%s206 + $0x88] sm:$0xf]
        %v246 = vld [vmem:[%s206 + $0x90] sm:$0xf]
        %v247 = vld [vmem:[%s206 + $0x94] sm:$0xf]
        %v248 = vld [vmem:[%s206 + $0x9c] sm:$0xf]
        %v249 = vld [vmem:[%s206 + $0xa0] sm:$0xf]
        %v250 = vld [vmem:[%s206 + $0xa8] sm:$0xf]
        %v251 = vld [vmem:[%s206 + $0xac] sm:$0xf]
        %v252 = vld [vmem:[%s206 + $0xb4] sm:$0xf]
        %v253 = vld [vmem:[%s206 + $0xb8] sm:$0xf]
        %v254 = vld [vmem:[%s210] sm:$0x3]
        %v287 = vunpack.c.l.b16 %v222
        %v288 = vunpack.c.l.b16 %v223
        %v289 = vunpack.c.l.b16 %v224
        %v290 = vunpack.c.l.b16 %v225
        %v291 = vunpack.c.l.b16 %v226
        %v292 = vunpack.c.l.b16 %v227
        %v293 = vunpack.c.l.b16 %v228
        %v294 = vunpack.c.l.b16 %v229
        %v295 = vunpack.c.l.b16 %v230
        %v296 = vunpack.c.l.b16 %v231
        %v297 = vunpack.c.l.b16 %v232
        %v298 = vunpack.c.l.b16 %v233
        %v299 = vunpack.c.l.b16 %v234
        %v300 = vunpack.c.l.b16 %v235
        %v301 = vunpack.c.l.b16 %v236
        %v302 = vunpack.c.l.b16 %v237
        %v303 = vunpack.c.l.b16 %v238
        %v304 = vunpack.c.l.b16 %v239
        %v305 = vunpack.c.l.b16 %v240
        %v306 = vunpack.c.l.b16 %v241
        %v307 = vunpack.c.l.b16 %v242
        %v308 = vunpack.c.l.b16 %v243
        %v309 = vunpack.c.l.b16 %v244
        %v310 = vunpack.c.l.b16 %v245
        %v311 = vunpack.c.l.b16 %v246
        %v312 = vunpack.c.l.b16 %v247
        %v313 = vunpack.c.l.b16 %v248
        %v314 = vunpack.c.l.b16 %v249
        %v315 = vunpack.c.l.b16 %v250
        %v316 = vunpack.c.l.b16 %v251
        %v317 = vunpack.c.l.b16 %v252
        %v318 = vunpack.c.l.b16 %v253
        %v319 = vpack.c.b16 %v288, %v287
        %v320 = vpack.c.b16 %v290, %v289
        %v321 = vpack.c.b16 %v292, %v291
        %v322 = vpack.c.b16 %v294, %v293
        %v323 = vpack.c.b16 %v296, %v295
        %v324 = vpack.c.b16 %v298, %v297
        %v325 = vpack.c.b16 %v300, %v299
        %v326 = vpack.c.b16 %v302, %v301
        %v327 = vpack.c.b16 %v304, %v303
        %v328 = vpack.c.b16 %v306, %v305
        %v329 = vpack.c.b16 %v308, %v307
        %v330 = vpack.c.b16 %v310, %v309
        %v331 = vpack.c.b16 %v312, %v311
        %v332 = vpack.c.b16 %v314, %v313
        %v333 = vpack.c.b16 %v316, %v315
        %v334 = vpack.c.b16 %v318, %v317
        %vm335 = vcmask 31744
        %v337 = vsel %vm335, %v319, 0
        %v340 = vsel %vm335, %v320, 0
        %v343 = vsel %vm335, %v321, 0
        %v346 = vsel %vm335, %v322, 0
        %v349 = vsel %vm335, %v323, 0
        %v352 = vsel %vm335, %v324, 0
        %v355 = vsel %vm335, %v325, 0
        %v358 = vsel %vm335, %v326, 0
        %v361 = vsel %vm335, %v327, 0
        %v364 = vsel %vm335, %v328, 0
        %v367 = vsel %vm335, %v329, 0
        %v370 = vsel %vm335, %v330, 0
        %v373 = vsel %vm335, %v331, 0
        %v376 = vsel %vm335, %v332, 0
        %v379 = vsel %vm335, %v333, 0
        %v382 = vsel %vm335, %v334, 0
        %vm384 = vcmask 1041408
        %v386 = vsel %vm384, %v254, 0
        %388 = vmatprep.subr.bf16.mxu0 0
        %389 = vmatpush1.bf16.msra.mxu0 0
        %390 = vmatprep.subr.bf16.mxu0 0
        %391 = vmatpush1.bf16.msra.mxu0 0
        %392 = vmatprep.subr.bf16.mxu0 0
        %393 = vmatpush1.bf16.msra.mxu0 0
        %394 = vmatprep.subr.bf16.mxu0 0
        %395 = vmatpush1.bf16.msra.mxu0 0
        %396 = vmatprep.subr.bf16.mxu0 0
        %397 = vmatpush1.bf16.msra.mxu0 0
        %398 = vmatprep.subr.bf16.mxu0 0
        %399 = vmatpush1.bf16.msra.mxu0 0
        %400 = vmatprep.subr.bf16.mxu0 0
        %401 = vmatpush1.bf16.msra.mxu0 0
        %402 = vmatprep.subr.bf16.mxu0 0
        %403 = vmatpush1.bf16.msra.mxu0 %v386
        %404 = vmatprep.subr.bf16.mxu0 0
        %405 = vmatpush2.bf16.msra.mxu0 0
        %406 = vmatprep.subr.bf16.mxu0 0
        %407 = vmatpush2.bf16.msra.mxu0 0
        %408 = vmatprep.subr.bf16.mxu0 0
        %409 = vmatpush2.bf16.msra.mxu0 0
        %410 = vmatprep.subr.bf16.mxu0 0
        %411 = vmatpush2.bf16.msra.mxu0 0
        %412 = vmatprep.subr.bf16.mxu0 0
        %413 = vmatpush2.bf16.msra.mxu0 0
        %414 = vmatprep.subr.bf16.mxu0 0
        %415 = vmatpush2.bf16.msra.mxu0 0
        %416 = vmatprep.subr.bf16.mxu0 0
        %417 = vmatpush2.bf16.msra.mxu0 0
        %418 = vmatprep.subr.bf16.mxu0 0
        %419 = vmatpush2.bf16.msra.mxu0 0
        %420 = vmatprep.mubr.bf16.mxu0 0
        %421 = vmatmul.mubr.bf16.gmra.mxu0 %v337
        %v422 = vpop.f32.mrf.mxu0
        %v423 = vadd.f32 0.0, %v422
        %v424 = vpop.f32.mrf.mxu0
        %v425 = vpop.f32.mrf.mxu0
        %v426 = vadd.f32 0.0, %v425
        %v427 = vpop.f32.mrf.mxu0
        %428 = vmatprep.mubr.bf16.mxu0 0
        %429 = vmatmul.mubr.bf16.gmra.mxu0 %v340
        %v430 = vpop.f32.mrf.mxu0
        %v431 = vadd.f32 0.0, %v430
        %v432 = vpop.f32.mrf.mxu0
        %v433 = vpop.f32.mrf.mxu0
        %v434 = vadd.f32 0.0, %v433
        %v435 = vpop.f32.mrf.mxu0
        %436 = vmatprep.mubr.bf16.mxu0 0
        %437 = vmatmul.mubr.bf16.gmra.mxu0 %v343
        %v438 = vpop.f32.mrf.mxu0
        %v439 = vadd.f32 0.0, %v438
        %v440 = vpop.f32.mrf.mxu0
        %v441 = vpop.f32.mrf.mxu0
        %v442 = vadd.f32 0.0, %v441
        %v443 = vpop.f32.mrf.mxu0
        %444 = vmatprep.mubr.bf16.mxu0 0
        %445 = vmatmul.mubr.bf16.gmra.mxu0 %v346
        %v446 = vpop.f32.mrf.mxu0
        %v447 = vadd.f32 0.0, %v446
        %v448 = vpop.f32.mrf.mxu0
        %v449 = vpop.f32.mrf.mxu0
        %v450 = vadd.f32 0.0, %v449
        %v451 = vpop.f32.mrf.mxu0
        %452 = vmatprep.mubr.bf16.mxu0 0
        %453 = vmatmul.mubr.bf16.gmra.mxu0 %v349
        %v454 = vpop.f32.mrf.mxu0
        %v455 = vadd.f32 0.0, %v454
        %v456 = vpop.f32.mrf.mxu0
        %v457 = vpop.f32.mrf.mxu0
        %v458 = vadd.f32 0.0, %v457
        %v459 = vpop.f32.mrf.mxu0
        %460 = vmatprep.mubr.bf16.mxu0 0
        %461 = vmatmul.mubr.bf16.gmra.mxu0 %v352
        %v462 = vpop.f32.mrf.mxu0
        %v463 = vadd.f32 0.0, %v462
        %v464 = vpop.f32.mrf.mxu0
        %v465 = vpop.f32.mrf.mxu0
        %v466 = vadd.f32 0.0, %v465
        %v467 = vpop.f32.mrf.mxu0
        %468 = vmatprep.mubr.bf16.mxu0 0
        %469 = vmatmul.mubr.bf16.gmra.mxu0 %v355
        %v470 = vpop.f32.mrf.mxu0
        %v471 = vadd.f32 0.0, %v470
        %v472 = vpop.f32.mrf.mxu0
        %v473 = vpop.f32.mrf.mxu0
        %v474 = vadd.f32 0.0, %v473
        %v475 = vpop.f32.mrf.mxu0
        %476 = vmatprep.mubr.bf16.mxu0 0
        %477 = vmatmul.mubr.bf16.gmra.mxu0 %v358
        %v478 = vpop.f32.mrf.mxu0
        %v479 = vadd.f32 0.0, %v478
        %v480 = vpop.f32.mrf.mxu0
        %v481 = vpop.f32.mrf.mxu0
        %v482 = vadd.f32 0.0, %v481
        %v483 = vpop.f32.mrf.mxu0
        %484 = vmatprep.mubr.bf16.mxu0 0
        %485 = vmatmul.mubr.bf16.gmra.mxu0 %v361
        %v486 = vpop.f32.mrf.mxu0
        %v487 = vadd.f32 0.0, %v486
        %v488 = vpop.f32.mrf.mxu0
        %v489 = vpop.f32.mrf.mxu0
        %v490 = vadd.f32 0.0, %v489
        %v491 = vpop.f32.mrf.mxu0
        %492 = vmatprep.mubr.bf16.mxu0 0
        %493 = vmatmul.mubr.bf16.gmra.mxu0 %v364
        %v494 = vpop.f32.mrf.mxu0
        %v495 = vadd.f32 0.0, %v494
        %v496 = vpop.f32.mrf.mxu0
        %v497 = vpop.f32.mrf.mxu0
        %v498 = vadd.f32 0.0, %v497
        %v499 = vpop.f32.mrf.mxu0
        %500 = vmatprep.mubr.bf16.mxu0 0
        %501 = vmatmul.mubr.bf16.gmra.mxu0 %v367
        %v502 = vpop.f32.mrf.mxu0
        %v503 = vadd.f32 0.0, %v502
        %v504 = vpop.f32.mrf.mxu0
        %v505 = vpop.f32.mrf.mxu0
        %v506 = vadd.f32 0.0, %v505
        %v507 = vpop.f32.mrf.mxu0
        %508 = vmatprep.mubr.bf16.mxu0 0
        %509 = vmatmul.mubr.bf16.gmra.mxu0 %v370
        %v510 = vpop.f32.mrf.mxu0
        %v511 = vadd.f32 0.0, %v510
        %v512 = vpop.f32.mrf.mxu0
        %v513 = vpop.f32.mrf.mxu0
        %v514 = vadd.f32 0.0, %v513
        %v515 = vpop.f32.mrf.mxu0
        %516 = vmatprep.mubr.bf16.mxu0 0
        %517 = vmatmul.mubr.bf16.gmra.mxu0 %v373
        %v518 = vpop.f32.mrf.mxu0
        %v519 = vadd.f32 0.0, %v518
        %v520 = vpop.f32.mrf.mxu0
        %v521 = vpop.f32.mrf.mxu0
        %v522 = vadd.f32 0.0, %v521
        %v523 = vpop.f32.mrf.mxu0
        %524 = vmatprep.mubr.bf16.mxu0 0
        %525 = vmatmul.mubr.bf16.gmra.mxu0 %v376
        %v526 = vpop.f32.mrf.mxu0
        %v527 = vadd.f32 0.0, %v526
        %v528 = vpop.f32.mrf.mxu0
        %v529 = vpop.f32.mrf.mxu0
        %v530 = vadd.f32 0.0, %v529
        %v531 = vpop.f32.mrf.mxu0
        %532 = vmatprep.mubr.bf16.mxu0 0
        %533 = vmatmul.mubr.bf16.gmra.mxu0 %v379
        %v534 = vpop.f32.mrf.mxu0
        %v535 = vadd.f32 0.0, %v534
        %v536 = vpop.f32.mrf.mxu0
        %v537 = vpop.f32.mrf.mxu0
        %v538 = vadd.f32 0.0, %v537
        %v539 = vpop.f32.mrf.mxu0
        %540 = vmatprep.mubr.bf16.mxu0 0
        %541 = vmatmul.mubr.bf16.gmra.mxu0 %v382
        %v542 = vpop.f32.mrf.mxu0
        %v543 = vadd.f32 0.0, %v542
        %v544 = vpop.f32.mrf.mxu0
        %v545 = vpop.f32.mrf.mxu0
        %v546 = vadd.f32 0.0, %v545
        %v547 = vpop.f32.mrf.mxu0
        %548 = vdwg.mxu0
        %v549 = vadd.f32 %v220, %v423
        %v550 = vadd.f32 %v220, %v426
        %v551 = vadd.f32 %v220, %v431
        %v552 = vadd.f32 %v220, %v434
        %v553 = vadd.f32 %v220, %v439
        %v554 = vadd.f32 %v220, %v442
        %v555 = vadd.f32 %v220, %v447
        %v556 = vadd.f32 %v220, %v450
        %v557 = vadd.f32 %v220, %v455
        %v558 = vadd.f32 %v220, %v458
        %v559 = vadd.f32 %v220, %v463
        %v560 = vadd.f32 %v220, %v466
        %v561 = vadd.f32 %v220, %v471
        %v562 = vadd.f32 %v220, %v474
        %v563 = vadd.f32 %v220, %v479
        %v564 = vadd.f32 %v220, %v482
        %v565 = vadd.f32 %v220, %v487
        %v566 = vadd.f32 %v220, %v490
        %v567 = vadd.f32 %v220, %v495
        %v568 = vadd.f32 %v220, %v498
        %v569 = vadd.f32 %v220, %v503
        %v570 = vadd.f32 %v220, %v506
        %v571 = vadd.f32 %v220, %v511
        %v572 = vadd.f32 %v220, %v514
        %v573 = vadd.f32 %v220, %v519
        %v574 = vadd.f32 %v220, %v522
        %v575 = vadd.f32 %v220, %v527
        %v576 = vadd.f32 %v220, %v530
        %v577 = vadd.f32 %v220, %v535
        %v578 = vadd.f32 %v220, %v538
        %v579 = vadd.f32 %v220, %v543
        %v580 = vadd.f32 %v220, %v546
        %v581 = vld [vmem:[%s206] sm:$0xf]
        %v582 = vld [vmem:[%s206 + $0x4] sm:$0xf]
        %v583 = vld [vmem:[%s206 + $0x8] sm:$0x1]
        %v584 = vld [vmem:[%s206 + $0xc] sm:$0xf]
        %v585 = vld [vmem:[%s206 + $0x10] sm:$0xf]
        %v586 = vld [vmem:[%s206 + $0x14] sm:$0x1]
        %v587 = vld [vmem:[%s206 + $0x18] sm:$0xf]
        %v588 = vld [vmem:[%s206 + $0x1c] sm:$0xf]
        %v589 = vld [vmem:[%s206 + $0x20] sm:$0x1]
        %v590 = vld [vmem:[%s206 + $0x24] sm:$0xf]
        %v591 = vld [vmem:[%s206 + $0x28] sm:$0xf]
        %v592 = vld [vmem:[%s206 + $0x2c] sm:$0x1]
        %v593 = vld [vmem:[%s206 + $0x30] sm:$0xf]
        %v594 = vld [vmem:[%s206 + $0x34] sm:$0xf]
        %v595 = vld [vmem:[%s206 + $0x38] sm:$0x1]
        %v596 = vld [vmem:[%s206 + $0x3c] sm:$0xf]
        %v597 = vld [vmem:[%s206 + $0x40] sm:$0xf]
        %v598 = vld [vmem:[%s206 + $0x44] sm:$0x1]
        %v599 = vld [vmem:[%s206 + $0x48] sm:$0xf]
        %v600 = vld [vmem:[%s206 + $0x4c] sm:$0xf]
        %v601 = vld [vmem:[%s206 + $0x50] sm:$0x1]
        %v602 = vld [vmem:[%s206 + $0x54] sm:$0xf]
        %v603 = vld [vmem:[%s206 + $0x58] sm:$0xf]
        %v604 = vld [vmem:[%s206 + $0x5c] sm:$0x1]
        %v605 = vld [vmem:[%s206 + $0x60] sm:$0xf]
        %v606 = vld [vmem:[%s206 + $0x64] sm:$0xf]
        %v607 = vld [vmem:[%s206 + $0x68] sm:$0x1]
        %v608 = vld [vmem:[%s206 + $0x6c] sm:$0xf]
        %v609 = vld [vmem:[%s206 + $0x70] sm:$0xf]
        %v610 = vld [vmem:[%s206 + $0x74] sm:$0x1]
        %v611 = vld [vmem:[%s206 + $0x78] sm:$0xf]
        %v612 = vld [vmem:[%s206 + $0x7c] sm:$0xf]
        %v613 = vld [vmem:[%s206 + $0x80] sm:$0x1]
        %v614 = vld [vmem:[%s206 + $0x84] sm:$0xf]
        %v615 = vld [vmem:[%s206 + $0x88] sm:$0xf]
        %v616 = vld [vmem:[%s206 + $0x8c] sm:$0x1]
        %v617 = vld [vmem:[%s206 + $0x90] sm:$0xf]
        %v618 = vld [vmem:[%s206 + $0x94] sm:$0xf]
        %v619 = vld [vmem:[%s206 + $0x98] sm:$0x1]
        %v620 = vld [vmem:[%s206 + $0x9c] sm:$0xf]
        %v621 = vld [vmem:[%s206 + $0xa0] sm:$0xf]
        %v622 = vld [vmem:[%s206 + $0xa4] sm:$0x1]
        %v623 = vld [vmem:[%s206 + $0xa8] sm:$0xf]
        %v624 = vld [vmem:[%s206 + $0xac] sm:$0xf]
        %v625 = vld [vmem:[%s206 + $0xb0] sm:$0x1]
        %v626 = vld [vmem:[%s206 + $0xb4] sm:$0xf]
        %v627 = vld [vmem:[%s206 + $0xb8] sm:$0xf]
        %v628 = vld [vmem:[%s206 + $0xbc] sm:$0x1]
        %vm629 = vsmask.f32 3328
        %vm630 = vsmask.f32 7440
        %vm631 = vmor %vm629, %vm630
        %v633 = vshrl.u32 %v581, 16
        %v635 = vrot.slane %v633, 4
        %v636 = vshll.u32 %v581, 16
        %v638 = vrot.slane %v636, 5
        %v639 = vor.u32 %v635, %v638
        %v640 = vrot.slane %v639, 4
        %v642 = vshll.u32 %v582, 16
        %v644 = vrot.slane %v642, 5
        %v645 = vsel %vm631, %v640, %v644
        %v646 = vshrl.u32 %v582, 16
        %v648 = vrot.slane %v646, 4
        %v649 = vor.u32 %v648, %v644
        %v650 = vrot.slane %v649, 4
        %v652 = vshll.u32 %v583, 16
        %v654 = vrot.slane %v652, 5
        %v655 = vsel %vm631, %v650, %v654
        %v657 = vshrl.u32 %v584, 16
        %v659 = vrot.slane %v657, 4
        %v660 = vshll.u32 %v584, 16
        %v662 = vrot.slane %v660, 5
        %v663 = vor.u32 %v659, %v662
        %v664 = vrot.slane %v663, 4
        %v666 = vshll.u32 %v585, 16
        %v668 = vrot.slane %v666, 5
        %v669 = vsel %vm631, %v664, %v668
        %v670 = vshrl.u32 %v585, 16
        %v672 = vrot.slane %v670, 4
        %v673 = vor.u32 %v672, %v668
        %v674 = vrot.slane %v673, 4
        %v676 = vshll.u32 %v586, 16
        %v678 = vrot.slane %v676, 5
        %v679 = vsel %vm631, %v674, %v678
        %v681 = vshrl.u32 %v587, 16
        %v683 = vrot.slane %v681, 4
        %v684 = vshll.u32 %v587, 16
        %v686 = vrot.slane %v684, 5
        %v687 = vor.u32 %v683, %v686
        %v688 = vrot.slane %v687, 4
        %v690 = vshll.u32 %v588, 16
        %v692 = vrot.slane %v690, 5
        %v693 = vsel %vm631, %v688, %v692
        %v694 = vshrl.u32 %v588, 16
        %v696 = vrot.slane %v694, 4
        %v697 = vor.u32 %v696, %v692
        %v698 = vrot.slane %v697, 4
        %v700 = vshll.u32 %v589, 16
        %v702 = vrot.slane %v700, 5
        %v703 = vsel %vm631, %v698, %v702
        %v705 = vshrl.u32 %v590, 16
        %v707 = vrot.slane %v705, 4
        %v708 = vshll.u32 %v590, 16
        %v710 = vrot.slane %v708, 5
        %v711 = vor.u32 %v707, %v710
        %v712 = vrot.slane %v711, 4
        %v714 = vshll.u32 %v591, 16
        %v716 = vrot.slane %v714, 5
        %v717 = vsel %vm631, %v712, %v716
        %v718 = vshrl.u32 %v591, 16
        %v720 = vrot.slane %v718, 4
        %v721 = vor.u32 %v720, %v716
        %v722 = vrot.slane %v721, 4
        %v724 = vshll.u32 %v592, 16
        %v726 = vrot.slane %v724, 5
        %v727 = vsel %vm631, %v722, %v726
        %v729 = vshrl.u32 %v593, 16
        %v731 = vrot.slane %v729, 4
        %v732 = vshll.u32 %v593, 16
        %v734 = vrot.slane %v732, 5
        %v735 = vor.u32 %v731, %v734
        %v736 = vrot.slane %v735, 4
        %v738 = vshll.u32 %v594, 16
        %v740 = vrot.slane %v738, 5
        %v741 = vsel %vm631, %v736, %v740
        %v742 = vshrl.u32 %v594, 16
        %v744 = vrot.slane %v742, 4
        %v745 = vor.u32 %v744, %v740
        %v746 = vrot.slane %v745, 4
        %v748 = vshll.u32 %v595, 16
        %v750 = vrot.slane %v748, 5
        %v751 = vsel %vm631, %v746, %v750
        %v753 = vshrl.u32 %v596, 16
        %v755 = vrot.slane %v753, 4
        %v756 = vshll.u32 %v596, 16
        %v758 = vrot.slane %v756, 5
        %v759 = vor.u32 %v755, %v758
        %v760 = vrot.slane %v759, 4
        %v762 = vshll.u32 %v597, 16
        %v764 = vrot.slane %v762, 5
        %v765 = vsel %vm631, %v760, %v764
        %v766 = vshrl.u32 %v597, 16
        %v768 = vrot.slane %v766, 4
        %v769 = vor.u32 %v768, %v764
        %v770 = vrot.slane %v769, 4
        %v772 = vshll.u32 %v598, 16
        %v774 = vrot.slane %v772, 5
        %v775 = vsel %vm631, %v770, %v774
        %v777 = vshrl.u32 %v599, 16
        %v779 = vrot.slane %v777, 4
        %v780 = vshll.u32 %v599, 16
        %v782 = vrot.slane %v780, 5
        %v783 = vor.u32 %v779, %v782
        %v784 = vrot.slane %v783, 4
        %v786 = vshll.u32 %v600, 16
        %v788 = vrot.slane %v786, 5
        %v789 = vsel %vm631, %v784, %v788
        %v790 = vshrl.u32 %v600, 16
        %v792 = vrot.slane %v790, 4
        %v793 = vor.u32 %v792, %v788
        %v794 = vrot.slane %v793, 4
        %v796 = vshll.u32 %v601, 16
        %v798 = vrot.slane %v796, 5
        %v799 = vsel %vm631, %v794, %v798
        %v801 = vshrl.u32 %v602, 16
        %v803 = vrot.slane %v801, 4
        %v804 = vshll.u32 %v602, 16
        %v806 = vrot.slane %v804, 5
        %v807 = vor.u32 %v803, %v806
        %v808 = vrot.slane %v807, 4
        %v810 = vshll.u32 %v603, 16
        %v812 = vrot.slane %v810, 5
        %v813 = vsel %vm631, %v808, %v812
        %v814 = vshrl.u32 %v603, 16
        %v816 = vrot.slane %v814, 4
        %v817 = vor.u32 %v816, %v812
        %v818 = vrot.slane %v817, 4
        %v820 = vshll.u32 %v604, 16
        %v822 = vrot.slane %v820, 5
        %v823 = vsel %vm631, %v818, %v822
        %v825 = vshrl.u32 %v605, 16
        %v827 = vrot.slane %v825, 4
        %v828 = vshll.u32 %v605, 16
        %v830 = vrot.slane %v828, 5
        %v831 = vor.u32 %v827, %v830
        %v832 = vrot.slane %v831, 4
        %v834 = vshll.u32 %v606, 16
        %v836 = vrot.slane %v834, 5
        %v837 = vsel %vm631, %v832, %v836
        %v838 = vshrl.u32 %v606, 16
        %v840 = vrot.slane %v838, 4
        %v841 = vor.u32 %v840, %v836
        %v842 = vrot.slane %v841, 4
        %v844 = vshll.u32 %v607, 16
        %v846 = vrot.slane %v844, 5
        %v847 = vsel %vm631, %v842, %v846
        %v849 = vshrl.u32 %v608, 16
        %v851 = vrot.slane %v849, 4
        %v852 = vshll.u32 %v608, 16
        %v854 = vrot.slane %v852, 5
        %v855 = vor.u32 %v851, %v854
        %v856 = vrot.slane %v855, 4
        %v858 = vshll.u32 %v609, 16
        %v860 = vrot.slane %v858, 5
        %v861 = vsel %vm631, %v856, %v860
        %v862 = vshrl.u32 %v609, 16
        %v864 = vrot.slane %v862, 4
        %v865 = vor.u32 %v864, %v860
        %v866 = vrot.slane %v865, 4
        %v868 = vshll.u32 %v610, 16
        %v870 = vrot.slane %v868, 5
        %v871 = vsel %vm631, %v866, %v870
        %v873 = vshrl.u32 %v611, 16
        %v875 = vrot.slane %v873, 4
        %v876 = vshll.u32 %v611, 16
        %v878 = vrot.slane %v876, 5
        %v879 = vor.u32 %v875, %v878
        %v880 = vrot.slane %v879, 4
        %v882 = vshll.u32 %v612, 16
        %v884 = vrot.slane %v882, 5
        %v885 = vsel %vm631, %v880, %v884
        %v886 = vshrl.u32 %v612, 16
        %v888 = vrot.slane %v886, 4
        %v889 = vor.u32 %v888, %v884
        %v890 = vrot.slane %v889, 4
        %v892 = vshll.u32 %v613, 16
        %v894 = vrot.slane %v892, 5
        %v895 = vsel %vm631, %v890, %v894
        %v897 = vshrl.u32 %v614, 16
        %v899 = vrot.slane %v897, 4
        %v900 = vshll.u32 %v614, 16
        %v902 = vrot.slane %v900, 5
        %v903 = vor.u32 %v899, %v902
        %v904 = vrot.slane %v903, 4
        %v906 = vshll.u32 %v615, 16
        %v908 = vrot.slane %v906, 5
        %v909 = vsel %vm631, %v904, %v908
        %v910 = vshrl.u32 %v615, 16
        %v912 = vrot.slane %v910, 4
        %v913 = vor.u32 %v912, %v908
        %v914 = vrot.slane %v913, 4
        %v916 = vshll.u32 %v616, 16
        %v918 = vrot.slane %v916, 5
        %v919 = vsel %vm631, %v914, %v918
        %v921 = vshrl.u32 %v617, 16
        %v923 = vrot.slane %v921, 4
        %v924 = vshll.u32 %v617, 16
        %v926 = vrot.slane %v924, 5
        %v927 = vor.u32 %v923, %v926
        %v928 = vrot.slane %v927, 4
        %v930 = vshll.u32 %v618, 16
        %v932 = vrot.slane %v930, 5
        %v933 = vsel %vm631, %v928, %v932
        %v934 = vshrl.u32 %v618, 16
        %v936 = vrot.slane %v934, 4
        %v937 = vor.u32 %v936, %v932
        %v938 = vrot.slane %v937, 4
        %v940 = vshll.u32 %v619, 16
        %v942 = vrot.slane %v940, 5
        %v943 = vsel %vm631, %v938, %v942
        %v945 = vshrl.u32 %v620, 16
        %v947 = vrot.slane %v945, 4
        %v948 = vshll.u32 %v620, 16
        %v950 = vrot.slane %v948, 5
        %v951 = vor.u32 %v947, %v950
        %v952 = vrot.slane %v951, 4
        %v954 = vshll.u32 %v621, 16
        %v956 = vrot.slane %v954, 5
        %v957 = vsel %vm631, %v952, %v956
        %v958 = vshrl.u32 %v621, 16
        %v960 = vrot.slane %v958, 4
        %v961 = vor.u32 %v960, %v956
        %v962 = vrot.slane %v961, 4
        %v964 = vshll.u32 %v622, 16
        %v966 = vrot.slane %v964, 5
        %v967 = vsel %vm631, %v962, %v966
        %v969 = vshrl.u32 %v623, 16
        %v971 = vrot.slane %v969, 4
        %v972 = vshll.u32 %v623, 16
        %v974 = vrot.slane %v972, 5
        %v975 = vor.u32 %v971, %v974
        %v976 = vrot.slane %v975, 4
        %v978 = vshll.u32 %v624, 16
        %v980 = vrot.slane %v978, 5
        %v981 = vsel %vm631, %v976, %v980
        %v982 = vshrl.u32 %v624, 16
        %v984 = vrot.slane %v982, 4
        %v985 = vor.u32 %v984, %v980
        %v986 = vrot.slane %v985, 4
        %v988 = vshll.u32 %v625, 16
        %v990 = vrot.slane %v988, 5
        %v991 = vsel %vm631, %v986, %v990
        %v993 = vshrl.u32 %v626, 16
        %v995 = vrot.slane %v993, 4
        %v996 = vshll.u32 %v626, 16
        %v998 = vrot.slane %v996, 5
        %v999 = vor.u32 %v995, %v998
        %v1000 = vrot.slane %v999, 4
        %v1002 = vshll.u32 %v627, 16
        %v1004 = vrot.slane %v1002, 5
        %v1005 = vsel %vm631, %v1000, %v1004
        %v1006 = vshrl.u32 %v627, 16
        %v1008 = vrot.slane %v1006, 4
        %v1009 = vor.u32 %v1008, %v1004
        %v1010 = vrot.slane %v1009, 4
        %v1012 = vshll.u32 %v628, 16
        %v1014 = vrot.slane %v1012, 5
        %v1015 = vsel %vm631, %v1010, %v1014
        %s1016 = scalar_lea.vmem %s210, 2
        %v1017 = vld [vmem:[%s1016] sm:$0x3]
        %v1018 = vunpack.c.l.b16 %v645
        %v1019 = vunpack.c.l.b16 %v655
        %v1020 = vunpack.c.l.b16 %v669
        %v1021 = vunpack.c.l.b16 %v679
        %v1022 = vunpack.c.l.b16 %v693
        %v1023 = vunpack.c.l.b16 %v703
        %v1024 = vunpack.c.l.b16 %v717
        %v1025 = vunpack.c.l.b16 %v727
        %v1026 = vunpack.c.l.b16 %v741
        %v1027 = vunpack.c.l.b16 %v751
        %v1028 = vunpack.c.l.b16 %v765
        %v1029 = vunpack.c.l.b16 %v775
        %v1030 = vunpack.c.l.b16 %v789
        %v1031 = vunpack.c.l.b16 %v799
        %v1032 = vunpack.c.l.b16 %v813
        %v1033 = vunpack.c.l.b16 %v823
        %v1034 = vunpack.c.l.b16 %v837
        %v1035 = vunpack.c.l.b16 %v847
        %v1036 = vunpack.c.l.b16 %v861
        %v1037 = vunpack.c.l.b16 %v871
        %v1038 = vunpack.c.l.b16 %v885
        %v1039 = vunpack.c.l.b16 %v895
        %v1040 = vunpack.c.l.b16 %v909
        %v1041 = vunpack.c.l.b16 %v919
        %v1042 = vunpack.c.l.b16 %v933
        %v1043 = vunpack.c.l.b16 %v943
        %v1044 = vunpack.c.l.b16 %v957
        %v1045 = vunpack.c.l.b16 %v967
        %v1046 = vunpack.c.l.b16 %v981
        %v1047 = vunpack.c.l.b16 %v991
        %v1048 = vunpack.c.l.b16 %v1005
        %v1049 = vunpack.c.l.b16 %v1015
        %v1050 = vpack.c.b16 %v1019, %v1018
        %v1051 = vpack.c.b16 %v1021, %v1020
        %v1052 = vpack.c.b16 %v1023, %v1022
        %v1053 = vpack.c.b16 %v1025, %v1024
        %v1054 = vpack.c.b16 %v1027, %v1026
        %v1055 = vpack.c.b16 %v1029, %v1028
        %v1056 = vpack.c.b16 %v1031, %v1030
        %v1057 = vpack.c.b16 %v1033, %v1032
        %v1058 = vpack.c.b16 %v1035, %v1034
        %v1059 = vpack.c.b16 %v1037, %v1036
        %v1060 = vpack.c.b16 %v1039, %v1038
        %v1061 = vpack.c.b16 %v1041, %v1040
        %v1062 = vpack.c.b16 %v1043, %v1042
        %v1063 = vpack.c.b16 %v1045, %v1044
        %v1064 = vpack.c.b16 %v1047, %v1046
        %v1065 = vpack.c.b16 %v1049, %v1048
        %v1067 = vsel %vm335, %v1050, 0
        %v1070 = vsel %vm335, %v1051, 0
        %v1073 = vsel %vm335, %v1052, 0
        %v1076 = vsel %vm335, %v1053, 0
        %v1079 = vsel %vm335, %v1054, 0
        %v1082 = vsel %vm335, %v1055, 0
        %v1085 = vsel %vm335, %v1056, 0
        %v1088 = vsel %vm335, %v1057, 0
        %v1091 = vsel %vm335, %v1058, 0
        %v1094 = vsel %vm335, %v1059, 0
        %v1097 = vsel %vm335, %v1060, 0
        %v1100 = vsel %vm335, %v1061, 0
        %v1103 = vsel %vm335, %v1062, 0
        %v1106 = vsel %vm335, %v1063, 0
        %v1109 = vsel %vm335, %v1064, 0
        %v1112 = vsel %vm335, %v1065, 0
        %v1115 = vsel %vm384, %v1017, 0
        %1117 = vmatprep.subr.bf16.mxu0 0
        %1118 = vmatpush1.bf16.msra.mxu0 0
        %1119 = vmatprep.subr.bf16.mxu0 0
        %1120 = vmatpush1.bf16.msra.mxu0 0
        %1121 = vmatprep.subr.bf16.mxu0 0
        %1122 = vmatpush1.bf16.msra.mxu0 0
        %1123 = vmatprep.subr.bf16.mxu0 0
        %1124 = vmatpush1.bf16.msra.mxu0 0
        %1125 = vmatprep.subr.bf16.mxu0 0
        %1126 = vmatpush1.bf16.msra.mxu0 0
        %1127 = vmatprep.subr.bf16.mxu0 0
        %1128 = vmatpush1.bf16.msra.mxu0 0
        %1129 = vmatprep.subr.bf16.mxu0 0
        %1130 = vmatpush1.bf16.msra.mxu0 0
        %1131 = vmatprep.subr.bf16.mxu0 0
        %1132 = vmatpush1.bf16.msra.mxu0 %v1115
        %1133 = vmatprep.subr.bf16.mxu0 0
        %1134 = vmatpush2.bf16.msra.mxu0 0
        %1135 = vmatprep.subr.bf16.mxu0 0
        %1136 = vmatpush2.bf16.msra.mxu0 0
        %1137 = vmatprep.subr.bf16.mxu0 0
        %1138 = vmatpush2.bf16.msra.mxu0 0
        %1139 = vmatprep.subr.bf16.mxu0 0
        %1140 = vmatpush2.bf16.msra.mxu0 0
        %1141 = vmatprep.subr.bf16.mxu0 0
        %1142 = vmatpush2.bf16.msra.mxu0 0
        %1143 = vmatprep.subr.bf16.mxu0 0
        %1144 = vmatpush2.bf16.msra.mxu0 0
        %1145 = vmatprep.subr.bf16.mxu0 0
        %1146 = vmatpush2.bf16.msra.mxu0 0
        %1147 = vmatprep.subr.bf16.mxu0 0
        %1148 = vmatpush2.bf16.msra.mxu0 0
        %1149 = vmatprep.mubr.bf16.mxu0 0
        %1150 = vmatmul.mubr.bf16.gmra.mxu0 %v1067
        %v1151 = vpop.f32.mrf.mxu0
        %v1152 = vadd.f32 0.0, %v1151
        %v1153 = vpop.f32.mrf.mxu0
        %v1154 = vpop.f32.mrf.mxu0
        %v1155 = vadd.f32 0.0, %v1154
        %v1156 = vpop.f32.mrf.mxu0
        %1157 = vmatprep.mubr.bf16.mxu0 0
        %1158 = vmatmul.mubr.bf16.gmra.mxu0 %v1070
        %v1159 = vpop.f32.mrf.mxu0
        %v1160 = vadd.f32 0.0, %v1159
        %v1161 = vpop.f32.mrf.mxu0
        %v1162 = vpop.f32.mrf.mxu0
        %v1163 = vadd.f32 0.0, %v1162
        %v1164 = vpop.f32.mrf.mxu0
        %1165 = vmatprep.mubr.bf16.mxu0 0
        %1166 = vmatmul.mubr.bf16.gmra.mxu0 %v1073
        %v1167 = vpop.f32.mrf.mxu0
        %v1168 = vadd.f32 0.0, %v1167
        %v1169 = vpop.f32.mrf.mxu0
        %v1170 = vpop.f32.mrf.mxu0
        %v1171 = vadd.f32 0.0, %v1170
        %v1172 = vpop.f32.mrf.mxu0
        %1173 = vmatprep.mubr.bf16.mxu0 0
        %1174 = vmatmul.mubr.bf16.gmra.mxu0 %v1076
        %v1175 = vpop.f32.mrf.mxu0
        %v1176 = vadd.f32 0.0, %v1175
        %v1177 = vpop.f32.mrf.mxu0
        %v1178 = vpop.f32.mrf.mxu0
        %v1179 = vadd.f32 0.0, %v1178
        %v1180 = vpop.f32.mrf.mxu0
        %1181 = vmatprep.mubr.bf16.mxu0 0
        %1182 = vmatmul.mubr.bf16.gmra.mxu0 %v1079
        %v1183 = vpop.f32.mrf.mxu0
        %v1184 = vadd.f32 0.0, %v1183
        %v1185 = vpop.f32.mrf.mxu0
        %v1186 = vpop.f32.mrf.mxu0
        %v1187 = vadd.f32 0.0, %v1186
        %v1188 = vpop.f32.mrf.mxu0
        %1189 = vmatprep.mubr.bf16.mxu0 0
        %1190 = vmatmul.mubr.bf16.gmra.mxu0 %v1082
        %v1191 = vpop.f32.mrf.mxu0
        %v1192 = vadd.f32 0.0, %v1191
        %v1193 = vpop.f32.mrf.mxu0
        %v1194 = vpop.f32.mrf.mxu0
        %v1195 = vadd.f32 0.0, %v1194
        %v1196 = vpop.f32.mrf.mxu0
        %1197 = vmatprep.mubr.bf16.mxu0 0
        %1198 = vmatmul.mubr.bf16.gmra.mxu0 %v1085
        %v1199 = vpop.f32.mrf.mxu0
        %v1200 = vadd.f32 0.0, %v1199
        %v1201 = vpop.f32.mrf.mxu0
        %v1202 = vpop.f32.mrf.mxu0
        %v1203 = vadd.f32 0.0, %v1202
        %v1204 = vpop.f32.mrf.mxu0
        %1205 = vmatprep.mubr.bf16.mxu0 0
        %1206 = vmatmul.mubr.bf16.gmra.mxu0 %v1088
        %v1207 = vpop.f32.mrf.mxu0
        %v1208 = vadd.f32 0.0, %v1207
        %v1209 = vpop.f32.mrf.mxu0
        %v1210 = vpop.f32.mrf.mxu0
        %v1211 = vadd.f32 0.0, %v1210
        %v1212 = vpop.f32.mrf.mxu0
        %1213 = vmatprep.mubr.bf16.mxu0 0
        %1214 = vmatmul.mubr.bf16.gmra.mxu0 %v1091
        %v1215 = vpop.f32.mrf.mxu0
        %v1216 = vadd.f32 0.0, %v1215
        %v1217 = vpop.f32.mrf.mxu0
        %v1218 = vpop.f32.mrf.mxu0
        %v1219 = vadd.f32 0.0, %v1218
        %v1220 = vpop.f32.mrf.mxu0
        %1221 = vmatprep.mubr.bf16.mxu0 0
        %1222 = vmatmul.mubr.bf16.gmra.mxu0 %v1094
        %v1223 = vpop.f32.mrf.mxu0
        %v1224 = vadd.f32 0.0, %v1223
        %v1225 = vpop.f32.mrf.mxu0
        %v1226 = vpop.f32.mrf.mxu0
        %v1227 = vadd.f32 0.0, %v1226
        %v1228 = vpop.f32.mrf.mxu0
        %1229 = vmatprep.mubr.bf16.mxu0 0
        %1230 = vmatmul.mubr.bf16.gmra.mxu0 %v1097
        %v1231 = vpop.f32.mrf.mxu0
        %v1232 = vadd.f32 0.0, %v1231
        %v1233 = vpop.f32.mrf.mxu0
        %v1234 = vpop.f32.mrf.mxu0
        %v1235 = vadd.f32 0.0, %v1234
        %v1236 = vpop.f32.mrf.mxu0
        %1237 = vmatprep.mubr.bf16.mxu0 0
        %1238 = vmatmul.mubr.bf16.gmra.mxu0 %v1100
        %v1239 = vpop.f32.mrf.mxu0
        %v1240 = vadd.f32 0.0, %v1239
        %v1241 = vpop.f32.mrf.mxu0
        %v1242 = vpop.f32.mrf.mxu0
        %v1243 = vadd.f32 0.0, %v1242
        %v1244 = vpop.f32.mrf.mxu0
        %1245 = vmatprep.mubr.bf16.mxu0 0
        %1246 = vmatmul.mubr.bf16.gmra.mxu0 %v1103
        %v1247 = vpop.f32.mrf.mxu0
        %v1248 = vadd.f32 0.0, %v1247
        %v1249 = vpop.f32.mrf.mxu0
        %v1250 = vpop.f32.mrf.mxu0
        %v1251 = vadd.f32 0.0, %v1250
        %v1252 = vpop.f32.mrf.mxu0
        %1253 = vmatprep.mubr.bf16.mxu0 0
        %1254 = vmatmul.mubr.bf16.gmra.mxu0 %v1106
        %v1255 = vpop.f32.mrf.mxu0
        %v1256 = vadd.f32 0.0, %v1255
        %v1257 = vpop.f32.mrf.mxu0
        %v1258 = vpop.f32.mrf.mxu0
        %v1259 = vadd.f32 0.0, %v1258
        %v1260 = vpop.f32.mrf.mxu0
        %1261 = vmatprep.mubr.bf16.mxu0 0
        %1262 = vmatmul.mubr.bf16.gmra.mxu0 %v1109
        %v1263 = vpop.f32.mrf.mxu0
        %v1264 = vadd.f32 0.0, %v1263
        %v1265 = vpop.f32.mrf.mxu0
        %v1266 = vpop.f32.mrf.mxu0
        %v1267 = vadd.f32 0.0, %v1266
        %v1268 = vpop.f32.mrf.mxu0
        %1269 = vmatprep.mubr.bf16.mxu0 0
        %1270 = vmatmul.mubr.bf16.gmra.mxu0 %v1112
        %v1271 = vpop.f32.mrf.mxu0
        %v1272 = vadd.f32 0.0, %v1271
        %v1273 = vpop.f32.mrf.mxu0
        %v1274 = vpop.f32.mrf.mxu0
        %v1275 = vadd.f32 0.0, %v1274
        %v1276 = vpop.f32.mrf.mxu0
        %1277 = vdwg.mxu0
        %v1278 = vadd.f32 %v549, %v1152
        %v1279 = vadd.f32 %v550, %v1155
        %v1280 = vadd.f32 %v551, %v1160
        %v1281 = vadd.f32 %v552, %v1163
        %v1282 = vadd.f32 %v553, %v1168
        %v1283 = vadd.f32 %v554, %v1171
        %v1284 = vadd.f32 %v555, %v1176
        %v1285 = vadd.f32 %v556, %v1179
        %v1286 = vadd.f32 %v557, %v1184
        %v1287 = vadd.f32 %v558, %v1187
        %v1288 = vadd.f32 %v559, %v1192
        %v1289 = vadd.f32 %v560, %v1195
        %v1290 = vadd.f32 %v561, %v1200
        %v1291 = vadd.f32 %v562, %v1203
        %v1292 = vadd.f32 %v563, %v1208
        %v1293 = vadd.f32 %v564, %v1211
        %v1294 = vadd.f32 %v565, %v1216
        %v1295 = vadd.f32 %v566, %v1219
        %v1296 = vadd.f32 %v567, %v1224
        %v1297 = vadd.f32 %v568, %v1227
        %v1298 = vadd.f32 %v569, %v1232
        %v1299 = vadd.f32 %v570, %v1235
        %v1300 = vadd.f32 %v571, %v1240
        %v1301 = vadd.f32 %v572, %v1243
        %v1302 = vadd.f32 %v573, %v1248
        %v1303 = vadd.f32 %v574, %v1251
        %v1304 = vadd.f32 %v575, %v1256
        %v1305 = vadd.f32 %v576, %v1259
        %v1306 = vadd.f32 %v577, %v1264
        %v1307 = vadd.f32 %v578, %v1267
        %v1308 = vadd.f32 %v579, %v1272
        %v1309 = vadd.f32 %v580, %v1275
        %v1310 = vld [vmem:[%s206] sm:$0xe]
        %v1311 = vld [vmem:[%s206 + $0xc] sm:$0xe]
        %v1312 = vld [vmem:[%s206 + $0x18] sm:$0xe]
        %v1313 = vld [vmem:[%s206 + $0x24] sm:$0xe]
        %v1314 = vld [vmem:[%s206 + $0x30] sm:$0xe]
        %v1315 = vld [vmem:[%s206 + $0x3c] sm:$0xe]
        %v1316 = vld [vmem:[%s206 + $0x48] sm:$0xe]
        %v1317 = vld [vmem:[%s206 + $0x54] sm:$0xe]
        %v1318 = vld [vmem:[%s206 + $0x60] sm:$0xe]
        %v1319 = vld [vmem:[%s206 + $0x6c] sm:$0xe]
        %v1320 = vld [vmem:[%s206 + $0x78] sm:$0xe]
        %v1321 = vld [vmem:[%s206 + $0x84] sm:$0xe]
        %v1322 = vld [vmem:[%s206 + $0x90] sm:$0xe]
        %v1323 = vld [vmem:[%s206 + $0x9c] sm:$0xe]
        %v1324 = vld [vmem:[%s206 + $0xa8] sm:$0xe]
        %v1325 = vld [vmem:[%s206 + $0xb4] sm:$0xe]
        %vm1374 = vcmask 1042432
        %vm1375 = vcmask 1046532
        %vm1376 = vmor %vm1374, %vm1375
        %v1377 = vrot.slane %v1310, 5
        %v1378 = vrot.slane %v1377, 4
        %v1379 = vrot.slane %v582, 5
        %v1380 = vsel %vm1376, %v1378, %v1379
        %v1381 = vrot.slane %v1379, 4
        %v1382 = vrot.slane %v583, 5
        %v1383 = vsel %vm1376, %v1381, %v1382
        %v1384 = vrot.slane %v1311, 5
        %v1385 = vrot.slane %v1384, 4
        %v1386 = vrot.slane %v585, 5
        %v1387 = vsel %vm1376, %v1385, %v1386
        %v1388 = vrot.slane %v1386, 4
        %v1389 = vrot.slane %v586, 5
        %v1390 = vsel %vm1376, %v1388, %v1389
        %v1391 = vrot.slane %v1312, 5
        %v1392 = vrot.slane %v1391, 4
        %v1393 = vrot.slane %v588, 5
        %v1394 = vsel %vm1376, %v1392, %v1393
        %v1395 = vrot.slane %v1393, 4
        %v1396 = vrot.slane %v589, 5
        %v1397 = vsel %vm1376, %v1395, %v1396
        %v1398 = vrot.slane %v1313, 5
        %v1399 = vrot.slane %v1398, 4
        %v1400 = vrot.slane %v591, 5
        %v1401 = vsel %vm1376, %v1399, %v1400
        %v1402 = vrot.slane %v1400, 4
        %v1403 = vrot.slane %v592, 5
        %v1404 = vsel %vm1376, %v1402, %v1403
        %v1405 = vrot.slane %v1314, 5
        %v1406 = vrot.slane %v1405, 4
        %v1407 = vrot.slane %v594, 5
        %v1408 = vsel %vm1376, %v1406, %v1407
        %v1409 = vrot.slane %v1407, 4
        %v1410 = vrot.slane %v595, 5
        %v1411 = vsel %vm1376, %v1409, %v1410
        %v1412 = vrot.slane %v1315, 5
        %v1413 = vrot.slane %v1412, 4
        %v1414 = vrot.slane %v597, 5
        %v1415 = vsel %vm1376, %v1413, %v1414
        %v1416 = vrot.slane %v1414, 4
        %v1417 = vrot.slane %v598, 5
        %v1418 = vsel %vm1376, %v1416, %v1417
        %v1419 = vrot.slane %v1316, 5
        %v1420 = vrot.slane %v1419, 4
        %v1421 = vrot.slane %v600, 5
        %v1422 = vsel %vm1376, %v1420, %v1421
        %v1423 = vrot.slane %v1421, 4
        %v1424 = vrot.slane %v601, 5
        %v1425 = vsel %vm1376, %v1423, %v1424
        %v1426 = vrot.slane %v1317, 5
        %v1427 = vrot.slane %v1426, 4
        %v1428 = vrot.slane %v603, 5
        %v1429 = vsel %vm1376, %v1427, %v1428
        %v1430 = vrot.slane %v1428, 4
        %v1431 = vrot.slane %v604, 5
        %v1432 = vsel %vm1376, %v1430, %v1431
        %v1433 = vrot.slane %v1318, 5
        %v1434 = vrot.slane %v1433, 4
        %v1435 = vrot.slane %v606, 5
        %v1436 = vsel %vm1376, %v1434, %v1435
        %v1437 = vrot.slane %v1435, 4
        %v1438 = vrot.slane %v607, 5
        %v1439 = vsel %vm1376, %v1437, %v1438
        %v1440 = vrot.slane %v1319, 5
        %v1441 = vrot.slane %v1440, 4
        %v1442 = vrot.slane %v609, 5
        %v1443 = vsel %vm1376, %v1441, %v1442
        %v1444 = vrot.slane %v1442, 4
        %v1445 = vrot.slane %v610, 5
        %v1446 = vsel %vm1376, %v1444, %v1445
        %v1447 = vrot.slane %v1320, 5
        %v1448 = vrot.slane %v1447, 4
        %v1449 = vrot.slane %v612, 5
        %v1450 = vsel %vm1376, %v1448, %v1449
        %v1451 = vrot.slane %v1449, 4
        %v1452 = vrot.slane %v613, 5
        %v1453 = vsel %vm1376, %v1451, %v1452
        %v1454 = vrot.slane %v1321, 5
        %v1455 = vrot.slane %v1454, 4
        %v1456 = vrot.slane %v615, 5
        %v1457 = vsel %vm1376, %v1455, %v1456
        %v1458 = vrot.slane %v1456, 4
        %v1459 = vrot.slane %v616, 5
        %v1460 = vsel %vm1376, %v1458, %v1459
        %v1461 = vrot.slane %v1322, 5
        %v1462 = vrot.slane %v1461, 4
        %v1463 = vrot.slane %v618, 5
        %v1464 = vsel %vm1376, %v1462, %v1463
        %v1465 = vrot.slane %v1463, 4
        %v1466 = vrot.slane %v619, 5
        %v1467 = vsel %vm1376, %v1465, %v1466
        %v1468 = vrot.slane %v1323, 5
        %v1469 = vrot.slane %v1468, 4
        %v1470 = vrot.slane %v621, 5
        %v1471 = vsel %vm1376, %v1469, %v1470
        %v1472 = vrot.slane %v1470, 4
        %v1473 = vrot.slane %v622, 5
        %v1474 = vsel %vm1376, %v1472, %v1473
        %v1475 = vrot.slane %v1324, 5
        %v1476 = vrot.slane %v1475, 4
        %v1477 = vrot.slane %v624, 5
        %v1478 = vsel %vm1376, %v1476, %v1477
        %v1479 = vrot.slane %v1477, 4
        %v1480 = vrot.slane %v625, 5
        %v1481 = vsel %vm1376, %v1479, %v1480
        %v1482 = vrot.slane %v1325, 5
        %v1483 = vrot.slane %v1482, 4
        %v1484 = vrot.slane %v627, 5
        %v1485 = vsel %vm1376, %v1483, %v1484
        %v1486 = vrot.slane %v1484, 4
        %v1487 = vrot.slane %v628, 5
        %v1488 = vsel %vm1376, %v1486, %v1487
        %s1489 = scalar_lea.vmem %s210, 4
        %v1490 = vld [vmem:[%s1489] sm:$0x3]
        %v1491 = vunpack.c.l.b16 %v1380
        %v1492 = vunpack.c.l.b16 %v1383
        %v1493 = vunpack.c.l.b16 %v1387
        %v1494 = vunpack.c.l.b16 %v1390
        %v1495 = vunpack.c.l.b16 %v1394
        %v1496 = vunpack.c.l.b16 %v1397
        %v1497 = vunpack.c.l.b16 %v1401
        %v1498 = vunpack.c.l.b16 %v1404
        %v1499 = vunpack.c.l.b16 %v1408
        %v1500 = vunpack.c.l.b16 %v1411
        %v1501 = vunpack.c.l.b16 %v1415
        %v1502 = vunpack.c.l.b16 %v1418
        %v1503 = vunpack.c.l.b16 %v1422
        %v1504 = vunpack.c.l.b16 %v1425
        %v1505 = vunpack.c.l.b16 %v1429
        %v1506 = vunpack.c.l.b16 %v1432
        %v1507 = vunpack.c.l.b16 %v1436
        %v1508 = vunpack.c.l.b16 %v1439
        %v1509 = vunpack.c.l.b16 %v1443
        %v1510 = vunpack.c.l.b16 %v1446
        %v1511 = vunpack.c.l.b16 %v1450
        %v1512 = vunpack.c.l.b16 %v1453
        %v1513 = vunpack.c.l.b16 %v1457
        %v1514 = vunpack.c.l.b16 %v1460
        %v1515 = vunpack.c.l.b16 %v1464
        %v1516 = vunpack.c.l.b16 %v1467
        %v1517 = vunpack.c.l.b16 %v1471
        %v1518 = vunpack.c.l.b16 %v1474
        %v1519 = vunpack.c.l.b16 %v1478
        %v1520 = vunpack.c.l.b16 %v1481
        %v1521 = vunpack.c.l.b16 %v1485
        %v1522 = vunpack.c.l.b16 %v1488
        %v1523 = vpack.c.b16 %v1492, %v1491
        %v1524 = vpack.c.b16 %v1494, %v1493
        %v1525 = vpack.c.b16 %v1496, %v1495
        %v1526 = vpack.c.b16 %v1498, %v1497
        %v1527 = vpack.c.b16 %v1500, %v1499
        %v1528 = vpack.c.b16 %v1502, %v1501
        %v1529 = vpack.c.b16 %v1504, %v1503
        %v1530 = vpack.c.b16 %v1506, %v1505
        %v1531 = vpack.c.b16 %v1508, %v1507
        %v1532 = vpack.c.b16 %v1510, %v1509
        %v1533 = vpack.c.b16 %v1512, %v1511
        %v1534 = vpack.c.b16 %v1514, %v1513
        %v1535 = vpack.c.b16 %v1516, %v1515
        %v1536 = vpack.c.b16 %v1518, %v1517
        %v1537 = vpack.c.b16 %v1520, %v1519
        %v1538 = vpack.c.b16 %v1522, %v1521
        %v1540 = vsel %vm335, %v1523, 0
        %v1543 = vsel %vm335, %v1524, 0
        %v1546 = vsel %vm335, %v1525, 0
        %v1549 = vsel %vm335, %v1526, 0
        %v1552 = vsel %vm335, %v1527, 0
        %v1555 = vsel %vm335, %v1528, 0
        %v1558 = vsel %vm335, %v1529, 0
        %v1561 = vsel %vm335, %v1530, 0
        %v1564 = vsel %vm335, %v1531, 0
        %v1567 = vsel %vm335, %v1532, 0
        %v1570 = vsel %vm335, %v1533, 0
        %v1573 = vsel %vm335, %v1534, 0
        %v1576 = vsel %vm335, %v1535, 0
        %v1579 = vsel %vm335, %v1536, 0
        %v1582 = vsel %vm335, %v1537, 0
        %v1585 = vsel %vm335, %v1538, 0
        %v1588 = vsel %vm384, %v1490, 0
        %1590 = vmatprep.subr.bf16.mxu0 0
        %1591 = vmatpush1.bf16.msra.mxu0 0
        %1592 = vmatprep.subr.bf16.mxu0 0
        %1593 = vmatpush1.bf16.msra.mxu0 0
        %1594 = vmatprep.subr.bf16.mxu0 0
        %1595 = vmatpush1.bf16.msra.mxu0 0
        %1596 = vmatprep.subr.bf16.mxu0 0
        %1597 = vmatpush1.bf16.msra.mxu0 0
        %1598 = vmatprep.subr.bf16.mxu0 0
        %1599 = vmatpush1.bf16.msra.mxu0 0
        %1600 = vmatprep.subr.bf16.mxu0 0
        %1601 = vmatpush1.bf16.msra.mxu0 0
        %1602 = vmatprep.subr.bf16.mxu0 0
        %1603 = vmatpush1.bf16.msra.mxu0 0
        %1604 = vmatprep.subr.bf16.mxu0 0
        %1605 = vmatpush1.bf16.msra.mxu0 %v1588
        %1606 = vmatprep.subr.bf16.mxu0 0
        %1607 = vmatpush2.bf16.msra.mxu0 0
        %1608 = vmatprep.subr.bf16.mxu0 0
        %1609 = vmatpush2.bf16.msra.mxu0 0
        %1610 = vmatprep.subr.bf16.mxu0 0
        %1611 = vmatpush2.bf16.msra.mxu0 0
        %1612 = vmatprep.subr.bf16.mxu0 0
        %1613 = vmatpush2.bf16.msra.mxu0 0
        %1614 = vmatprep.subr.bf16.mxu0 0
        %1615 = vmatpush2.bf16.msra.mxu0 0
        %1616 = vmatprep.subr.bf16.mxu0 0
        %1617 = vmatpush2.bf16.msra.mxu0 0
        %1618 = vmatprep.subr.bf16.mxu0 0
        %1619 = vmatpush2.bf16.msra.mxu0 0
        %1620 = vmatprep.subr.bf16.mxu0 0
        %1621 = vmatpush2.bf16.msra.mxu0 0
        %1622 = vmatprep.mubr.bf16.mxu0 0
        %1623 = vmatmul.mubr.bf16.gmra.mxu0 %v1540
        %v1624 = vpop.f32.mrf.mxu0
        %v1625 = vadd.f32 0.0, %v1624
        %v1626 = vpop.f32.mrf.mxu0
        %v1627 = vpop.f32.mrf.mxu0
        %v1628 = vadd.f32 0.0, %v1627
        %v1629 = vpop.f32.mrf.mxu0
        %1630 = vmatprep.mubr.bf16.mxu0 0
        %1631 = vmatmul.mubr.bf16.gmra.mxu0 %v1543
        %v1632 = vpop.f32.mrf.mxu0
        %v1633 = vadd.f32 0.0, %v1632
        %v1634 = vpop.f32.mrf.mxu0
        %v1635 = vpop.f32.mrf.mxu0
        %v1636 = vadd.f32 0.0, %v1635
        %v1637 = vpop.f32.mrf.mxu0
        %1638 = vmatprep.mubr.bf16.mxu0 0
        %1639 = vmatmul.mubr.bf16.gmra.mxu0 %v1546
        %v1640 = vpop.f32.mrf.mxu0
        %v1641 = vadd.f32 0.0, %v1640
        %v1642 = vpop.f32.mrf.mxu0
        %v1643 = vpop.f32.mrf.mxu0
        %v1644 = vadd.f32 0.0, %v1643
        %v1645 = vpop.f32.mrf.mxu0
        %1646 = vmatprep.mubr.bf16.mxu0 0
        %1647 = vmatmul.mubr.bf16.gmra.mxu0 %v1549
        %v1648 = vpop.f32.mrf.mxu0
        %v1649 = vadd.f32 0.0, %v1648
        %v1650 = vpop.f32.mrf.mxu0
        %v1651 = vpop.f32.mrf.mxu0
        %v1652 = vadd.f32 0.0, %v1651
        %v1653 = vpop.f32.mrf.mxu0
        %1654 = vmatprep.mubr.bf16.mxu0 0
        %1655 = vmatmul.mubr.bf16.gmra.mxu0 %v1552
        %v1656 = vpop.f32.mrf.mxu0
        %v1657 = vadd.f32 0.0, %v1656
        %v1658 = vpop.f32.mrf.mxu0
        %v1659 = vpop.f32.mrf.mxu0
        %v1660 = vadd.f32 0.0, %v1659
        %v1661 = vpop.f32.mrf.mxu0
        %1662 = vmatprep.mubr.bf16.mxu0 0
        %1663 = vmatmul.mubr.bf16.gmra.mxu0 %v1555
        %v1664 = vpop.f32.mrf.mxu0
        %v1665 = vadd.f32 0.0, %v1664
        %v1666 = vpop.f32.mrf.mxu0
        %v1667 = vpop.f32.mrf.mxu0
        %v1668 = vadd.f32 0.0, %v1667
        %v1669 = vpop.f32.mrf.mxu0
        %1670 = vmatprep.mubr.bf16.mxu0 0
        %1671 = vmatmul.mubr.bf16.gmra.mxu0 %v1558
        %v1672 = vpop.f32.mrf.mxu0
        %v1673 = vadd.f32 0.0, %v1672
        %v1674 = vpop.f32.mrf.mxu0
        %v1675 = vpop.f32.mrf.mxu0
        %v1676 = vadd.f32 0.0, %v1675
        %v1677 = vpop.f32.mrf.mxu0
        %1678 = vmatprep.mubr.bf16.mxu0 0
        %1679 = vmatmul.mubr.bf16.gmra.mxu0 %v1561
        %v1680 = vpop.f32.mrf.mxu0
        %v1681 = vadd.f32 0.0, %v1680
        %v1682 = vpop.f32.mrf.mxu0
        %v1683 = vpop.f32.mrf.mxu0
        %v1684 = vadd.f32 0.0, %v1683
        %v1685 = vpop.f32.mrf.mxu0
        %1686 = vmatprep.mubr.bf16.mxu0 0
        %1687 = vmatmul.mubr.bf16.gmra.mxu0 %v1564
        %v1688 = vpop.f32.mrf.mxu0
        %v1689 = vadd.f32 0.0, %v1688
        %v1690 = vpop.f32.mrf.mxu0
        %v1691 = vpop.f32.mrf.mxu0
        %v1692 = vadd.f32 0.0, %v1691
        %v1693 = vpop.f32.mrf.mxu0
        %1694 = vmatprep.mubr.bf16.mxu0 0
        %1695 = vmatmul.mubr.bf16.gmra.mxu0 %v1567
        %v1696 = vpop.f32.mrf.mxu0
        %v1697 = vadd.f32 0.0, %v1696
        %v1698 = vpop.f32.mrf.mxu0
        %v1699 = vpop.f32.mrf.mxu0
        %v1700 = vadd.f32 0.0, %v1699
        %v1701 = vpop.f32.mrf.mxu0
        %1702 = vmatprep.mubr.bf16.mxu0 0
        %1703 = vmatmul.mubr.bf16.gmra.mxu0 %v1570
        %v1704 = vpop.f32.mrf.mxu0
        %v1705 = vadd.f32 0.0, %v1704
        %v1706 = vpop.f32.mrf.mxu0
        %v1707 = vpop.f32.mrf.mxu0
        %v1708 = vadd.f32 0.0, %v1707
        %v1709 = vpop.f32.mrf.mxu0
        %1710 = vmatprep.mubr.bf16.mxu0 0
        %1711 = vmatmul.mubr.bf16.gmra.mxu0 %v1573
        %v1712 = vpop.f32.mrf.mxu0
        %v1713 = vadd.f32 0.0, %v1712
        %v1714 = vpop.f32.mrf.mxu0
        %v1715 = vpop.f32.mrf.mxu0
        %v1716 = vadd.f32 0.0, %v1715
        %v1717 = vpop.f32.mrf.mxu0
        %1718 = vmatprep.mubr.bf16.mxu0 0
        %1719 = vmatmul.mubr.bf16.gmra.mxu0 %v1576
        %v1720 = vpop.f32.mrf.mxu0
        %v1721 = vadd.f32 0.0, %v1720
        %v1722 = vpop.f32.mrf.mxu0
        %v1723 = vpop.f32.mrf.mxu0
        %v1724 = vadd.f32 0.0, %v1723
        %v1725 = vpop.f32.mrf.mxu0
        %1726 = vmatprep.mubr.bf16.mxu0 0
        %1727 = vmatmul.mubr.bf16.gmra.mxu0 %v1579
        %v1728 = vpop.f32.mrf.mxu0
        %v1729 = vadd.f32 0.0, %v1728
        %v1730 = vpop.f32.mrf.mxu0
        %v1731 = vpop.f32.mrf.mxu0
        %v1732 = vadd.f32 0.0, %v1731
        %v1733 = vpop.f32.mrf.mxu0
        %1734 = vmatprep.mubr.bf16.mxu0 0
        %1735 = vmatmul.mubr.bf16.gmra.mxu0 %v1582
        %v1736 = vpop.f32.mrf.mxu0
        %v1737 = vadd.f32 0.0, %v1736
        %v1738 = vpop.f32.mrf.mxu0
        %v1739 = vpop.f32.mrf.mxu0
        %v1740 = vadd.f32 0.0, %v1739
        %v1741 = vpop.f32.mrf.mxu0
        %1742 = vmatprep.mubr.bf16.mxu0 0
        %1743 = vmatmul.mubr.bf16.gmra.mxu0 %v1585
        %v1744 = vpop.f32.mrf.mxu0
        %v1745 = vadd.f32 0.0, %v1744
        %v1746 = vpop.f32.mrf.mxu0
        %v1747 = vpop.f32.mrf.mxu0
        %v1748 = vadd.f32 0.0, %v1747
        %v1749 = vpop.f32.mrf.mxu0
        %1750 = vdwg.mxu0
        %v1751 = vadd.f32 %v1278, %v1625
        %v1752 = vadd.f32 %v1279, %v1628
        %v1753 = vadd.f32 %v1280, %v1633
        %v1754 = vadd.f32 %v1281, %v1636
        %v1755 = vadd.f32 %v1282, %v1641
        %v1756 = vadd.f32 %v1283, %v1644
        %v1757 = vadd.f32 %v1284, %v1649
        %v1758 = vadd.f32 %v1285, %v1652
        %v1759 = vadd.f32 %v1286, %v1657
        %v1760 = vadd.f32 %v1287, %v1660
        %v1761 = vadd.f32 %v1288, %v1665
        %v1762 = vadd.f32 %v1289, %v1668
        %v1763 = vadd.f32 %v1290, %v1673
        %v1764 = vadd.f32 %v1291, %v1676
        %v1765 = vadd.f32 %v1292, %v1681
        %v1766 = vadd.f32 %v1293, %v1684
        %v1767 = vadd.f32 %v1294, %v1689
        %v1768 = vadd.f32 %v1295, %v1692
        %v1769 = vadd.f32 %v1296, %v1697
        %v1770 = vadd.f32 %v1297, %v1700
        %v1771 = vadd.f32 %v1298, %v1705
        %v1772 = vadd.f32 %v1299, %v1708
        %v1773 = vadd.f32 %v1300, %v1713
        %v1774 = vadd.f32 %v1301, %v1716
        %v1775 = vadd.f32 %v1302, %v1721
        %v1776 = vadd.f32 %v1303, %v1724
        %v1777 = vadd.f32 %v1304, %v1729
        %v1778 = vadd.f32 %v1305, %v1732
        %v1779 = vadd.f32 %v1306, %v1737
        %v1780 = vadd.f32 %v1307, %v1740
        %v1781 = vadd.f32 %v1308, %v1745
        %v1782 = vadd.f32 %v1309, %v1748
        %s1783 = scalar_lea.vmem %s206, 12
        %v1784 = vld [vmem:[%s1783] sm:$0xf]
        %v1785 = vld [vmem:[%s1783 + $0x4] sm:$0xf]
        %v1786 = vld [vmem:[%s1783 + $0xc] sm:$0xf]
        %v1787 = vld [vmem:[%s1783 + $0x10] sm:$0xf]
        %v1788 = vld [vmem:[%s1783 + $0x18] sm:$0xf]
        %v1789 = vld [vmem:[%s1783 + $0x1c] sm:$0xf]
        %v1790 = vld [vmem:[%s1783 + $0x24] sm:$0xf]
        %v1791 = vld [vmem:[%s1783 + $0x28] sm:$0xf]
        %v1792 = vld [vmem:[%s1783 + $0x30] sm:$0xf]
        %v1793 = vld [vmem:[%s1783 + $0x34] sm:$0xf]
        %v1794 = vld [vmem:[%s1783 + $0x3c] sm:$0xf]
        %v1795 = vld [vmem:[%s1783 + $0x40] sm:$0xf]
        %v1796 = vld [vmem:[%s1783 + $0x48] sm:$0xf]
        %v1797 = vld [vmem:[%s1783 + $0x4c] sm:$0xf]
        %v1798 = vld [vmem:[%s1783 + $0x54] sm:$0xf]
        %v1799 = vld [vmem:[%s1783 + $0x58] sm:$0xf]
        %v1800 = vld [vmem:[%s1783 + $0x60] sm:$0xf]
        %v1801 = vld [vmem:[%s1783 + $0x64] sm:$0xf]
        %v1802 = vld [vmem:[%s1783 + $0x6c] sm:$0xf]
        %v1803 = vld [vmem:[%s1783 + $0x70] sm:$0xf]
        %v1804 = vld [vmem:[%s1783 + $0x78] sm:$0xf]
        %v1805 = vld [vmem:[%s1783 + $0x7c] sm:$0xf]
        %v1806 = vld [vmem:[%s1783 + $0x84] sm:$0xf]
        %v1807 = vld [vmem:[%s1783 + $0x88] sm:$0xf]
        %v1808 = vld [vmem:[%s1783 + $0x90] sm:$0xf]
        %v1809 = vld [vmem:[%s1783 + $0x94] sm:$0xf]
        %v1810 = vld [vmem:[%s1783 + $0x9c] sm:$0xf]
        %v1811 = vld [vmem:[%s1783 + $0xa0] sm:$0xf]
        %v1812 = vld [vmem:[%s1783 + $0xa8] sm:$0xf]
        %v1813 = vld [vmem:[%s1783 + $0xac] sm:$0xf]
        %v1814 = vld [vmem:[%s1783 + $0xb4] sm:$0xf]
        %v1815 = vld [vmem:[%s1783 + $0xb8] sm:$0xf]
        %s1816 = scalar_lea.vmem %s210, 6
        %v1817 = vld [vmem:[%s1816] sm:$0x3]
        %v1850 = vunpack.c.l.b16 %v1784
        %v1851 = vunpack.c.l.b16 %v1785
        %v1852 = vunpack.c.l.b16 %v1786
        %v1853 = vunpack.c.l.b16 %v1787
        %v1854 = vunpack.c.l.b16 %v1788
        %v1855 = vunpack.c.l.b16 %v1789
        %v1856 = vunpack.c.l.b16 %v1790
        %v1857 = vunpack.c.l.b16 %v1791
        %v1858 = vunpack.c.l.b16 %v1792
        %v1859 = vunpack.c.l.b16 %v1793
        %v1860 = vunpack.c.l.b16 %v1794
        %v1861 = vunpack.c.l.b16 %v1795
        %v1862 = vunpack.c.l.b16 %v1796
        %v1863 = vunpack.c.l.b16 %v1797
        %v1864 = vunpack.c.l.b16 %v1798
        %v1865 = vunpack.c.l.b16 %v1799
        %v1866 = vunpack.c.l.b16 %v1800
        %v1867 = vunpack.c.l.b16 %v1801
        %v1868 = vunpack.c.l.b16 %v1802
        %v1869 = vunpack.c.l.b16 %v1803
        %v1870 = vunpack.c.l.b16 %v1804
        %v1871 = vunpack.c.l.b16 %v1805
        %v1872 = vunpack.c.l.b16 %v1806
        %v1873 = vunpack.c.l.b16 %v1807
        %v1874 = vunpack.c.l.b16 %v1808
        %v1875 = vunpack.c.l.b16 %v1809
        %v1876 = vunpack.c.l.b16 %v1810
        %v1877 = vunpack.c.l.b16 %v1811
        %v1878 = vunpack.c.l.b16 %v1812
        %v1879 = vunpack.c.l.b16 %v1813
        %v1880 = vunpack.c.l.b16 %v1814
        %v1881 = vunpack.c.l.b16 %v1815
        %v1882 = vpack.c.b16 %v1851, %v1850
        %v1883 = vpack.c.b16 %v1853, %v1852
        %v1884 = vpack.c.b16 %v1855, %v1854
        %v1885 = vpack.c.b16 %v1857, %v1856
        %v1886 = vpack.c.b16 %v1859, %v1858
        %v1887 = vpack.c.b16 %v1861, %v1860
        %v1888 = vpack.c.b16 %v1863, %v1862
        %v1889 = vpack.c.b16 %v1865, %v1864
        %v1890 = vpack.c.b16 %v1867, %v1866
        %v1891 = vpack.c.b16 %v1869, %v1868
        %v1892 = vpack.c.b16 %v1871, %v1870
        %v1893 = vpack.c.b16 %v1873, %v1872
        %v1894 = vpack.c.b16 %v1875, %v1874
        %v1895 = vpack.c.b16 %v1877, %v1876
        %v1896 = vpack.c.b16 %v1879, %v1878
        %v1897 = vpack.c.b16 %v1881, %v1880
        %v1899 = vsel %vm335, %v1882, 0
        %v1902 = vsel %vm335, %v1883, 0
        %v1905 = vsel %vm335, %v1884, 0
        %v1908 = vsel %vm335, %v1885, 0
        %v1911 = vsel %vm335, %v1886, 0
        %v1914 = vsel %vm335, %v1887, 0
        %v1917 = vsel %vm335, %v1888, 0
        %v1920 = vsel %vm335, %v1889, 0
        %v1923 = vsel %vm335, %v1890, 0
        %v1926 = vsel %vm335, %v1891, 0
        %v1929 = vsel %vm335, %v1892, 0
        %v1932 = vsel %vm335, %v1893, 0
        %v1935 = vsel %vm335, %v1894, 0
        %v1938 = vsel %vm335, %v1895, 0
        %v1941 = vsel %vm335, %v1896, 0
        %v1944 = vsel %vm335, %v1897, 0
        %v1947 = vsel %vm384, %v1817, 0
        %1949 = vmatprep.subr.bf16.mxu0 0
        %1950 = vmatpush1.bf16.msra.mxu0 0
        %1951 = vmatprep.subr.bf16.mxu0 0
        %1952 = vmatpush1.bf16.msra.mxu0 0
        %1953 = vmatprep.subr.bf16.mxu0 0
        %1954 = vmatpush1.bf16.msra.mxu0 0
        %1955 = vmatprep.subr.bf16.mxu0 0
        %1956 = vmatpush1.bf16.msra.mxu0 0
        %1957 = vmatprep.subr.bf16.mxu0 0
        %1958 = vmatpush1.bf16.msra.mxu0 0
        %1959 = vmatprep.subr.bf16.mxu0 0
        %1960 = vmatpush1.bf16.msra.mxu0 0
        %1961 = vmatprep.subr.bf16.mxu0 0
        %1962 = vmatpush1.bf16.msra.mxu0 0
        %1963 = vmatprep.subr.bf16.mxu0 0
        %1964 = vmatpush1.bf16.msra.mxu0 %v1947
        %1965 = vmatprep.subr.bf16.mxu0 0
        %1966 = vmatpush2.bf16.msra.mxu0 0
        %1967 = vmatprep.subr.bf16.mxu0 0
        %1968 = vmatpush2.bf16.msra.mxu0 0
        %1969 = vmatprep.subr.bf16.mxu0 0
        %1970 = vmatpush2.bf16.msra.mxu0 0
        %1971 = vmatprep.subr.bf16.mxu0 0
        %1972 = vmatpush2.bf16.msra.mxu0 0
        %1973 = vmatprep.subr.bf16.mxu0 0
        %1974 = vmatpush2.bf16.msra.mxu0 0
        %1975 = vmatprep.subr.bf16.mxu0 0
        %1976 = vmatpush2.bf16.msra.mxu0 0
        %1977 = vmatprep.subr.bf16.mxu0 0
        %1978 = vmatpush2.bf16.msra.mxu0 0
        %1979 = vmatprep.subr.bf16.mxu0 0
        %1980 = vmatpush2.bf16.msra.mxu0 0
        %1981 = vmatprep.mubr.bf16.mxu0 0
        %1982 = vmatmul.mubr.bf16.gmra.mxu0 %v1899
        %v1983 = vpop.f32.mrf.mxu0
        %v1984 = vadd.f32 0.0, %v1983
        %v1985 = vpop.f32.mrf.mxu0
        %v1986 = vpop.f32.mrf.mxu0
        %v1987 = vadd.f32 0.0, %v1986
        %v1988 = vpop.f32.mrf.mxu0
        %1989 = vmatprep.mubr.bf16.mxu0 0
        %1990 = vmatmul.mubr.bf16.gmra.mxu0 %v1902
        %v1991 = vpop.f32.mrf.mxu0
        %v1992 = vadd.f32 0.0, %v1991
        %v1993 = vpop.f32.mrf.mxu0
        %v1994 = vpop.f32.mrf.mxu0
        %v1995 = vadd.f32 0.0, %v1994
        %v1996 = vpop.f32.mrf.mxu0
        %1997 = vmatprep.mubr.bf16.mxu0 0
        %1998 = vmatmul.mubr.bf16.gmra.mxu0 %v1905
        %v1999 = vpop.f32.mrf.mxu0
        %v2000 = vadd.f32 0.0, %v1999
        %v2001 = vpop.f32.mrf.mxu0
        %v2002 = vpop.f32.mrf.mxu0
        %v2003 = vadd.f32 0.0, %v2002
        %v2004 = vpop.f32.mrf.mxu0
        %2005 = vmatprep.mubr.bf16.mxu0 0
        %2006 = vmatmul.mubr.bf16.gmra.mxu0 %v1908
        %v2007 = vpop.f32.mrf.mxu0
        %v2008 = vadd.f32 0.0, %v2007
        %v2009 = vpop.f32.mrf.mxu0
        %v2010 = vpop.f32.mrf.mxu0
        %v2011 = vadd.f32 0.0, %v2010
        %v2012 = vpop.f32.mrf.mxu0
        %2013 = vmatprep.mubr.bf16.mxu0 0
        %2014 = vmatmul.mubr.bf16.gmra.mxu0 %v1911
        %v2015 = vpop.f32.mrf.mxu0
        %v2016 = vadd.f32 0.0, %v2015
        %v2017 = vpop.f32.mrf.mxu0
        %v2018 = vpop.f32.mrf.mxu0
        %v2019 = vadd.f32 0.0, %v2018
        %v2020 = vpop.f32.mrf.mxu0
        %2021 = vmatprep.mubr.bf16.mxu0 0
        %2022 = vmatmul.mubr.bf16.gmra.mxu0 %v1914
        %v2023 = vpop.f32.mrf.mxu0
        %v2024 = vadd.f32 0.0, %v2023
        %v2025 = vpop.f32.mrf.mxu0
        %v2026 = vpop.f32.mrf.mxu0
        %v2027 = vadd.f32 0.0, %v2026
        %v2028 = vpop.f32.mrf.mxu0
        %2029 = vmatprep.mubr.bf16.mxu0 0
        %2030 = vmatmul.mubr.bf16.gmra.mxu0 %v1917
        %v2031 = vpop.f32.mrf.mxu0
        %v2032 = vadd.f32 0.0, %v2031
        %v2033 = vpop.f32.mrf.mxu0
        %v2034 = vpop.f32.mrf.mxu0
        %v2035 = vadd.f32 0.0, %v2034
        %v2036 = vpop.f32.mrf.mxu0
        %2037 = vmatprep.mubr.bf16.mxu0 0
        %2038 = vmatmul.mubr.bf16.gmra.mxu0 %v1920
        %v2039 = vpop.f32.mrf.mxu0
        %v2040 = vadd.f32 0.0, %v2039
        %v2041 = vpop.f32.mrf.mxu0
        %v2042 = vpop.f32.mrf.mxu0
        %v2043 = vadd.f32 0.0, %v2042
        %v2044 = vpop.f32.mrf.mxu0
        %2045 = vmatprep.mubr.bf16.mxu0 0
        %2046 = vmatmul.mubr.bf16.gmra.mxu0 %v1923
        %v2047 = vpop.f32.mrf.mxu0
        %v2048 = vadd.f32 0.0, %v2047
        %v2049 = vpop.f32.mrf.mxu0
        %v2050 = vpop.f32.mrf.mxu0
        %v2051 = vadd.f32 0.0, %v2050
        %v2052 = vpop.f32.mrf.mxu0
        %2053 = vmatprep.mubr.bf16.mxu0 0
        %2054 = vmatmul.mubr.bf16.gmra.mxu0 %v1926
        %v2055 = vpop.f32.mrf.mxu0
        %v2056 = vadd.f32 0.0, %v2055
        %v2057 = vpop.f32.mrf.mxu0
        %v2058 = vpop.f32.mrf.mxu0
        %v2059 = vadd.f32 0.0, %v2058
        %v2060 = vpop.f32.mrf.mxu0
        %2061 = vmatprep.mubr.bf16.mxu0 0
        %2062 = vmatmul.mubr.bf16.gmra.mxu0 %v1929
        %v2063 = vpop.f32.mrf.mxu0
        %v2064 = vadd.f32 0.0, %v2063
        %v2065 = vpop.f32.mrf.mxu0
        %v2066 = vpop.f32.mrf.mxu0
        %v2067 = vadd.f32 0.0, %v2066
        %v2068 = vpop.f32.mrf.mxu0
        %2069 = vmatprep.mubr.bf16.mxu0 0
        %2070 = vmatmul.mubr.bf16.gmra.mxu0 %v1932
        %v2071 = vpop.f32.mrf.mxu0
        %v2072 = vadd.f32 0.0, %v2071
        %v2073 = vpop.f32.mrf.mxu0
        %v2074 = vpop.f32.mrf.mxu0
        %v2075 = vadd.f32 0.0, %v2074
        %v2076 = vpop.f32.mrf.mxu0
        %2077 = vmatprep.mubr.bf16.mxu0 0
        %2078 = vmatmul.mubr.bf16.gmra.mxu0 %v1935
        %v2079 = vpop.f32.mrf.mxu0
        %v2080 = vadd.f32 0.0, %v2079
        %v2081 = vpop.f32.mrf.mxu0
        %v2082 = vpop.f32.mrf.mxu0
        %v2083 = vadd.f32 0.0, %v2082
        %v2084 = vpop.f32.mrf.mxu0
        %2085 = vmatprep.mubr.bf16.mxu0 0
        %2086 = vmatmul.mubr.bf16.gmra.mxu0 %v1938
        %v2087 = vpop.f32.mrf.mxu0
        %v2088 = vadd.f32 0.0, %v2087
        %v2089 = vpop.f32.mrf.mxu0
        %v2090 = vpop.f32.mrf.mxu0
        %v2091 = vadd.f32 0.0, %v2090
        %v2092 = vpop.f32.mrf.mxu0
        %2093 = vmatprep.mubr.bf16.mxu0 0
        %2094 = vmatmul.mubr.bf16.gmra.mxu0 %v1941
        %v2095 = vpop.f32.mrf.mxu0
        %v2096 = vadd.f32 0.0, %v2095
        %v2097 = vpop.f32.mrf.mxu0
        %v2098 = vpop.f32.mrf.mxu0
        %v2099 = vadd.f32 0.0, %v2098
        %v2100 = vpop.f32.mrf.mxu0
        %2101 = vmatprep.mubr.bf16.mxu0 0
        %2102 = vmatmul.mubr.bf16.gmra.mxu0 %v1944
        %v2103 = vpop.f32.mrf.mxu0
        %v2104 = vadd.f32 0.0, %v2103
        %v2105 = vpop.f32.mrf.mxu0
        %v2106 = vpop.f32.mrf.mxu0
        %v2107 = vadd.f32 0.0, %v2106
        %v2108 = vpop.f32.mrf.mxu0
        %2109 = vdwg.mxu0
        %v2110 = vadd.f32 %v1751, %v1984
        %v2111 = vadd.f32 %v1752, %v1987
        %v2112 = vadd.f32 %v1753, %v1992
        %v2113 = vadd.f32 %v1754, %v1995
        %v2114 = vadd.f32 %v1755, %v2000
        %v2115 = vadd.f32 %v1756, %v2003
        %v2116 = vadd.f32 %v1757, %v2008
        %v2117 = vadd.f32 %v1758, %v2011
        %v2118 = vadd.f32 %v1759, %v2016
        %v2119 = vadd.f32 %v1760, %v2019
        %v2120 = vadd.f32 %v1761, %v2024
        %v2121 = vadd.f32 %v1762, %v2027
        %v2122 = vadd.f32 %v1763, %v2032
        %v2123 = vadd.f32 %v1764, %v2035
        %v2124 = vadd.f32 %v1765, %v2040
        %v2125 = vadd.f32 %v1766, %v2043
        %v2126 = vadd.f32 %v1767, %v2048
        %v2127 = vadd.f32 %v1768, %v2051
        %v2128 = vadd.f32 %v1769, %v2056
        %v2129 = vadd.f32 %v1770, %v2059
        %v2130 = vadd.f32 %v1771, %v2064
        %v2131 = vadd.f32 %v1772, %v2067
        %v2132 = vadd.f32 %v1773, %v2072
        %v2133 = vadd.f32 %v1774, %v2075
        %v2134 = vadd.f32 %v1775, %v2080
        %v2135 = vadd.f32 %v1776, %v2083
        %v2136 = vadd.f32 %v1777, %v2088
        %v2137 = vadd.f32 %v1778, %v2091
        %v2138 = vadd.f32 %v1779, %v2096
        %v2139 = vadd.f32 %v1780, %v2099
        %v2140 = vadd.f32 %v1781, %v2104
        %v2141 = vadd.f32 %v1782, %v2107
        %v2142 = vld [vmem:[%s1783] sm:$0xf]
        %v2143 = vld [vmem:[%s1783 + $0x4] sm:$0xf]
        %v2144 = vld [vmem:[%s1783 + $0x8] sm:$0x1]
        %v2145 = vld [vmem:[%s1783 + $0xc] sm:$0xf]
        %v2146 = vld [vmem:[%s1783 + $0x10] sm:$0xf]
        %v2147 = vld [vmem:[%s1783 + $0x14] sm:$0x1]
        %v2148 = vld [vmem:[%s1783 + $0x18] sm:$0xf]
        %v2149 = vld [vmem:[%s1783 + $0x1c] sm:$0xf]
        %v2150 = vld [vmem:[%s1783 + $0x20] sm:$0x1]
        %v2151 = vld [vmem:[%s1783 + $0x24] sm:$0xf]
        %v2152 = vld [vmem:[%s1783 + $0x28] sm:$0xf]
        %v2153 = vld [vmem:[%s1783 + $0x2c] sm:$0x1]
        %v2154 = vld [vmem:[%s1783 + $0x30] sm:$0xf]
        %v2155 = vld [vmem:[%s1783 + $0x34] sm:$0xf]
        %v2156 = vld [vmem:[%s1783 + $0x38] sm:$0x1]
        %v2157 = vld [vmem:[%s1783 + $0x3c] sm:$0xf]
        %v2158 = vld [vmem:[%s1783 + $0x40] sm:$0xf]
        %v2159 = vld [vmem:[%s1783 + $0x44] sm:$0x1]
        %v2160 = vld [vmem:[%s1783 + $0x48] sm:$0xf]
        %v2161 = vld [vmem:[%s1783 + $0x4c] sm:$0xf]
        %v2162 = vld [vmem:[%s1783 + $0x50] sm:$0x1]
        %v2163 = vld [vmem:[%s1783 + $0x54] sm:$0xf]
        %v2164 = vld [vmem:[%s1783 + $0x58] sm:$0xf]
        %v2165 = vld [vmem:[%s1783 + $0x5c] sm:$0x1]
        %v2166 = vld [vmem:[%s1783 + $0x60] sm:$0xf]
        %v2167 = vld [vmem:[%s1783 + $0x64] sm:$0xf]
        %v2168 = vld [vmem:[%s1783 + $0x68] sm:$0x1]
        %v2169 = vld [vmem:[%s1783 + $0x6c] sm:$0xf]
        %v2170 = vld [vmem:[%s1783 + $0x70] sm:$0xf]
        %v2171 = vld [vmem:[%s1783 + $0x74] sm:$0x1]
        %v2172 = vld [vmem:[%s1783 + $0x78] sm:$0xf]
        %v2173 = vld [vmem:[%s1783 + $0x7c] sm:$0xf]
        %v2174 = vld [vmem:[%s1783 + $0x80] sm:$0x1]
        %v2175 = vld [vmem:[%s1783 + $0x84] sm:$0xf]
        %v2176 = vld [vmem:[%s1783 + $0x88] sm:$0xf]
        %v2177 = vld [vmem:[%s1783 + $0x8c] sm:$0x1]
        %v2178 = vld [vmem:[%s1783 + $0x90] sm:$0xf]
        %v2179 = vld [vmem:[%s1783 + $0x94] sm:$0xf]
        %v2180 = vld [vmem:[%s1783 + $0x98] sm:$0x1]
        %v2181 = vld [vmem:[%s1783 + $0x9c] sm:$0xf]
        %v2182 = vld [vmem:[%s1783 + $0xa0] sm:$0xf]
        %v2183 = vld [vmem:[%s1783 + $0xa4] sm:$0x1]
        %v2184 = vld [vmem:[%s1783 + $0xa8] sm:$0xf]
        %v2185 = vld [vmem:[%s1783 + $0xac] sm:$0xf]
        %v2186 = vld [vmem:[%s1783 + $0xb0] sm:$0x1]
        %v2187 = vld [vmem:[%s1783 + $0xb4] sm:$0xf]
        %v2188 = vld [vmem:[%s1783 + $0xb8] sm:$0xf]
        %v2189 = vld [vmem:[%s1783 + $0xbc] sm:$0x1]
        %v2191 = vshrl.u32 %v2142, 16
        %v2193 = vrot.slane %v2191, 4
        %v2194 = vshll.u32 %v2142, 16
        %v2196 = vrot.slane %v2194, 5
        %v2197 = vor.u32 %v2193, %v2196
        %v2198 = vrot.slane %v2197, 4
        %v2200 = vshll.u32 %v2143, 16
        %v2202 = vrot.slane %v2200, 5
        %v2203 = vsel %vm631, %v2198, %v2202
        %v2204 = vshrl.u32 %v2143, 16
        %v2206 = vrot.slane %v2204, 4
        %v2207 = vor.u32 %v2206, %v2202
        %v2208 = vrot.slane %v2207, 4
        %v2210 = vshll.u32 %v2144, 16
        %v2212 = vrot.slane %v2210, 5
        %v2213 = vsel %vm631, %v2208, %v2212
        %v2215 = vshrl.u32 %v2145, 16
        %v2217 = vrot.slane %v2215, 4
        %v2218 = vshll.u32 %v2145, 16
        %v2220 = vrot.slane %v2218, 5
        %v2221 = vor.u32 %v2217, %v2220
        %v2222 = vrot.slane %v2221, 4
        %v2224 = vshll.u32 %v2146, 16
        %v2226 = vrot.slane %v2224, 5
        %v2227 = vsel %vm631, %v2222, %v2226
        %v2228 = vshrl.u32 %v2146, 16
        %v2230 = vrot.slane %v2228, 4
        %v2231 = vor.u32 %v2230, %v2226
        %v2232 = vrot.slane %v2231, 4
        %v2234 = vshll.u32 %v2147, 16
        %v2236 = vrot.slane %v2234, 5
        %v2237 = vsel %vm631, %v2232, %v2236
        %v2239 = vshrl.u32 %v2148, 16
        %v2241 = vrot.slane %v2239, 4
        %v2242 = vshll.u32 %v2148, 16
        %v2244 = vrot.slane %v2242, 5
        %v2245 = vor.u32 %v2241, %v2244
        %v2246 = vrot.slane %v2245, 4
        %v2248 = vshll.u32 %v2149, 16
        %v2250 = vrot.slane %v2248, 5
        %v2251 = vsel %vm631, %v2246, %v2250
        %v2252 = vshrl.u32 %v2149, 16
        %v2254 = vrot.slane %v2252, 4
        %v2255 = vor.u32 %v2254, %v2250
        %v2256 = vrot.slane %v2255, 4
        %v2258 = vshll.u32 %v2150, 16
        %v2260 = vrot.slane %v2258, 5
        %v2261 = vsel %vm631, %v2256, %v2260
        %v2263 = vshrl.u32 %v2151, 16
        %v2265 = vrot.slane %v2263, 4
        %v2266 = vshll.u32 %v2151, 16
        %v2268 = vrot.slane %v2266, 5
        %v2269 = vor.u32 %v2265, %v2268
        %v2270 = vrot.slane %v2269, 4
        %v2272 = vshll.u32 %v2152, 16
        %v2274 = vrot.slane %v2272, 5
        %v2275 = vsel %vm631, %v2270, %v2274
        %v2276 = vshrl.u32 %v2152, 16
        %v2278 = vrot.slane %v2276, 4
        %v2279 = vor.u32 %v2278, %v2274
        %v2280 = vrot.slane %v2279, 4
        %v2282 = vshll.u32 %v2153, 16
        %v2284 = vrot.slane %v2282, 5
        %v2285 = vsel %vm631, %v2280, %v2284
        %v2287 = vshrl.u32 %v2154, 16
        %v2289 = vrot.slane %v2287, 4
        %v2290 = vshll.u32 %v2154, 16
        %v2292 = vrot.slane %v2290, 5
        %v2293 = vor.u32 %v2289, %v2292
        %v2294 = vrot.slane %v2293, 4
        %v2296 = vshll.u32 %v2155, 16
        %v2298 = vrot.slane %v2296, 5
        %v2299 = vsel %vm631, %v2294, %v2298
        %v2300 = vshrl.u32 %v2155, 16
        %v2302 = vrot.slane %v2300, 4
        %v2303 = vor.u32 %v2302, %v2298
        %v2304 = vrot.slane %v2303, 4
        %v2306 = vshll.u32 %v2156, 16
        %v2308 = vrot.slane %v2306, 5
        %v2309 = vsel %vm631, %v2304, %v2308
        %v2311 = vshrl.u32 %v2157, 16
        %v2313 = vrot.slane %v2311, 4
        %v2314 = vshll.u32 %v2157, 16
        %v2316 = vrot.slane %v2314, 5
        %v2317 = vor.u32 %v2313, %v2316
        %v2318 = vrot.slane %v2317, 4
        %v2320 = vshll.u32 %v2158, 16
        %v2322 = vrot.slane %v2320, 5
        %v2323 = vsel %vm631, %v2318, %v2322
        %v2324 = vshrl.u32 %v2158, 16
        %v2326 = vrot.slane %v2324, 4
        %v2327 = vor.u32 %v2326, %v2322
        %v2328 = vrot.slane %v2327, 4
        %v2330 = vshll.u32 %v2159, 16
        %v2332 = vrot.slane %v2330, 5
        %v2333 = vsel %vm631, %v2328, %v2332
        %v2335 = vshrl.u32 %v2160, 16
        %v2337 = vrot.slane %v2335, 4
        %v2338 = vshll.u32 %v2160, 16
        %v2340 = vrot.slane %v2338, 5
        %v2341 = vor.u32 %v2337, %v2340
        %v2342 = vrot.slane %v2341, 4
        %v2344 = vshll.u32 %v2161, 16
        %v2346 = vrot.slane %v2344, 5
        %v2347 = vsel %vm631, %v2342, %v2346
        %v2348 = vshrl.u32 %v2161, 16
        %v2350 = vrot.slane %v2348, 4
        %v2351 = vor.u32 %v2350, %v2346
        %v2352 = vrot.slane %v2351, 4
        %v2354 = vshll.u32 %v2162, 16
        %v2356 = vrot.slane %v2354, 5
        %v2357 = vsel %vm631, %v2352, %v2356
        %v2359 = vshrl.u32 %v2163, 16
        %v2361 = vrot.slane %v2359, 4
        %v2362 = vshll.u32 %v2163, 16
        %v2364 = vrot.slane %v2362, 5
        %v2365 = vor.u32 %v2361, %v2364
        %v2366 = vrot.slane %v2365, 4
        %v2368 = vshll.u32 %v2164, 16
        %v2370 = vrot.slane %v2368, 5
        %v2371 = vsel %vm631, %v2366, %v2370
        %v2372 = vshrl.u32 %v2164, 16
        %v2374 = vrot.slane %v2372, 4
        %v2375 = vor.u32 %v2374, %v2370
        %v2376 = vrot.slane %v2375, 4
        %v2378 = vshll.u32 %v2165, 16
        %v2380 = vrot.slane %v2378, 5
        %v2381 = vsel %vm631, %v2376, %v2380
        %v2383 = vshrl.u32 %v2166, 16
        %v2385 = vrot.slane %v2383, 4
        %v2386 = vshll.u32 %v2166, 16
        %v2388 = vrot.slane %v2386, 5
        %v2389 = vor.u32 %v2385, %v2388
        %v2390 = vrot.slane %v2389, 4
        %v2392 = vshll.u32 %v2167, 16
        %v2394 = vrot.slane %v2392, 5
        %v2395 = vsel %vm631, %v2390, %v2394
        %v2396 = vshrl.u32 %v2167, 16
        %v2398 = vrot.slane %v2396, 4
        %v2399 = vor.u32 %v2398, %v2394
        %v2400 = vrot.slane %v2399, 4
        %v2402 = vshll.u32 %v2168, 16
        %v2404 = vrot.slane %v2402, 5
        %v2405 = vsel %vm631, %v2400, %v2404
        %v2407 = vshrl.u32 %v2169, 16
        %v2409 = vrot.slane %v2407, 4
        %v2410 = vshll.u32 %v2169, 16
        %v2412 = vrot.slane %v2410, 5
        %v2413 = vor.u32 %v2409, %v2412
        %v2414 = vrot.slane %v2413, 4
        %v2416 = vshll.u32 %v2170, 16
        %v2418 = vrot.slane %v2416, 5
        %v2419 = vsel %vm631, %v2414, %v2418
        %v2420 = vshrl.u32 %v2170, 16
        %v2422 = vrot.slane %v2420, 4
        %v2423 = vor.u32 %v2422, %v2418
        %v2424 = vrot.slane %v2423, 4
        %v2426 = vshll.u32 %v2171, 16
        %v2428 = vrot.slane %v2426, 5
        %v2429 = vsel %vm631, %v2424, %v2428
        %v2431 = vshrl.u32 %v2172, 16
        %v2433 = vrot.slane %v2431, 4
        %v2434 = vshll.u32 %v2172, 16
        %v2436 = vrot.slane %v2434, 5
        %v2437 = vor.u32 %v2433, %v2436
        %v2438 = vrot.slane %v2437, 4
        %v2440 = vshll.u32 %v2173, 16
        %v2442 = vrot.slane %v2440, 5
        %v2443 = vsel %vm631, %v2438, %v2442
        %v2444 = vshrl.u32 %v2173, 16
        %v2446 = vrot.slane %v2444, 4
        %v2447 = vor.u32 %v2446, %v2442
        %v2448 = vrot.slane %v2447, 4
        %v2450 = vshll.u32 %v2174, 16
        %v2452 = vrot.slane %v2450, 5
        %v2453 = vsel %vm631, %v2448, %v2452
        %v2455 = vshrl.u32 %v2175, 16
        %v2457 = vrot.slane %v2455, 4
        %v2458 = vshll.u32 %v2175, 16
        %v2460 = vrot.slane %v2458, 5
        %v2461 = vor.u32 %v2457, %v2460
        %v2462 = vrot.slane %v2461, 4
        %v2464 = vshll.u32 %v2176, 16
        %v2466 = vrot.slane %v2464, 5
        %v2467 = vsel %vm631, %v2462, %v2466
        %v2468 = vshrl.u32 %v2176, 16
        %v2470 = vrot.slane %v2468, 4
        %v2471 = vor.u32 %v2470, %v2466
        %v2472 = vrot.slane %v2471, 4
        %v2474 = vshll.u32 %v2177, 16
        %v2476 = vrot.slane %v2474, 5
        %v2477 = vsel %vm631, %v2472, %v2476
        %v2479 = vshrl.u32 %v2178, 16
        %v2481 = vrot.slane %v2479, 4
        %v2482 = vshll.u32 %v2178, 16
        %v2484 = vrot.slane %v2482, 5
        %v2485 = vor.u32 %v2481, %v2484
        %v2486 = vrot.slane %v2485, 4
        %v2488 = vshll.u32 %v2179, 16
        %v2490 = vrot.slane %v2488, 5
        %v2491 = vsel %vm631, %v2486, %v2490
        %v2492 = vshrl.u32 %v2179, 16
        %v2494 = vrot.slane %v2492, 4
        %v2495 = vor.u32 %v2494, %v2490
        %v2496 = vrot.slane %v2495, 4
        %v2498 = vshll.u32 %v2180, 16
        %v2500 = vrot.slane %v2498, 5
        %v2501 = vsel %vm631, %v2496, %v2500
        %v2503 = vshrl.u32 %v2181, 16
        %v2505 = vrot.slane %v2503, 4
        %v2506 = vshll.u32 %v2181, 16
        %v2508 = vrot.slane %v2506, 5
        %v2509 = vor.u32 %v2505, %v2508
        %v2510 = vrot.slane %v2509, 4
        %v2512 = vshll.u32 %v2182, 16
        %v2514 = vrot.slane %v2512, 5
        %v2515 = vsel %vm631, %v2510, %v2514
        %v2516 = vshrl.u32 %v2182, 16
        %v2518 = vrot.slane %v2516, 4
        %v2519 = vor.u32 %v2518, %v2514
        %v2520 = vrot.slane %v2519, 4
        %v2522 = vshll.u32 %v2183, 16
        %v2524 = vrot.slane %v2522, 5
        %v2525 = vsel %vm631, %v2520, %v2524
        %v2527 = vshrl.u32 %v2184, 16
        %v2529 = vrot.slane %v2527, 4
        %v2530 = vshll.u32 %v2184, 16
        %v2532 = vrot.slane %v2530, 5
        %v2533 = vor.u32 %v2529, %v2532
        %v2534 = vrot.slane %v2533, 4
        %v2536 = vshll.u32 %v2185, 16
        %v2538 = vrot.slane %v2536, 5
        %v2539 = vsel %vm631, %v2534, %v2538
        %v2540 = vshrl.u32 %v2185, 16
        %v2542 = vrot.slane %v2540, 4
        %v2543 = vor.u32 %v2542, %v2538
        %v2544 = vrot.slane %v2543, 4
        %v2546 = vshll.u32 %v2186, 16
        %v2548 = vrot.slane %v2546, 5
        %v2549 = vsel %vm631, %v2544, %v2548
        %v2551 = vshrl.u32 %v2187, 16
        %v2553 = vrot.slane %v2551, 4
        %v2554 = vshll.u32 %v2187, 16
        %v2556 = vrot.slane %v2554, 5
        %v2557 = vor.u32 %v2553, %v2556
        %v2558 = vrot.slane %v2557, 4
        %v2560 = vshll.u32 %v2188, 16
        %v2562 = vrot.slane %v2560, 5
        %v2563 = vsel %vm631, %v2558, %v2562
        %v2564 = vshrl.u32 %v2188, 16
        %v2566 = vrot.slane %v2564, 4
        %v2567 = vor.u32 %v2566, %v2562
        %v2568 = vrot.slane %v2567, 4
        %v2570 = vshll.u32 %v2189, 16
        %v2572 = vrot.slane %v2570, 5
        %v2573 = vsel %vm631, %v2568, %v2572
        %s2574 = scalar_lea.vmem %s210, 8
        %v2575 = vld [vmem:[%s2574] sm:$0x3]
        %v2576 = vunpack.c.l.b16 %v2203
        %v2577 = vunpack.c.l.b16 %v2213
        %v2578 = vunpack.c.l.b16 %v2227
        %v2579 = vunpack.c.l.b16 %v2237
        %v2580 = vunpack.c.l.b16 %v2251
        %v2581 = vunpack.c.l.b16 %v2261
        %v2582 = vunpack.c.l.b16 %v2275
        %v2583 = vunpack.c.l.b16 %v2285
        %v2584 = vunpack.c.l.b16 %v2299
        %v2585 = vunpack.c.l.b16 %v2309
        %v2586 = vunpack.c.l.b16 %v2323
        %v2587 = vunpack.c.l.b16 %v2333
        %v2588 = vunpack.c.l.b16 %v2347
        %v2589 = vunpack.c.l.b16 %v2357
        %v2590 = vunpack.c.l.b16 %v2371
        %v2591 = vunpack.c.l.b16 %v2381
        %v2592 = vunpack.c.l.b16 %v2395
        %v2593 = vunpack.c.l.b16 %v2405
        %v2594 = vunpack.c.l.b16 %v2419
        %v2595 = vunpack.c.l.b16 %v2429
        %v2596 = vunpack.c.l.b16 %v2443
        %v2597 = vunpack.c.l.b16 %v2453
        %v2598 = vunpack.c.l.b16 %v2467
        %v2599 = vunpack.c.l.b16 %v2477
        %v2600 = vunpack.c.l.b16 %v2491
        %v2601 = vunpack.c.l.b16 %v2501
        %v2602 = vunpack.c.l.b16 %v2515
        %v2603 = vunpack.c.l.b16 %v2525
        %v2604 = vunpack.c.l.b16 %v2539
        %v2605 = vunpack.c.l.b16 %v2549
        %v2606 = vunpack.c.l.b16 %v2563
        %v2607 = vunpack.c.l.b16 %v2573
        %v2608 = vpack.c.b16 %v2577, %v2576
        %v2609 = vpack.c.b16 %v2579, %v2578
        %v2610 = vpack.c.b16 %v2581, %v2580
        %v2611 = vpack.c.b16 %v2583, %v2582
        %v2612 = vpack.c.b16 %v2585, %v2584
        %v2613 = vpack.c.b16 %v2587, %v2586
        %v2614 = vpack.c.b16 %v2589, %v2588
        %v2615 = vpack.c.b16 %v2591, %v2590
        %v2616 = vpack.c.b16 %v2593, %v2592
        %v2617 = vpack.c.b16 %v2595, %v2594
        %v2618 = vpack.c.b16 %v2597, %v2596
        %v2619 = vpack.c.b16 %v2599, %v2598
        %v2620 = vpack.c.b16 %v2601, %v2600
        %v2621 = vpack.c.b16 %v2603, %v2602
        %v2622 = vpack.c.b16 %v2605, %v2604
        %v2623 = vpack.c.b16 %v2607, %v2606
        %v2625 = vsel %vm335, %v2608, 0
        %v2628 = vsel %vm335, %v2609, 0
        %v2631 = vsel %vm335, %v2610, 0
        %v2634 = vsel %vm335, %v2611, 0
        %v2637 = vsel %vm335, %v2612, 0
        %v2640 = vsel %vm335, %v2613, 0
        %v2643 = vsel %vm335, %v2614, 0
        %v2646 = vsel %vm335, %v2615, 0
        %v2649 = vsel %vm335, %v2616, 0
        %v2652 = vsel %vm335, %v2617, 0
        %v2655 = vsel %vm335, %v2618, 0
        %v2658 = vsel %vm335, %v2619, 0
        %v2661 = vsel %vm335, %v2620, 0
        %v2664 = vsel %vm335, %v2621, 0
        %v2667 = vsel %vm335, %v2622, 0
        %v2670 = vsel %vm335, %v2623, 0
        %v2673 = vsel %vm384, %v2575, 0
        %2675 = vmatprep.subr.bf16.mxu0 0
        %2676 = vmatpush1.bf16.msra.mxu0 0
        %2677 = vmatprep.subr.bf16.mxu0 0
        %2678 = vmatpush1.bf16.msra.mxu0 0
        %2679 = vmatprep.subr.bf16.mxu0 0
        %2680 = vmatpush1.bf16.msra.mxu0 0
        %2681 = vmatprep.subr.bf16.mxu0 0
        %2682 = vmatpush1.bf16.msra.mxu0 0
        %2683 = vmatprep.subr.bf16.mxu0 0
        %2684 = vmatpush1.bf16.msra.mxu0 0
        %2685 = vmatprep.subr.bf16.mxu0 0
        %2686 = vmatpush1.bf16.msra.mxu0 0
        %2687 = vmatprep.subr.bf16.mxu0 0
        %2688 = vmatpush1.bf16.msra.mxu0 0
        %2689 = vmatprep.subr.bf16.mxu0 0
        %2690 = vmatpush1.bf16.msra.mxu0 %v2673
        %2691 = vmatprep.subr.bf16.mxu0 0
        %2692 = vmatpush2.bf16.msra.mxu0 0
        %2693 = vmatprep.subr.bf16.mxu0 0
        %2694 = vmatpush2.bf16.msra.mxu0 0
        %2695 = vmatprep.subr.bf16.mxu0 0
        %2696 = vmatpush2.bf16.msra.mxu0 0
        %2697 = vmatprep.subr.bf16.mxu0 0
        %2698 = vmatpush2.bf16.msra.mxu0 0
        %2699 = vmatprep.subr.bf16.mxu0 0
        %2700 = vmatpush2.bf16.msra.mxu0 0
        %2701 = vmatprep.subr.bf16.mxu0 0
        %2702 = vmatpush2.bf16.msra.mxu0 0
        %2703 = vmatprep.subr.bf16.mxu0 0
        %2704 = vmatpush2.bf16.msra.mxu0 0
        %2705 = vmatprep.subr.bf16.mxu0 0
        %2706 = vmatpush2.bf16.msra.mxu0 0
        %2707 = vmatprep.mubr.bf16.mxu0 0
        %2708 = vmatmul.mubr.bf16.gmra.mxu0 %v2625
        %v2709 = vpop.f32.mrf.mxu0
        %v2710 = vadd.f32 0.0, %v2709
        %v2711 = vpop.f32.mrf.mxu0
        %v2712 = vpop.f32.mrf.mxu0
        %v2713 = vadd.f32 0.0, %v2712
        %v2714 = vpop.f32.mrf.mxu0
        %2715 = vmatprep.mubr.bf16.mxu0 0
        %2716 = vmatmul.mubr.bf16.gmra.mxu0 %v2628
        %v2717 = vpop.f32.mrf.mxu0
        %v2718 = vadd.f32 0.0, %v2717
        %v2719 = vpop.f32.mrf.mxu0
        %v2720 = vpop.f32.mrf.mxu0
        %v2721 = vadd.f32 0.0, %v2720
        %v2722 = vpop.f32.mrf.mxu0
        %2723 = vmatprep.mubr.bf16.mxu0 0
        %2724 = vmatmul.mubr.bf16.gmra.mxu0 %v2631
        %v2725 = vpop.f32.mrf.mxu0
        %v2726 = vadd.f32 0.0, %v2725
        %v2727 = vpop.f32.mrf.mxu0
        %v2728 = vpop.f32.mrf.mxu0
        %v2729 = vadd.f32 0.0, %v2728
        %v2730 = vpop.f32.mrf.mxu0
        %2731 = vmatprep.mubr.bf16.mxu0 0
        %2732 = vmatmul.mubr.bf16.gmra.mxu0 %v2634
        %v2733 = vpop.f32.mrf.mxu0
        %v2734 = vadd.f32 0.0, %v2733
        %v2735 = vpop.f32.mrf.mxu0
        %v2736 = vpop.f32.mrf.mxu0
        %v2737 = vadd.f32 0.0, %v2736
        %v2738 = vpop.f32.mrf.mxu0
        %2739 = vmatprep.mubr.bf16.mxu0 0
        %2740 = vmatmul.mubr.bf16.gmra.mxu0 %v2637
        %v2741 = vpop.f32.mrf.mxu0
        %v2742 = vadd.f32 0.0, %v2741
        %v2743 = vpop.f32.mrf.mxu0
        %v2744 = vpop.f32.mrf.mxu0
        %v2745 = vadd.f32 0.0, %v2744
        %v2746 = vpop.f32.mrf.mxu0
        %2747 = vmatprep.mubr.bf16.mxu0 0
        %2748 = vmatmul.mubr.bf16.gmra.mxu0 %v2640
        %v2749 = vpop.f32.mrf.mxu0
        %v2750 = vadd.f32 0.0, %v2749
        %v2751 = vpop.f32.mrf.mxu0
        %v2752 = vpop.f32.mrf.mxu0
        %v2753 = vadd.f32 0.0, %v2752
        %v2754 = vpop.f32.mrf.mxu0
        %2755 = vmatprep.mubr.bf16.mxu0 0
        %2756 = vmatmul.mubr.bf16.gmra.mxu0 %v2643
        %v2757 = vpop.f32.mrf.mxu0
        %v2758 = vadd.f32 0.0, %v2757
        %v2759 = vpop.f32.mrf.mxu0
        %v2760 = vpop.f32.mrf.mxu0
        %v2761 = vadd.f32 0.0, %v2760
        %v2762 = vpop.f32.mrf.mxu0
        %2763 = vmatprep.mubr.bf16.mxu0 0
        %2764 = vmatmul.mubr.bf16.gmra.mxu0 %v2646
        %v2765 = vpop.f32.mrf.mxu0
        %v2766 = vadd.f32 0.0, %v2765
        %v2767 = vpop.f32.mrf.mxu0
        %v2768 = vpop.f32.mrf.mxu0
        %v2769 = vadd.f32 0.0, %v2768
        %v2770 = vpop.f32.mrf.mxu0
        %2771 = vmatprep.mubr.bf16.mxu0 0
        %2772 = vmatmul.mubr.bf16.gmra.mxu0 %v2649
        %v2773 = vpop.f32.mrf.mxu0
        %v2774 = vadd.f32 0.0, %v2773
        %v2775 = vpop.f32.mrf.mxu0
        %v2776 = vpop.f32.mrf.mxu0
        %v2777 = vadd.f32 0.0, %v2776
        %v2778 = vpop.f32.mrf.mxu0
        %2779 = vmatprep.mubr.bf16.mxu0 0
        %2780 = vmatmul.mubr.bf16.gmra.mxu0 %v2652
        %v2781 = vpop.f32.mrf.mxu0
        %v2782 = vadd.f32 0.0, %v2781
        %v2783 = vpop.f32.mrf.mxu0
        %v2784 = vpop.f32.mrf.mxu0
        %v2785 = vadd.f32 0.0, %v2784
        %v2786 = vpop.f32.mrf.mxu0
        %2787 = vmatprep.mubr.bf16.mxu0 0
        %2788 = vmatmul.mubr.bf16.gmra.mxu0 %v2655
        %v2789 = vpop.f32.mrf.mxu0
        %v2790 = vadd.f32 0.0, %v2789
        %v2791 = vpop.f32.mrf.mxu0
        %v2792 = vpop.f32.mrf.mxu0
        %v2793 = vadd.f32 0.0, %v2792
        %v2794 = vpop.f32.mrf.mxu0
        %2795 = vmatprep.mubr.bf16.mxu0 0
        %2796 = vmatmul.mubr.bf16.gmra.mxu0 %v2658
        %v2797 = vpop.f32.mrf.mxu0
        %v2798 = vadd.f32 0.0, %v2797
        %v2799 = vpop.f32.mrf.mxu0
        %v2800 = vpop.f32.mrf.mxu0
        %v2801 = vadd.f32 0.0, %v2800
        %v2802 = vpop.f32.mrf.mxu0
        %2803 = vmatprep.mubr.bf16.mxu0 0
        %2804 = vmatmul.mubr.bf16.gmra.mxu0 %v2661
        %v2805 = vpop.f32.mrf.mxu0
        %v2806 = vadd.f32 0.0, %v2805
        %v2807 = vpop.f32.mrf.mxu0
        %v2808 = vpop.f32.mrf.mxu0
        %v2809 = vadd.f32 0.0, %v2808
        %v2810 = vpop.f32.mrf.mxu0
        %2811 = vmatprep.mubr.bf16.mxu0 0
        %2812 = vmatmul.mubr.bf16.gmra.mxu0 %v2664
        %v2813 = vpop.f32.mrf.mxu0
        %v2814 = vadd.f32 0.0, %v2813
        %v2815 = vpop.f32.mrf.mxu0
        %v2816 = vpop.f32.mrf.mxu0
        %v2817 = vadd.f32 0.0, %v2816
        %v2818 = vpop.f32.mrf.mxu0
        %2819 = vmatprep.mubr.bf16.mxu0 0
        %2820 = vmatmul.mubr.bf16.gmra.mxu0 %v2667
        %v2821 = vpop.f32.mrf.mxu0
        %v2822 = vadd.f32 0.0, %v2821
        %v2823 = vpop.f32.mrf.mxu0
        %v2824 = vpop.f32.mrf.mxu0
        %v2825 = vadd.f32 0.0, %v2824
        %v2826 = vpop.f32.mrf.mxu0
        %2827 = vmatprep.mubr.bf16.mxu0 0
        %2828 = vmatmul.mubr.bf16.gmra.mxu0 %v2670
        %v2829 = vpop.f32.mrf.mxu0
        %v2830 = vadd.f32 0.0, %v2829
        %v2831 = vpop.f32.mrf.mxu0
        %v2832 = vpop.f32.mrf.mxu0
        %v2833 = vadd.f32 0.0, %v2832
        %v2834 = vpop.f32.mrf.mxu0
        %2835 = vdwg.mxu0
        %v2836 = vadd.f32 %v2110, %v2710
        %v2837 = vadd.f32 %v2111, %v2713
        %v2838 = vadd.f32 %v2112, %v2718
        %v2839 = vadd.f32 %v2113, %v2721
        %v2840 = vadd.f32 %v2114, %v2726
        %v2841 = vadd.f32 %v2115, %v2729
        %v2842 = vadd.f32 %v2116, %v2734
        %v2843 = vadd.f32 %v2117, %v2737
        %v2844 = vadd.f32 %v2118, %v2742
        %v2845 = vadd.f32 %v2119, %v2745
        %v2846 = vadd.f32 %v2120, %v2750
        %v2847 = vadd.f32 %v2121, %v2753
        %v2848 = vadd.f32 %v2122, %v2758
        %v2849 = vadd.f32 %v2123, %v2761
        %v2850 = vadd.f32 %v2124, %v2766
        %v2851 = vadd.f32 %v2125, %v2769
        %v2852 = vadd.f32 %v2126, %v2774
        %v2853 = vadd.f32 %v2127, %v2777
        %v2854 = vadd.f32 %v2128, %v2782
        %v2855 = vadd.f32 %v2129, %v2785
        %v2856 = vadd.f32 %v2130, %v2790
        %v2857 = vadd.f32 %v2131, %v2793
        %v2858 = vadd.f32 %v2132, %v2798
        %v2859 = vadd.f32 %v2133, %v2801
        %v2860 = vadd.f32 %v2134, %v2806
        %v2861 = vadd.f32 %v2135, %v2809
        %v2862 = vadd.f32 %v2136, %v2814
        %v2863 = vadd.f32 %v2137, %v2817
        %v2864 = vadd.f32 %v2138, %v2822
        %v2865 = vadd.f32 %v2139, %v2825
        %v2866 = vadd.f32 %v2140, %v2830
        %v2867 = vadd.f32 %v2141, %v2833
        %v2868 = vld [vmem:[%s1783] sm:$0xe]
        %v2869 = vld [vmem:[%s1783 + $0xc] sm:$0xe]
        %v2870 = vld [vmem:[%s1783 + $0x18] sm:$0xe]
        %v2871 = vld [vmem:[%s1783 + $0x24] sm:$0xe]
        %v2872 = vld [vmem:[%s1783 + $0x30] sm:$0xe]
        %v2873 = vld [vmem:[%s1783 + $0x3c] sm:$0xe]
        %v2874 = vld [vmem:[%s1783 + $0x48] sm:$0xe]
        %v2875 = vld [vmem:[%s1783 + $0x54] sm:$0xe]
        %v2876 = vld [vmem:[%s1783 + $0x60] sm:$0xe]
        %v2877 = vld [vmem:[%s1783 + $0x6c] sm:$0xe]
        %v2878 = vld [vmem:[%s1783 + $0x78] sm:$0xe]
        %v2879 = vld [vmem:[%s1783 + $0x84] sm:$0xe]
        %v2880 = vld [vmem:[%s1783 + $0x90] sm:$0xe]
        %v2881 = vld [vmem:[%s1783 + $0x9c] sm:$0xe]
        %v2882 = vld [vmem:[%s1783 + $0xa8] sm:$0xe]
        %v2883 = vld [vmem:[%s1783 + $0xb4] sm:$0xe]
        %v2932 = vrot.slane %v2868, 5
        %v2933 = vrot.slane %v2932, 4
        %v2934 = vrot.slane %v2143, 5
        %v2935 = vsel %vm1376, %v2933, %v2934
        %v2936 = vrot.slane %v2934, 4
        %v2937 = vrot.slane %v2144, 5
        %v2938 = vsel %vm1376, %v2936, %v2937
        %v2939 = vrot.slane %v2869, 5
        %v2940 = vrot.slane %v2939, 4
        %v2941 = vrot.slane %v2146, 5
        %v2942 = vsel %vm1376, %v2940, %v2941
        %v2943 = vrot.slane %v2941, 4
        %v2944 = vrot.slane %v2147, 5
        %v2945 = vsel %vm1376, %v2943, %v2944
        %v2946 = vrot.slane %v2870, 5
        %v2947 = vrot.slane %v2946, 4
        %v2948 = vrot.slane %v2149, 5
        %v2949 = vsel %vm1376, %v2947, %v2948
        %v2950 = vrot.slane %v2948, 4
        %v2951 = vrot.slane %v2150, 5
        %v2952 = vsel %vm1376, %v2950, %v2951
        %v2953 = vrot.slane %v2871, 5
        %v2954 = vrot.slane %v2953, 4
        %v2955 = vrot.slane %v2152, 5
        %v2956 = vsel %vm1376, %v2954, %v2955
        %v2957 = vrot.slane %v2955, 4
        %v2958 = vrot.slane %v2153, 5
        %v2959 = vsel %vm1376, %v2957, %v2958
        %v2960 = vrot.slane %v2872, 5
        %v2961 = vrot.slane %v2960, 4
        %v2962 = vrot.slane %v2155, 5
        %v2963 = vsel %vm1376, %v2961, %v2962
        %v2964 = vrot.slane %v2962, 4
        %v2965 = vrot.slane %v2156, 5
        %v2966 = vsel %vm1376, %v2964, %v2965
        %v2967 = vrot.slane %v2873, 5
        %v2968 = vrot.slane %v2967, 4
        %v2969 = vrot.slane %v2158, 5
        %v2970 = vsel %vm1376, %v2968, %v2969
        %v2971 = vrot.slane %v2969, 4
        %v2972 = vrot.slane %v2159, 5
        %v2973 = vsel %vm1376, %v2971, %v2972
        %v2974 = vrot.slane %v2874, 5
        %v2975 = vrot.slane %v2974, 4
        %v2976 = vrot.slane %v2161, 5
        %v2977 = vsel %vm1376, %v2975, %v2976
        %v2978 = vrot.slane %v2976, 4
        %v2979 = vrot.slane %v2162, 5
        %v2980 = vsel %vm1376, %v2978, %v2979
        %v2981 = vrot.slane %v2875, 5
        %v2982 = vrot.slane %v2981, 4
        %v2983 = vrot.slane %v2164, 5
        %v2984 = vsel %vm1376, %v2982, %v2983
        %v2985 = vrot.slane %v2983, 4
        %v2986 = vrot.slane %v2165, 5
        %v2987 = vsel %vm1376, %v2985, %v2986
        %v2988 = vrot.slane %v2876, 5
        %v2989 = vrot.slane %v2988, 4
        %v2990 = vrot.slane %v2167, 5
        %v2991 = vsel %vm1376, %v2989, %v2990
        %v2992 = vrot.slane %v2990, 4
        %v2993 = vrot.slane %v2168, 5
        %v2994 = vsel %vm1376, %v2992, %v2993
        %v2995 = vrot.slane %v2877, 5
        %v2996 = vrot.slane %v2995, 4
        %v2997 = vrot.slane %v2170, 5
        %v2998 = vsel %vm1376, %v2996, %v2997
        %v2999 = vrot.slane %v2997, 4
        %v3000 = vrot.slane %v2171, 5
        %v3001 = vsel %vm1376, %v2999, %v3000
        %v3002 = vrot.slane %v2878, 5
        %v3003 = vrot.slane %v3002, 4
        %v3004 = vrot.slane %v2173, 5
        %v3005 = vsel %vm1376, %v3003, %v3004
        %v3006 = vrot.slane %v3004, 4
        %v3007 = vrot.slane %v2174, 5
        %v3008 = vsel %vm1376, %v3006, %v3007
        %v3009 = vrot.slane %v2879, 5
        %v3010 = vrot.slane %v3009, 4
        %v3011 = vrot.slane %v2176, 5
        %v3012 = vsel %vm1376, %v3010, %v3011
        %v3013 = vrot.slane %v3011, 4
        %v3014 = vrot.slane %v2177, 5
        %v3015 = vsel %vm1376, %v3013, %v3014
        %v3016 = vrot.slane %v2880, 5
        %v3017 = vrot.slane %v3016, 4
        %v3018 = vrot.slane %v2179, 5
        %v3019 = vsel %vm1376, %v3017, %v3018
        %v3020 = vrot.slane %v3018, 4
        %v3021 = vrot.slane %v2180, 5
        %v3022 = vsel %vm1376, %v3020, %v3021
        %v3023 = vrot.slane %v2881, 5
        %v3024 = vrot.slane %v3023, 4
        %v3025 = vrot.slane %v2182, 5
        %v3026 = vsel %vm1376, %v3024, %v3025
        %v3027 = vrot.slane %v3025, 4
        %v3028 = vrot.slane %v2183, 5
        %v3029 = vsel %vm1376, %v3027, %v3028
        %v3030 = vrot.slane %v2882, 5
        %v3031 = vrot.slane %v3030, 4
        %v3032 = vrot.slane %v2185, 5
        %v3033 = vsel %vm1376, %v3031, %v3032
        %v3034 = vrot.slane %v3032, 4
        %v3035 = vrot.slane %v2186, 5
        %v3036 = vsel %vm1376, %v3034, %v3035
        %v3037 = vrot.slane %v2883, 5
        %v3038 = vrot.slane %v3037, 4
        %v3039 = vrot.slane %v2188, 5
        %v3040 = vsel %vm1376, %v3038, %v3039
        %v3041 = vrot.slane %v3039, 4
        %v3042 = vrot.slane %v2189, 5
        %v3043 = vsel %vm1376, %v3041, %v3042
        %s3044 = scalar_lea.vmem %s210, 10
        %v3045 = vld [vmem:[%s3044] sm:$0x3]
        %v3046 = vunpack.c.l.b16 %v2935
        %v3047 = vunpack.c.l.b16 %v2938
        %v3048 = vunpack.c.l.b16 %v2942
        %v3049 = vunpack.c.l.b16 %v2945
        %v3050 = vunpack.c.l.b16 %v2949
        %v3051 = vunpack.c.l.b16 %v2952
        %v3052 = vunpack.c.l.b16 %v2956
        %v3053 = vunpack.c.l.b16 %v2959
        %v3054 = vunpack.c.l.b16 %v2963
        %v3055 = vunpack.c.l.b16 %v2966
        %v3056 = vunpack.c.l.b16 %v2970
        %v3057 = vunpack.c.l.b16 %v2973
        %v3058 = vunpack.c.l.b16 %v2977
        %v3059 = vunpack.c.l.b16 %v2980
        %v3060 = vunpack.c.l.b16 %v2984
        %v3061 = vunpack.c.l.b16 %v2987
        %v3062 = vunpack.c.l.b16 %v2991
        %v3063 = vunpack.c.l.b16 %v2994
        %v3064 = vunpack.c.l.b16 %v2998
        %v3065 = vunpack.c.l.b16 %v3001
        %v3066 = vunpack.c.l.b16 %v3005
        %v3067 = vunpack.c.l.b16 %v3008
        %v3068 = vunpack.c.l.b16 %v3012
        %v3069 = vunpack.c.l.b16 %v3015
        %v3070 = vunpack.c.l.b16 %v3019
        %v3071 = vunpack.c.l.b16 %v3022
        %v3072 = vunpack.c.l.b16 %v3026
        %v3073 = vunpack.c.l.b16 %v3029
        %v3074 = vunpack.c.l.b16 %v3033
        %v3075 = vunpack.c.l.b16 %v3036
        %v3076 = vunpack.c.l.b16 %v3040
        %v3077 = vunpack.c.l.b16 %v3043
        %v3078 = vpack.c.b16 %v3047, %v3046
        %v3079 = vpack.c.b16 %v3049, %v3048
        %v3080 = vpack.c.b16 %v3051, %v3050
        %v3081 = vpack.c.b16 %v3053, %v3052
        %v3082 = vpack.c.b16 %v3055, %v3054
        %v3083 = vpack.c.b16 %v3057, %v3056
        %v3084 = vpack.c.b16 %v3059, %v3058
        %v3085 = vpack.c.b16 %v3061, %v3060
        %v3086 = vpack.c.b16 %v3063, %v3062
        %v3087 = vpack.c.b16 %v3065, %v3064
        %v3088 = vpack.c.b16 %v3067, %v3066
        %v3089 = vpack.c.b16 %v3069, %v3068
        %v3090 = vpack.c.b16 %v3071, %v3070
        %v3091 = vpack.c.b16 %v3073, %v3072
        %v3092 = vpack.c.b16 %v3075, %v3074
        %v3093 = vpack.c.b16 %v3077, %v3076
        %v3095 = vsel %vm335, %v3078, 0
        %v3098 = vsel %vm335, %v3079, 0
        %v3101 = vsel %vm335, %v3080, 0
        %v3104 = vsel %vm335, %v3081, 0
        %v3107 = vsel %vm335, %v3082, 0
        %v3110 = vsel %vm335, %v3083, 0
        %v3113 = vsel %vm335, %v3084, 0
        %v3116 = vsel %vm335, %v3085, 0
        %v3119 = vsel %vm335, %v3086, 0
        %v3122 = vsel %vm335, %v3087, 0
        %v3125 = vsel %vm335, %v3088, 0
        %v3128 = vsel %vm335, %v3089, 0
        %v3131 = vsel %vm335, %v3090, 0
        %v3134 = vsel %vm335, %v3091, 0
        %v3137 = vsel %vm335, %v3092, 0
        %v3140 = vsel %vm335, %v3093, 0
        %v3143 = vsel %vm384, %v3045, 0
        %3145 = vmatprep.subr.bf16.mxu0 0
        %3146 = vmatpush1.bf16.msra.mxu0 0
        %3147 = vmatprep.subr.bf16.mxu0 0
        %3148 = vmatpush1.bf16.msra.mxu0 0
        %3149 = vmatprep.subr.bf16.mxu0 0
        %3150 = vmatpush1.bf16.msra.mxu0 0
        %3151 = vmatprep.subr.bf16.mxu0 0
        %3152 = vmatpush1.bf16.msra.mxu0 0
        %3153 = vmatprep.subr.bf16.mxu0 0
        %3154 = vmatpush1.bf16.msra.mxu0 0
        %3155 = vmatprep.subr.bf16.mxu0 0
        %3156 = vmatpush1.bf16.msra.mxu0 0
        %3157 = vmatprep.subr.bf16.mxu0 0
        %3158 = vmatpush1.bf16.msra.mxu0 0
        %3159 = vmatprep.subr.bf16.mxu0 0
        %3160 = vmatpush1.bf16.msra.mxu0 %v3143
        %3161 = vmatprep.subr.bf16.mxu0 0
        %3162 = vmatpush2.bf16.msra.mxu0 0
        %3163 = vmatprep.subr.bf16.mxu0 0
        %3164 = vmatpush2.bf16.msra.mxu0 0
        %3165 = vmatprep.subr.bf16.mxu0 0
        %3166 = vmatpush2.bf16.msra.mxu0 0
        %3167 = vmatprep.subr.bf16.mxu0 0
        %3168 = vmatpush2.bf16.msra.mxu0 0
        %3169 = vmatprep.subr.bf16.mxu0 0
        %3170 = vmatpush2.bf16.msra.mxu0 0
        %3171 = vmatprep.subr.bf16.mxu0 0
        %3172 = vmatpush2.bf16.msra.mxu0 0
        %3173 = vmatprep.subr.bf16.mxu0 0
        %3174 = vmatpush2.bf16.msra.mxu0 0
        %3175 = vmatprep.subr.bf16.mxu0 0
        %3176 = vmatpush2.bf16.msra.mxu0 0
        %3177 = vmatprep.mubr.bf16.mxu0 0
        %3178 = vmatmul.mubr.bf16.gmra.mxu0 %v3095
        %v3179 = vpop.f32.mrf.mxu0
        %v3180 = vadd.f32 0.0, %v3179
        %v3181 = vpop.f32.mrf.mxu0
        %v3182 = vpop.f32.mrf.mxu0
        %v3183 = vadd.f32 0.0, %v3182
        %v3184 = vpop.f32.mrf.mxu0
        %3185 = vmatprep.mubr.bf16.mxu0 0
        %3186 = vmatmul.mubr.bf16.gmra.mxu0 %v3098
        %v3187 = vpop.f32.mrf.mxu0
        %v3188 = vadd.f32 0.0, %v3187
        %v3189 = vpop.f32.mrf.mxu0
        %v3190 = vpop.f32.mrf.mxu0
        %v3191 = vadd.f32 0.0, %v3190
        %v3192 = vpop.f32.mrf.mxu0
        %3193 = vmatprep.mubr.bf16.mxu0 0
        %3194 = vmatmul.mubr.bf16.gmra.mxu0 %v3101
        %v3195 = vpop.f32.mrf.mxu0
        %v3196 = vadd.f32 0.0, %v3195
        %v3197 = vpop.f32.mrf.mxu0
        %v3198 = vpop.f32.mrf.mxu0
        %v3199 = vadd.f32 0.0, %v3198
        %v3200 = vpop.f32.mrf.mxu0
        %3201 = vmatprep.mubr.bf16.mxu0 0
        %3202 = vmatmul.mubr.bf16.gmra.mxu0 %v3104
        %v3203 = vpop.f32.mrf.mxu0
        %v3204 = vadd.f32 0.0, %v3203
        %v3205 = vpop.f32.mrf.mxu0
        %v3206 = vpop.f32.mrf.mxu0
        %v3207 = vadd.f32 0.0, %v3206
        %v3208 = vpop.f32.mrf.mxu0
        %3209 = vmatprep.mubr.bf16.mxu0 0
        %3210 = vmatmul.mubr.bf16.gmra.mxu0 %v3107
        %v3211 = vpop.f32.mrf.mxu0
        %v3212 = vadd.f32 0.0, %v3211
        %v3213 = vpop.f32.mrf.mxu0
        %v3214 = vpop.f32.mrf.mxu0
        %v3215 = vadd.f32 0.0, %v3214
        %v3216 = vpop.f32.mrf.mxu0
        %3217 = vmatprep.mubr.bf16.mxu0 0
        %3218 = vmatmul.mubr.bf16.gmra.mxu0 %v3110
        %v3219 = vpop.f32.mrf.mxu0
        %v3220 = vadd.f32 0.0, %v3219
        %v3221 = vpop.f32.mrf.mxu0
        %v3222 = vpop.f32.mrf.mxu0
        %v3223 = vadd.f32 0.0, %v3222
        %v3224 = vpop.f32.mrf.mxu0
        %3225 = vmatprep.mubr.bf16.mxu0 0
        %3226 = vmatmul.mubr.bf16.gmra.mxu0 %v3113
        %v3227 = vpop.f32.mrf.mxu0
        %v3228 = vadd.f32 0.0, %v3227
        %v3229 = vpop.f32.mrf.mxu0
        %v3230 = vpop.f32.mrf.mxu0
        %v3231 = vadd.f32 0.0, %v3230
        %v3232 = vpop.f32.mrf.mxu0
        %3233 = vmatprep.mubr.bf16.mxu0 0
        %3234 = vmatmul.mubr.bf16.gmra.mxu0 %v3116
        %v3235 = vpop.f32.mrf.mxu0
        %v3236 = vadd.f32 0.0, %v3235
        %v3237 = vpop.f32.mrf.mxu0
        %v3238 = vpop.f32.mrf.mxu0
        %v3239 = vadd.f32 0.0, %v3238
        %v3240 = vpop.f32.mrf.mxu0
        %3241 = vmatprep.mubr.bf16.mxu0 0
        %3242 = vmatmul.mubr.bf16.gmra.mxu0 %v3119
        %v3243 = vpop.f32.mrf.mxu0
        %v3244 = vadd.f32 0.0, %v3243
        %v3245 = vpop.f32.mrf.mxu0
        %v3246 = vpop.f32.mrf.mxu0
        %v3247 = vadd.f32 0.0, %v3246
        %v3248 = vpop.f32.mrf.mxu0
        %3249 = vmatprep.mubr.bf16.mxu0 0
        %3250 = vmatmul.mubr.bf16.gmra.mxu0 %v3122
        %v3251 = vpop.f32.mrf.mxu0
        %v3252 = vadd.f32 0.0, %v3251
        %v3253 = vpop.f32.mrf.mxu0
        %v3254 = vpop.f32.mrf.mxu0
        %v3255 = vadd.f32 0.0, %v3254
        %v3256 = vpop.f32.mrf.mxu0
        %3257 = vmatprep.mubr.bf16.mxu0 0
        %3258 = vmatmul.mubr.bf16.gmra.mxu0 %v3125
        %v3259 = vpop.f32.mrf.mxu0
        %v3260 = vadd.f32 0.0, %v3259
        %v3261 = vpop.f32.mrf.mxu0
        %v3262 = vpop.f32.mrf.mxu0
        %v3263 = vadd.f32 0.0, %v3262
        %v3264 = vpop.f32.mrf.mxu0
        %3265 = vmatprep.mubr.bf16.mxu0 0
        %3266 = vmatmul.mubr.bf16.gmra.mxu0 %v3128
        %v3267 = vpop.f32.mrf.mxu0
        %v3268 = vadd.f32 0.0, %v3267
        %v3269 = vpop.f32.mrf.mxu0
        %v3270 = vpop.f32.mrf.mxu0
        %v3271 = vadd.f32 0.0, %v3270
        %v3272 = vpop.f32.mrf.mxu0
        %3273 = vmatprep.mubr.bf16.mxu0 0
        %3274 = vmatmul.mubr.bf16.gmra.mxu0 %v3131
        %v3275 = vpop.f32.mrf.mxu0
        %v3276 = vadd.f32 0.0, %v3275
        %v3277 = vpop.f32.mrf.mxu0
        %v3278 = vpop.f32.mrf.mxu0
        %v3279 = vadd.f32 0.0, %v3278
        %v3280 = vpop.f32.mrf.mxu0
        %3281 = vmatprep.mubr.bf16.mxu0 0
        %3282 = vmatmul.mubr.bf16.gmra.mxu0 %v3134
        %v3283 = vpop.f32.mrf.mxu0
        %v3284 = vadd.f32 0.0, %v3283
        %v3285 = vpop.f32.mrf.mxu0
        %v3286 = vpop.f32.mrf.mxu0
        %v3287 = vadd.f32 0.0, %v3286
        %v3288 = vpop.f32.mrf.mxu0
        %3289 = vmatprep.mubr.bf16.mxu0 0
        %3290 = vmatmul.mubr.bf16.gmra.mxu0 %v3137
        %v3291 = vpop.f32.mrf.mxu0
        %v3292 = vadd.f32 0.0, %v3291
        %v3293 = vpop.f32.mrf.mxu0
        %v3294 = vpop.f32.mrf.mxu0
        %v3295 = vadd.f32 0.0, %v3294
        %v3296 = vpop.f32.mrf.mxu0
        %3297 = vmatprep.mubr.bf16.mxu0 0
        %3298 = vmatmul.mubr.bf16.gmra.mxu0 %v3140
        %v3299 = vpop.f32.mrf.mxu0
        %v3300 = vadd.f32 0.0, %v3299
        %v3301 = vpop.f32.mrf.mxu0
        %v3302 = vpop.f32.mrf.mxu0
        %v3303 = vadd.f32 0.0, %v3302
        %v3304 = vpop.f32.mrf.mxu0
        %3305 = vdwg.mxu0
        %v3306 = vadd.f32 %v2836, %v3180
        %v3307 = vadd.f32 %v2837, %v3183
        %v3308 = vadd.f32 %v2838, %v3188
        %v3309 = vadd.f32 %v2839, %v3191
        %v3310 = vadd.f32 %v2840, %v3196
        %v3311 = vadd.f32 %v2841, %v3199
        %v3312 = vadd.f32 %v2842, %v3204
        %v3313 = vadd.f32 %v2843, %v3207
        %v3314 = vadd.f32 %v2844, %v3212
        %v3315 = vadd.f32 %v2845, %v3215
        %v3316 = vadd.f32 %v2846, %v3220
        %v3317 = vadd.f32 %v2847, %v3223
        %v3318 = vadd.f32 %v2848, %v3228
        %v3319 = vadd.f32 %v2849, %v3231
        %v3320 = vadd.f32 %v2850, %v3236
        %v3321 = vadd.f32 %v2851, %v3239
        %v3322 = vadd.f32 %v2852, %v3244
        %v3323 = vadd.f32 %v2853, %v3247
        %v3324 = vadd.f32 %v2854, %v3252
        %v3325 = vadd.f32 %v2855, %v3255
        %v3326 = vadd.f32 %v2856, %v3260
        %v3327 = vadd.f32 %v2857, %v3263
        %v3328 = vadd.f32 %v2858, %v3268
        %v3329 = vadd.f32 %v2859, %v3271
        %v3330 = vadd.f32 %v2860, %v3276
        %v3331 = vadd.f32 %v2861, %v3279
        %v3332 = vadd.f32 %v2862, %v3284
        %v3333 = vadd.f32 %v2863, %v3287
        %v3334 = vadd.f32 %v2864, %v3292
        %v3335 = vadd.f32 %v2865, %v3295
        %v3336 = vadd.f32 %v2866, %v3300
        %v3337 = vadd.f32 %v2867, %v3303
        %s3338 = scalar_lea.vmem %s206, 24
        %v3339 = vld [vmem:[%s3338] sm:$0xf]
        %v3340 = vld [vmem:[%s3338 + $0x4] sm:$0xf]
        %v3341 = vld [vmem:[%s3338 + $0xc] sm:$0xf]
        %v3342 = vld [vmem:[%s3338 + $0x10] sm:$0xf]
        %v3343 = vld [vmem:[%s3338 + $0x18] sm:$0xf]
        %v3344 = vld [vmem:[%s3338 + $0x1c] sm:$0xf]
        %v3345 = vld [vmem:[%s3338 + $0x24] sm:$0xf]
        %v3346 = vld [vmem:[%s3338 + $0x28] sm:$0xf]
        %v3347 = vld [vmem:[%s3338 + $0x30] sm:$0xf]
        %v3348 = vld [vmem:[%s3338 + $0x34] sm:$0xf]
        %v3349 = vld [vmem:[%s3338 + $0x3c] sm:$0xf]
        %v3350 = vld [vmem:[%s3338 + $0x40] sm:$0xf]
        %v3351 = vld [vmem:[%s3338 + $0x48] sm:$0xf]
        %v3352 = vld [vmem:[%s3338 + $0x4c] sm:$0xf]
        %v3353 = vld [vmem:[%s3338 + $0x54] sm:$0xf]
        %v3354 = vld [vmem:[%s3338 + $0x58] sm:$0xf]
        %v3355 = vld [vmem:[%s3338 + $0x60] sm:$0xf]
        %v3356 = vld [vmem:[%s3338 + $0x64] sm:$0xf]
        %v3357 = vld [vmem:[%s3338 + $0x6c] sm:$0xf]
        %v3358 = vld [vmem:[%s3338 + $0x70] sm:$0xf]
        %v3359 = vld [vmem:[%s3338 + $0x78] sm:$0xf]
        %v3360 = vld [vmem:[%s3338 + $0x7c] sm:$0xf]
        %v3361 = vld [vmem:[%s3338 + $0x84] sm:$0xf]
        %v3362 = vld [vmem:[%s3338 + $0x88] sm:$0xf]
        %v3363 = vld [vmem:[%s3338 + $0x90] sm:$0xf]
        %v3364 = vld [vmem:[%s3338 + $0x94] sm:$0xf]
        %v3365 = vld [vmem:[%s3338 + $0x9c] sm:$0xf]
        %v3366 = vld [vmem:[%s3338 + $0xa0] sm:$0xf]
        %v3367 = vld [vmem:[%s3338 + $0xa8] sm:$0xf]
        %v3368 = vld [vmem:[%s3338 + $0xac] sm:$0xf]
        %v3369 = vld [vmem:[%s3338 + $0xb4] sm:$0xf]
        %v3370 = vld [vmem:[%s3338 + $0xb8] sm:$0xf]
        %s3371 = scalar_lea.vmem %s210, 12
        %v3372 = vld [vmem:[%s3371] sm:$0x3]
        %v3405 = vunpack.c.l.b16 %v3339
        %v3406 = vunpack.c.l.b16 %v3340
        %v3407 = vunpack.c.l.b16 %v3341
        %v3408 = vunpack.c.l.b16 %v3342
        %v3409 = vunpack.c.l.b16 %v3343
        %v3410 = vunpack.c.l.b16 %v3344
        %v3411 = vunpack.c.l.b16 %v3345
        %v3412 = vunpack.c.l.b16 %v3346
        %v3413 = vunpack.c.l.b16 %v3347
        %v3414 = vunpack.c.l.b16 %v3348
        %v3415 = vunpack.c.l.b16 %v3349
        %v3416 = vunpack.c.l.b16 %v3350
        %v3417 = vunpack.c.l.b16 %v3351
        %v3418 = vunpack.c.l.b16 %v3352
        %v3419 = vunpack.c.l.b16 %v3353
        %v3420 = vunpack.c.l.b16 %v3354
        %v3421 = vunpack.c.l.b16 %v3355
        %v3422 = vunpack.c.l.b16 %v3356
        %v3423 = vunpack.c.l.b16 %v3357
        %v3424 = vunpack.c.l.b16 %v3358
        %v3425 = vunpack.c.l.b16 %v3359
        %v3426 = vunpack.c.l.b16 %v3360
        %v3427 = vunpack.c.l.b16 %v3361
        %v3428 = vunpack.c.l.b16 %v3362
        %v3429 = vunpack.c.l.b16 %v3363
        %v3430 = vunpack.c.l.b16 %v3364
        %v3431 = vunpack.c.l.b16 %v3365
        %v3432 = vunpack.c.l.b16 %v3366
        %v3433 = vunpack.c.l.b16 %v3367
        %v3434 = vunpack.c.l.b16 %v3368
        %v3435 = vunpack.c.l.b16 %v3369
        %v3436 = vunpack.c.l.b16 %v3370
        %v3437 = vpack.c.b16 %v3406, %v3405
        %v3438 = vpack.c.b16 %v3408, %v3407
        %v3439 = vpack.c.b16 %v3410, %v3409
        %v3440 = vpack.c.b16 %v3412, %v3411
        %v3441 = vpack.c.b16 %v3414, %v3413
        %v3442 = vpack.c.b16 %v3416, %v3415
        %v3443 = vpack.c.b16 %v3418, %v3417
        %v3444 = vpack.c.b16 %v3420, %v3419
        %v3445 = vpack.c.b16 %v3422, %v3421
        %v3446 = vpack.c.b16 %v3424, %v3423
        %v3447 = vpack.c.b16 %v3426, %v3425
        %v3448 = vpack.c.b16 %v3428, %v3427
        %v3449 = vpack.c.b16 %v3430, %v3429
        %v3450 = vpack.c.b16 %v3432, %v3431
        %v3451 = vpack.c.b16 %v3434, %v3433
        %v3452 = vpack.c.b16 %v3436, %v3435
        %v3454 = vsel %vm335, %v3437, 0
        %v3457 = vsel %vm335, %v3438, 0
        %v3460 = vsel %vm335, %v3439, 0
        %v3463 = vsel %vm335, %v3440, 0
        %v3466 = vsel %vm335, %v3441, 0
        %v3469 = vsel %vm335, %v3442, 0
        %v3472 = vsel %vm335, %v3443, 0
        %v3475 = vsel %vm335, %v3444, 0
        %v3478 = vsel %vm335, %v3445, 0
        %v3481 = vsel %vm335, %v3446, 0
        %v3484 = vsel %vm335, %v3447, 0
        %v3487 = vsel %vm335, %v3448, 0
        %v3490 = vsel %vm335, %v3449, 0
        %v3493 = vsel %vm335, %v3450, 0
        %v3496 = vsel %vm335, %v3451, 0
        %v3499 = vsel %vm335, %v3452, 0
        %v3502 = vsel %vm384, %v3372, 0
        %3504 = vmatprep.subr.bf16.mxu0 0
        %3505 = vmatpush1.bf16.msra.mxu0 0
        %3506 = vmatprep.subr.bf16.mxu0 0
        %3507 = vmatpush1.bf16.msra.mxu0 0
        %3508 = vmatprep.subr.bf16.mxu0 0
        %3509 = vmatpush1.bf16.msra.mxu0 0
        %3510 = vmatprep.subr.bf16.mxu0 0
        %3511 = vmatpush1.bf16.msra.mxu0 0
        %3512 = vmatprep.subr.bf16.mxu0 0
        %3513 = vmatpush1.bf16.msra.mxu0 0
        %3514 = vmatprep.subr.bf16.mxu0 0
        %3515 = vmatpush1.bf16.msra.mxu0 0
        %3516 = vmatprep.subr.bf16.mxu0 0
        %3517 = vmatpush1.bf16.msra.mxu0 0
        %3518 = vmatprep.subr.bf16.mxu0 0
        %3519 = vmatpush1.bf16.msra.mxu0 %v3502
        %3520 = vmatprep.subr.bf16.mxu0 0
        %3521 = vmatpush2.bf16.msra.mxu0 0
        %3522 = vmatprep.subr.bf16.mxu0 0
        %3523 = vmatpush2.bf16.msra.mxu0 0
        %3524 = vmatprep.subr.bf16.mxu0 0
        %3525 = vmatpush2.bf16.msra.mxu0 0
        %3526 = vmatprep.subr.bf16.mxu0 0
        %3527 = vmatpush2.bf16.msra.mxu0 0
        %3528 = vmatprep.subr.bf16.mxu0 0
        %3529 = vmatpush2.bf16.msra.mxu0 0
        %3530 = vmatprep.subr.bf16.mxu0 0
        %3531 = vmatpush2.bf16.msra.mxu0 0
        %3532 = vmatprep.subr.bf16.mxu0 0
        %3533 = vmatpush2.bf16.msra.mxu0 0
        %3534 = vmatprep.subr.bf16.mxu0 0
        %3535 = vmatpush2.bf16.msra.mxu0 0
        %3536 = vmatprep.mubr.bf16.mxu0 0
        %3537 = vmatmul.mubr.bf16.gmra.mxu0 %v3454
        %v3538 = vpop.f32.mrf.mxu0
        %v3539 = vadd.f32 0.0, %v3538
        %v3540 = vpop.f32.mrf.mxu0
        %v3541 = vpop.f32.mrf.mxu0
        %v3542 = vadd.f32 0.0, %v3541
        %v3543 = vpop.f32.mrf.mxu0
        %3544 = vmatprep.mubr.bf16.mxu0 0
        %3545 = vmatmul.mubr.bf16.gmra.mxu0 %v3457
        %v3546 = vpop.f32.mrf.mxu0
        %v3547 = vadd.f32 0.0, %v3546
        %v3548 = vpop.f32.mrf.mxu0
        %v3549 = vpop.f32.mrf.mxu0
        %v3550 = vadd.f32 0.0, %v3549
        %v3551 = vpop.f32.mrf.mxu0
        %3552 = vmatprep.mubr.bf16.mxu0 0
        %3553 = vmatmul.mubr.bf16.gmra.mxu0 %v3460
        %v3554 = vpop.f32.mrf.mxu0
        %v3555 = vadd.f32 0.0, %v3554
        %v3556 = vpop.f32.mrf.mxu0
        %v3557 = vpop.f32.mrf.mxu0
        %v3558 = vadd.f32 0.0, %v3557
        %v3559 = vpop.f32.mrf.mxu0
        %3560 = vmatprep.mubr.bf16.mxu0 0
        %3561 = vmatmul.mubr.bf16.gmra.mxu0 %v3463
        %v3562 = vpop.f32.mrf.mxu0
        %v3563 = vadd.f32 0.0, %v3562
        %v3564 = vpop.f32.mrf.mxu0
        %v3565 = vpop.f32.mrf.mxu0
        %v3566 = vadd.f32 0.0, %v3565
        %v3567 = vpop.f32.mrf.mxu0
        %3568 = vmatprep.mubr.bf16.mxu0 0
        %3569 = vmatmul.mubr.bf16.gmra.mxu0 %v3466
        %v3570 = vpop.f32.mrf.mxu0
        %v3571 = vadd.f32 0.0, %v3570
        %v3572 = vpop.f32.mrf.mxu0
        %v3573 = vpop.f32.mrf.mxu0
        %v3574 = vadd.f32 0.0, %v3573
        %v3575 = vpop.f32.mrf.mxu0
        %3576 = vmatprep.mubr.bf16.mxu0 0
        %3577 = vmatmul.mubr.bf16.gmra.mxu0 %v3469
        %v3578 = vpop.f32.mrf.mxu0
        %v3579 = vadd.f32 0.0, %v3578
        %v3580 = vpop.f32.mrf.mxu0
        %v3581 = vpop.f32.mrf.mxu0
        %v3582 = vadd.f32 0.0, %v3581
        %v3583 = vpop.f32.mrf.mxu0
        %3584 = vmatprep.mubr.bf16.mxu0 0
        %3585 = vmatmul.mubr.bf16.gmra.mxu0 %v3472
        %v3586 = vpop.f32.mrf.mxu0
        %v3587 = vadd.f32 0.0, %v3586
        %v3588 = vpop.f32.mrf.mxu0
        %v3589 = vpop.f32.mrf.mxu0
        %v3590 = vadd.f32 0.0, %v3589
        %v3591 = vpop.f32.mrf.mxu0
        %3592 = vmatprep.mubr.bf16.mxu0 0
        %3593 = vmatmul.mubr.bf16.gmra.mxu0 %v3475
        %v3594 = vpop.f32.mrf.mxu0
        %v3595 = vadd.f32 0.0, %v3594
        %v3596 = vpop.f32.mrf.mxu0
        %v3597 = vpop.f32.mrf.mxu0
        %v3598 = vadd.f32 0.0, %v3597
        %v3599 = vpop.f32.mrf.mxu0
        %3600 = vmatprep.mubr.bf16.mxu0 0
        %3601 = vmatmul.mubr.bf16.gmra.mxu0 %v3478
        %v3602 = vpop.f32.mrf.mxu0
        %v3603 = vadd.f32 0.0, %v3602
        %v3604 = vpop.f32.mrf.mxu0
        %v3605 = vpop.f32.mrf.mxu0
        %v3606 = vadd.f32 0.0, %v3605
        %v3607 = vpop.f32.mrf.mxu0
        %3608 = vmatprep.mubr.bf16.mxu0 0
        %3609 = vmatmul.mubr.bf16.gmra.mxu0 %v3481
        %v3610 = vpop.f32.mrf.mxu0
        %v3611 = vadd.f32 0.0, %v3610
        %v3612 = vpop.f32.mrf.mxu0
        %v3613 = vpop.f32.mrf.mxu0
        %v3614 = vadd.f32 0.0, %v3613
        %v3615 = vpop.f32.mrf.mxu0
        %3616 = vmatprep.mubr.bf16.mxu0 0
        %3617 = vmatmul.mubr.bf16.gmra.mxu0 %v3484
        %v3618 = vpop.f32.mrf.mxu0
        %v3619 = vadd.f32 0.0, %v3618
        %v3620 = vpop.f32.mrf.mxu0
        %v3621 = vpop.f32.mrf.mxu0
        %v3622 = vadd.f32 0.0, %v3621
        %v3623 = vpop.f32.mrf.mxu0
        %3624 = vmatprep.mubr.bf16.mxu0 0
        %3625 = vmatmul.mubr.bf16.gmra.mxu0 %v3487
        %v3626 = vpop.f32.mrf.mxu0
        %v3627 = vadd.f32 0.0, %v3626
        %v3628 = vpop.f32.mrf.mxu0
        %v3629 = vpop.f32.mrf.mxu0
        %v3630 = vadd.f32 0.0, %v3629
        %v3631 = vpop.f32.mrf.mxu0
        %3632 = vmatprep.mubr.bf16.mxu0 0
        %3633 = vmatmul.mubr.bf16.gmra.mxu0 %v3490
        %v3634 = vpop.f32.mrf.mxu0
        %v3635 = vadd.f32 0.0, %v3634
        %v3636 = vpop.f32.mrf.mxu0
        %v3637 = vpop.f32.mrf.mxu0
        %v3638 = vadd.f32 0.0, %v3637
        %v3639 = vpop.f32.mrf.mxu0
        %3640 = vmatprep.mubr.bf16.mxu0 0
        %3641 = vmatmul.mubr.bf16.gmra.mxu0 %v3493
        %v3642 = vpop.f32.mrf.mxu0
        %v3643 = vadd.f32 0.0, %v3642
        %v3644 = vpop.f32.mrf.mxu0
        %v3645 = vpop.f32.mrf.mxu0
        %v3646 = vadd.f32 0.0, %v3645
        %v3647 = vpop.f32.mrf.mxu0
        %3648 = vmatprep.mubr.bf16.mxu0 0
        %3649 = vmatmul.mubr.bf16.gmra.mxu0 %v3496
        %v3650 = vpop.f32.mrf.mxu0
        %v3651 = vadd.f32 0.0, %v3650
        %v3652 = vpop.f32.mrf.mxu0
        %v3653 = vpop.f32.mrf.mxu0
        %v3654 = vadd.f32 0.0, %v3653
        %v3655 = vpop.f32.mrf.mxu0
        %3656 = vmatprep.mubr.bf16.mxu0 0
        %3657 = vmatmul.mubr.bf16.gmra.mxu0 %v3499
        %v3658 = vpop.f32.mrf.mxu0
        %v3659 = vadd.f32 0.0, %v3658
        %v3660 = vpop.f32.mrf.mxu0
        %v3661 = vpop.f32.mrf.mxu0
        %v3662 = vadd.f32 0.0, %v3661
        %v3663 = vpop.f32.mrf.mxu0
        %3664 = vdwg.mxu0
        %v3665 = vadd.f32 %v3306, %v3539
        %v3666 = vadd.f32 %v3307, %v3542
        %v3667 = vadd.f32 %v3308, %v3547
        %v3668 = vadd.f32 %v3309, %v3550
        %v3669 = vadd.f32 %v3310, %v3555
        %v3670 = vadd.f32 %v3311, %v3558
        %v3671 = vadd.f32 %v3312, %v3563
        %v3672 = vadd.f32 %v3313, %v3566
        %v3673 = vadd.f32 %v3314, %v3571
        %v3674 = vadd.f32 %v3315, %v3574
        %v3675 = vadd.f32 %v3316, %v3579
        %v3676 = vadd.f32 %v3317, %v3582
        %v3677 = vadd.f32 %v3318, %v3587
        %v3678 = vadd.f32 %v3319, %v3590
        %v3679 = vadd.f32 %v3320, %v3595
        %v3680 = vadd.f32 %v3321, %v3598
        %v3681 = vadd.f32 %v3322, %v3603
        %v3682 = vadd.f32 %v3323, %v3606
        %v3683 = vadd.f32 %v3324, %v3611
        %v3684 = vadd.f32 %v3325, %v3614
        %v3685 = vadd.f32 %v3326, %v3619
        %v3686 = vadd.f32 %v3327, %v3622
        %v3687 = vadd.f32 %v3328, %v3627
        %v3688 = vadd.f32 %v3329, %v3630
        %v3689 = vadd.f32 %v3330, %v3635
        %v3690 = vadd.f32 %v3331, %v3638
        %v3691 = vadd.f32 %v3332, %v3643
        %v3692 = vadd.f32 %v3333, %v3646
        %v3693 = vadd.f32 %v3334, %v3651
        %v3694 = vadd.f32 %v3335, %v3654
        %v3695 = vadd.f32 %v3336, %v3659
        %v3696 = vadd.f32 %v3337, %v3662
        %v3697 = vld [vmem:[%s3338] sm:$0xf]
        %v3698 = vld [vmem:[%s3338 + $0x4] sm:$0xf]
        %v3699 = vld [vmem:[%s3338 + $0x8] sm:$0x1]
        %v3700 = vld [vmem:[%s3338 + $0xc] sm:$0xf]
        %v3701 = vld [vmem:[%s3338 + $0x10] sm:$0xf]
        %v3702 = vld [vmem:[%s3338 + $0x14] sm:$0x1]
        %v3703 = vld [vmem:[%s3338 + $0x18] sm:$0xf]
        %v3704 = vld [vmem:[%s3338 + $0x1c] sm:$0xf]
        %v3705 = vld [vmem:[%s3338 + $0x20] sm:$0x1]
        %v3706 = vld [vmem:[%s3338 + $0x24] sm:$0xf]
        %v3707 = vld [vmem:[%s3338 + $0x28] sm:$0xf]
        %v3708 = vld [vmem:[%s3338 + $0x2c] sm:$0x1]
        %v3709 = vld [vmem:[%s3338 + $0x30] sm:$0xf]
        %v3710 = vld [vmem:[%s3338 + $0x34] sm:$0xf]
        %v3711 = vld [vmem:[%s3338 + $0x38] sm:$0x1]
        %v3712 = vld [vmem:[%s3338 + $0x3c] sm:$0xf]
        %v3713 = vld [vmem:[%s3338 + $0x40] sm:$0xf]
        %v3714 = vld [vmem:[%s3338 + $0x44] sm:$0x1]
        %v3715 = vld [vmem:[%s3338 + $0x48] sm:$0xf]
        %v3716 = vld [vmem:[%s3338 + $0x4c] sm:$0xf]
        %v3717 = vld [vmem:[%s3338 + $0x50] sm:$0x1]
        %v3718 = vld [vmem:[%s3338 + $0x54] sm:$0xf]
        %v3719 = vld [vmem:[%s3338 + $0x58] sm:$0xf]
        %v3720 = vld [vmem:[%s3338 + $0x5c] sm:$0x1]
        %v3721 = vld [vmem:[%s3338 + $0x60] sm:$0xf]
        %v3722 = vld [vmem:[%s3338 + $0x64] sm:$0xf]
        %v3723 = vld [vmem:[%s3338 + $0x68] sm:$0x1]
        %v3724 = vld [vmem:[%s3338 + $0x6c] sm:$0xf]
        %v3725 = vld [vmem:[%s3338 + $0x70] sm:$0xf]
        %v3726 = vld [vmem:[%s3338 + $0x74] sm:$0x1]
        %v3727 = vld [vmem:[%s3338 + $0x78] sm:$0xf]
        %v3728 = vld [vmem:[%s3338 + $0x7c] sm:$0xf]
        %v3729 = vld [vmem:[%s3338 + $0x80] sm:$0x1]
        %v3730 = vld [vmem:[%s3338 + $0x84] sm:$0xf]
        %v3731 = vld [vmem:[%s3338 + $0x88] sm:$0xf]
        %v3732 = vld [vmem:[%s3338 + $0x8c] sm:$0x1]
        %v3733 = vld [vmem:[%s3338 + $0x90] sm:$0xf]
        %v3734 = vld [vmem:[%s3338 + $0x94] sm:$0xf]
        %v3735 = vld [vmem:[%s3338 + $0x98] sm:$0x1]
        %v3736 = vld [vmem:[%s3338 + $0x9c] sm:$0xf]
        %v3737 = vld [vmem:[%s3338 + $0xa0] sm:$0xf]
        %v3738 = vld [vmem:[%s3338 + $0xa4] sm:$0x1]
        %v3739 = vld [vmem:[%s3338 + $0xa8] sm:$0xf]
        %v3740 = vld [vmem:[%s3338 + $0xac] sm:$0xf]
        %v3741 = vld [vmem:[%s3338 + $0xb0] sm:$0x1]
        %v3742 = vld [vmem:[%s3338 + $0xb4] sm:$0xf]
        %v3743 = vld [vmem:[%s3338 + $0xb8] sm:$0xf]
        %v3744 = vld [vmem:[%s3338 + $0xbc] sm:$0x1]
        %v3746 = vshrl.u32 %v3697, 16
        %v3748 = vrot.slane %v3746, 4
        %v3749 = vshll.u32 %v3697, 16
        %v3751 = vrot.slane %v3749, 5
        %v3752 = vor.u32 %v3748, %v3751
        %v3753 = vrot.slane %v3752, 4
        %v3755 = vshll.u32 %v3698, 16
        %v3757 = vrot.slane %v3755, 5
        %v3758 = vsel %vm631, %v3753, %v3757
        %v3759 = vshrl.u32 %v3698, 16
        %v3761 = vrot.slane %v3759, 4
        %v3762 = vor.u32 %v3761, %v3757
        %v3763 = vrot.slane %v3762, 4
        %v3765 = vshll.u32 %v3699, 16
        %v3767 = vrot.slane %v3765, 5
        %v3768 = vsel %vm631, %v3763, %v3767
        %v3770 = vshrl.u32 %v3700, 16
        %v3772 = vrot.slane %v3770, 4
        %v3773 = vshll.u32 %v3700, 16
        %v3775 = vrot.slane %v3773, 5
        %v3776 = vor.u32 %v3772, %v3775
        %v3777 = vrot.slane %v3776, 4
        %v3779 = vshll.u32 %v3701, 16
        %v3781 = vrot.slane %v3779, 5
        %v3782 = vsel %vm631, %v3777, %v3781
        %v3783 = vshrl.u32 %v3701, 16
        %v3785 = vrot.slane %v3783, 4
        %v3786 = vor.u32 %v3785, %v3781
        %v3787 = vrot.slane %v3786, 4
        %v3789 = vshll.u32 %v3702, 16
        %v3791 = vrot.slane %v3789, 5
        %v3792 = vsel %vm631, %v3787, %v3791
        %v3794 = vshrl.u32 %v3703, 16
        %v3796 = vrot.slane %v3794, 4
        %v3797 = vshll.u32 %v3703, 16
        %v3799 = vrot.slane %v3797, 5
        %v3800 = vor.u32 %v3796, %v3799
        %v3801 = vrot.slane %v3800, 4
        %v3803 = vshll.u32 %v3704, 16
        %v3805 = vrot.slane %v3803, 5
        %v3806 = vsel %vm631, %v3801, %v3805
        %v3807 = vshrl.u32 %v3704, 16
        %v3809 = vrot.slane %v3807, 4
        %v3810 = vor.u32 %v3809, %v3805
        %v3811 = vrot.slane %v3810, 4
        %v3813 = vshll.u32 %v3705, 16
        %v3815 = vrot.slane %v3813, 5
        %v3816 = vsel %vm631, %v3811, %v3815
        %v3818 = vshrl.u32 %v3706, 16
        %v3820 = vrot.slane %v3818, 4
        %v3821 = vshll.u32 %v3706, 16
        %v3823 = vrot.slane %v3821, 5
        %v3824 = vor.u32 %v3820, %v3823
        %v3825 = vrot.slane %v3824, 4
        %v3827 = vshll.u32 %v3707, 16
        %v3829 = vrot.slane %v3827, 5
        %v3830 = vsel %vm631, %v3825, %v3829
        %v3831 = vshrl.u32 %v3707, 16
        %v3833 = vrot.slane %v3831, 4
        %v3834 = vor.u32 %v3833, %v3829
        %v3835 = vrot.slane %v3834, 4
        %v3837 = vshll.u32 %v3708, 16
        %v3839 = vrot.slane %v3837, 5
        %v3840 = vsel %vm631, %v3835, %v3839
        %v3842 = vshrl.u32 %v3709, 16
        %v3844 = vrot.slane %v3842, 4
        %v3845 = vshll.u32 %v3709, 16
        %v3847 = vrot.slane %v3845, 5
        %v3848 = vor.u32 %v3844, %v3847
        %v3849 = vrot.slane %v3848, 4
        %v3851 = vshll.u32 %v3710, 16
        %v3853 = vrot.slane %v3851, 5
        %v3854 = vsel %vm631, %v3849, %v3853
        %v3855 = vshrl.u32 %v3710, 16
        %v3857 = vrot.slane %v3855, 4
        %v3858 = vor.u32 %v3857, %v3853
        %v3859 = vrot.slane %v3858, 4
        %v3861 = vshll.u32 %v3711, 16
        %v3863 = vrot.slane %v3861, 5
        %v3864 = vsel %vm631, %v3859, %v3863
        %v3866 = vshrl.u32 %v3712, 16
        %v3868 = vrot.slane %v3866, 4
        %v3869 = vshll.u32 %v3712, 16
        %v3871 = vrot.slane %v3869, 5
        %v3872 = vor.u32 %v3868, %v3871
        %v3873 = vrot.slane %v3872, 4
        %v3875 = vshll.u32 %v3713, 16
        %v3877 = vrot.slane %v3875, 5
        %v3878 = vsel %vm631, %v3873, %v3877
        %v3879 = vshrl.u32 %v3713, 16
        %v3881 = vrot.slane %v3879, 4
        %v3882 = vor.u32 %v3881, %v3877
        %v3883 = vrot.slane %v3882, 4
        %v3885 = vshll.u32 %v3714, 16
        %v3887 = vrot.slane %v3885, 5
        %v3888 = vsel %vm631, %v3883, %v3887
        %v3890 = vshrl.u32 %v3715, 16
        %v3892 = vrot.slane %v3890, 4
        %v3893 = vshll.u32 %v3715, 16
        %v3895 = vrot.slane %v3893, 5
        %v3896 = vor.u32 %v3892, %v3895
        %v3897 = vrot.slane %v3896, 4
        %v3899 = vshll.u32 %v3716, 16
        %v3901 = vrot.slane %v3899, 5
        %v3902 = vsel %vm631, %v3897, %v3901
        %v3903 = vshrl.u32 %v3716, 16
        %v3905 = vrot.slane %v3903, 4
        %v3906 = vor.u32 %v3905, %v3901
        %v3907 = vrot.slane %v3906, 4
        %v3909 = vshll.u32 %v3717, 16
        %v3911 = vrot.slane %v3909, 5
        %v3912 = vsel %vm631, %v3907, %v3911
        %v3914 = vshrl.u32 %v3718, 16
        %v3916 = vrot.slane %v3914, 4
        %v3917 = vshll.u32 %v3718, 16
        %v3919 = vrot.slane %v3917, 5
        %v3920 = vor.u32 %v3916, %v3919
        %v3921 = vrot.slane %v3920, 4
        %v3923 = vshll.u32 %v3719, 16
        %v3925 = vrot.slane %v3923, 5
        %v3926 = vsel %vm631, %v3921, %v3925
        %v3927 = vshrl.u32 %v3719, 16
        %v3929 = vrot.slane %v3927, 4
        %v3930 = vor.u32 %v3929, %v3925
        %v3931 = vrot.slane %v3930, 4
        %v3933 = vshll.u32 %v3720, 16
        %v3935 = vrot.slane %v3933, 5
        %v3936 = vsel %vm631, %v3931, %v3935
        %v3938 = vshrl.u32 %v3721, 16
        %v3940 = vrot.slane %v3938, 4
        %v3941 = vshll.u32 %v3721, 16
        %v3943 = vrot.slane %v3941, 5
        %v3944 = vor.u32 %v3940, %v3943
        %v3945 = vrot.slane %v3944, 4
        %v3947 = vshll.u32 %v3722, 16
        %v3949 = vrot.slane %v3947, 5
        %v3950 = vsel %vm631, %v3945, %v3949
        %v3951 = vshrl.u32 %v3722, 16
        %v3953 = vrot.slane %v3951, 4
        %v3954 = vor.u32 %v3953, %v3949
        %v3955 = vrot.slane %v3954, 4
        %v3957 = vshll.u32 %v3723, 16
        %v3959 = vrot.slane %v3957, 5
        %v3960 = vsel %vm631, %v3955, %v3959
        %v3962 = vshrl.u32 %v3724, 16
        %v3964 = vrot.slane %v3962, 4
        %v3965 = vshll.u32 %v3724, 16
        %v3967 = vrot.slane %v3965, 5
        %v3968 = vor.u32 %v3964, %v3967
        %v3969 = vrot.slane %v3968, 4
        %v3971 = vshll.u32 %v3725, 16
        %v3973 = vrot.slane %v3971, 5
        %v3974 = vsel %vm631, %v3969, %v3973
        %v3975 = vshrl.u32 %v3725, 16
        %v3977 = vrot.slane %v3975, 4
        %v3978 = vor.u32 %v3977, %v3973
        %v3979 = vrot.slane %v3978, 4
        %v3981 = vshll.u32 %v3726, 16
        %v3983 = vrot.slane %v3981, 5
        %v3984 = vsel %vm631, %v3979, %v3983
        %v3986 = vshrl.u32 %v3727, 16
        %v3988 = vrot.slane %v3986, 4
        %v3989 = vshll.u32 %v3727, 16
        %v3991 = vrot.slane %v3989, 5
        %v3992 = vor.u32 %v3988, %v3991
        %v3993 = vrot.slane %v3992, 4
        %v3995 = vshll.u32 %v3728, 16
        %v3997 = vrot.slane %v3995, 5
        %v3998 = vsel %vm631, %v3993, %v3997
        %v3999 = vshrl.u32 %v3728, 16
        %v4001 = vrot.slane %v3999, 4
        %v4002 = vor.u32 %v4001, %v3997
        %v4003 = vrot.slane %v4002, 4
        %v4005 = vshll.u32 %v3729, 16
        %v4007 = vrot.slane %v4005, 5
        %v4008 = vsel %vm631, %v4003, %v4007
        %v4010 = vshrl.u32 %v3730, 16
        %v4012 = vrot.slane %v4010, 4
        %v4013 = vshll.u32 %v3730, 16
        %v4015 = vrot.slane %v4013, 5
        %v4016 = vor.u32 %v4012, %v4015
        %v4017 = vrot.slane %v4016, 4
        %v4019 = vshll.u32 %v3731, 16
        %v4021 = vrot.slane %v4019, 5
        %v4022 = vsel %vm631, %v4017, %v4021
        %v4023 = vshrl.u32 %v3731, 16
        %v4025 = vrot.slane %v4023, 4
        %v4026 = vor.u32 %v4025, %v4021
        %v4027 = vrot.slane %v4026, 4
        %v4029 = vshll.u32 %v3732, 16
        %v4031 = vrot.slane %v4029, 5
        %v4032 = vsel %vm631, %v4027, %v4031
        %v4034 = vshrl.u32 %v3733, 16
        %v4036 = vrot.slane %v4034, 4
        %v4037 = vshll.u32 %v3733, 16
        %v4039 = vrot.slane %v4037, 5
        %v4040 = vor.u32 %v4036, %v4039
        %v4041 = vrot.slane %v4040, 4
        %v4043 = vshll.u32 %v3734, 16
        %v4045 = vrot.slane %v4043, 5
        %v4046 = vsel %vm631, %v4041, %v4045
        %v4047 = vshrl.u32 %v3734, 16
        %v4049 = vrot.slane %v4047, 4
        %v4050 = vor.u32 %v4049, %v4045
        %v4051 = vrot.slane %v4050, 4
        %v4053 = vshll.u32 %v3735, 16
        %v4055 = vrot.slane %v4053, 5
        %v4056 = vsel %vm631, %v4051, %v4055
        %v4058 = vshrl.u32 %v3736, 16
        %v4060 = vrot.slane %v4058, 4
        %v4061 = vshll.u32 %v3736, 16
        %v4063 = vrot.slane %v4061, 5
        %v4064 = vor.u32 %v4060, %v4063
        %v4065 = vrot.slane %v4064, 4
        %v4067 = vshll.u32 %v3737, 16
        %v4069 = vrot.slane %v4067, 5
        %v4070 = vsel %vm631, %v4065, %v4069
        %v4071 = vshrl.u32 %v3737, 16
        %v4073 = vrot.slane %v4071, 4
        %v4074 = vor.u32 %v4073, %v4069
        %v4075 = vrot.slane %v4074, 4
        %v4077 = vshll.u32 %v3738, 16
        %v4079 = vrot.slane %v4077, 5
        %v4080 = vsel %vm631, %v4075, %v4079
        %v4082 = vshrl.u32 %v3739, 16
        %v4084 = vrot.slane %v4082, 4
        %v4085 = vshll.u32 %v3739, 16
        %v4087 = vrot.slane %v4085, 5
        %v4088 = vor.u32 %v4084, %v4087
        %v4089 = vrot.slane %v4088, 4
        %v4091 = vshll.u32 %v3740, 16
        %v4093 = vrot.slane %v4091, 5
        %v4094 = vsel %vm631, %v4089, %v4093
        %v4095 = vshrl.u32 %v3740, 16
        %v4097 = vrot.slane %v4095, 4
        %v4098 = vor.u32 %v4097, %v4093
        %v4099 = vrot.slane %v4098, 4
        %v4101 = vshll.u32 %v3741, 16
        %v4103 = vrot.slane %v4101, 5
        %v4104 = vsel %vm631, %v4099, %v4103
        %v4106 = vshrl.u32 %v3742, 16
        %v4108 = vrot.slane %v4106, 4
        %v4109 = vshll.u32 %v3742, 16
        %v4111 = vrot.slane %v4109, 5
        %v4112 = vor.u32 %v4108, %v4111
        %v4113 = vrot.slane %v4112, 4
        %v4115 = vshll.u32 %v3743, 16
        %v4117 = vrot.slane %v4115, 5
        %v4118 = vsel %vm631, %v4113, %v4117
        %v4119 = vshrl.u32 %v3743, 16
        %v4121 = vrot.slane %v4119, 4
        %v4122 = vor.u32 %v4121, %v4117
        %v4123 = vrot.slane %v4122, 4
        %v4125 = vshll.u32 %v3744, 16
        %v4127 = vrot.slane %v4125, 5
        %v4128 = vsel %vm631, %v4123, %v4127
        %s4129 = scalar_lea.vmem %s210, 14
        %v4130 = vld [vmem:[%s4129] sm:$0x3]
        %v4131 = vunpack.c.l.b16 %v3758
        %v4132 = vunpack.c.l.b16 %v3768
        %v4133 = vunpack.c.l.b16 %v3782
        %v4134 = vunpack.c.l.b16 %v3792
        %v4135 = vunpack.c.l.b16 %v3806
        %v4136 = vunpack.c.l.b16 %v3816
        %v4137 = vunpack.c.l.b16 %v3830
        %v4138 = vunpack.c.l.b16 %v3840
        %v4139 = vunpack.c.l.b16 %v3854
        %v4140 = vunpack.c.l.b16 %v3864
        %v4141 = vunpack.c.l.b16 %v3878
        %v4142 = vunpack.c.l.b16 %v3888
        %v4143 = vunpack.c.l.b16 %v3902
        %v4144 = vunpack.c.l.b16 %v3912
        %v4145 = vunpack.c.l.b16 %v3926
        %v4146 = vunpack.c.l.b16 %v3936
        %v4147 = vunpack.c.l.b16 %v3950
        %v4148 = vunpack.c.l.b16 %v3960
        %v4149 = vunpack.c.l.b16 %v3974
        %v4150 = vunpack.c.l.b16 %v3984
        %v4151 = vunpack.c.l.b16 %v3998
        %v4152 = vunpack.c.l.b16 %v4008
        %v4153 = vunpack.c.l.b16 %v4022
        %v4154 = vunpack.c.l.b16 %v4032
        %v4155 = vunpack.c.l.b16 %v4046
        %v4156 = vunpack.c.l.b16 %v4056
        %v4157 = vunpack.c.l.b16 %v4070
        %v4158 = vunpack.c.l.b16 %v4080
        %v4159 = vunpack.c.l.b16 %v4094
        %v4160 = vunpack.c.l.b16 %v4104
        %v4161 = vunpack.c.l.b16 %v4118
        %v4162 = vunpack.c.l.b16 %v4128
        %v4163 = vpack.c.b16 %v4132, %v4131
        %v4164 = vpack.c.b16 %v4134, %v4133
        %v4165 = vpack.c.b16 %v4136, %v4135
        %v4166 = vpack.c.b16 %v4138, %v4137
        %v4167 = vpack.c.b16 %v4140, %v4139
        %v4168 = vpack.c.b16 %v4142, %v4141
        %v4169 = vpack.c.b16 %v4144, %v4143
        %v4170 = vpack.c.b16 %v4146, %v4145
        %v4171 = vpack.c.b16 %v4148, %v4147
        %v4172 = vpack.c.b16 %v4150, %v4149
        %v4173 = vpack.c.b16 %v4152, %v4151
        %v4174 = vpack.c.b16 %v4154, %v4153
        %v4175 = vpack.c.b16 %v4156, %v4155
        %v4176 = vpack.c.b16 %v4158, %v4157
        %v4177 = vpack.c.b16 %v4160, %v4159
        %v4178 = vpack.c.b16 %v4162, %v4161
        %v4180 = vsel %vm335, %v4163, 0
        %v4183 = vsel %vm335, %v4164, 0
        %v4186 = vsel %vm335, %v4165, 0
        %v4189 = vsel %vm335, %v4166, 0
        %v4192 = vsel %vm335, %v4167, 0
        %v4195 = vsel %vm335, %v4168, 0
        %v4198 = vsel %vm335, %v4169, 0
        %v4201 = vsel %vm335, %v4170, 0
        %v4204 = vsel %vm335, %v4171, 0
        %v4207 = vsel %vm335, %v4172, 0
        %v4210 = vsel %vm335, %v4173, 0
        %v4213 = vsel %vm335, %v4174, 0
        %v4216 = vsel %vm335, %v4175, 0
        %v4219 = vsel %vm335, %v4176, 0
        %v4222 = vsel %vm335, %v4177, 0
        %v4225 = vsel %vm335, %v4178, 0
        %v4228 = vsel %vm384, %v4130, 0
        %4230 = vmatprep.subr.bf16.mxu0 0
        %4231 = vmatpush1.bf16.msra.mxu0 0
        %4232 = vmatprep.subr.bf16.mxu0 0
        %4233 = vmatpush1.bf16.msra.mxu0 0
        %4234 = vmatprep.subr.bf16.mxu0 0
        %4235 = vmatpush1.bf16.msra.mxu0 0
        %4236 = vmatprep.subr.bf16.mxu0 0
        %4237 = vmatpush1.bf16.msra.mxu0 0
        %4238 = vmatprep.subr.bf16.mxu0 0
        %4239 = vmatpush1.bf16.msra.mxu0 0
        %4240 = vmatprep.subr.bf16.mxu0 0
        %4241 = vmatpush1.bf16.msra.mxu0 0
        %4242 = vmatprep.subr.bf16.mxu0 0
        %4243 = vmatpush1.bf16.msra.mxu0 0
        %4244 = vmatprep.subr.bf16.mxu0 0
        %4245 = vmatpush1.bf16.msra.mxu0 %v4228
        %4246 = vmatprep.subr.bf16.mxu0 0
        %4247 = vmatpush2.bf16.msra.mxu0 0
        %4248 = vmatprep.subr.bf16.mxu0 0
        %4249 = vmatpush2.bf16.msra.mxu0 0
        %4250 = vmatprep.subr.bf16.mxu0 0
        %4251 = vmatpush2.bf16.msra.mxu0 0
        %4252 = vmatprep.subr.bf16.mxu0 0
        %4253 = vmatpush2.bf16.msra.mxu0 0
        %4254 = vmatprep.subr.bf16.mxu0 0
        %4255 = vmatpush2.bf16.msra.mxu0 0
        %4256 = vmatprep.subr.bf16.mxu0 0
        %4257 = vmatpush2.bf16.msra.mxu0 0
        %4258 = vmatprep.subr.bf16.mxu0 0
        %4259 = vmatpush2.bf16.msra.mxu0 0
        %4260 = vmatprep.subr.bf16.mxu0 0
        %4261 = vmatpush2.bf16.msra.mxu0 0
        %4262 = vmatprep.mubr.bf16.mxu0 0
        %4263 = vmatmul.mubr.bf16.gmra.mxu0 %v4180
        %v4264 = vpop.f32.mrf.mxu0
        %v4265 = vadd.f32 0.0, %v4264
        %v4266 = vpop.f32.mrf.mxu0
        %v4267 = vpop.f32.mrf.mxu0
        %v4268 = vadd.f32 0.0, %v4267
        %v4269 = vpop.f32.mrf.mxu0
        %4270 = vmatprep.mubr.bf16.mxu0 0
        %4271 = vmatmul.mubr.bf16.gmra.mxu0 %v4183
        %v4272 = vpop.f32.mrf.mxu0
        %v4273 = vadd.f32 0.0, %v4272
        %v4274 = vpop.f32.mrf.mxu0
        %v4275 = vpop.f32.mrf.mxu0
        %v4276 = vadd.f32 0.0, %v4275
        %v4277 = vpop.f32.mrf.mxu0
        %4278 = vmatprep.mubr.bf16.mxu0 0
        %4279 = vmatmul.mubr.bf16.gmra.mxu0 %v4186
        %v4280 = vpop.f32.mrf.mxu0
        %v4281 = vadd.f32 0.0, %v4280
        %v4282 = vpop.f32.mrf.mxu0
        %v4283 = vpop.f32.mrf.mxu0
        %v4284 = vadd.f32 0.0, %v4283
        %v4285 = vpop.f32.mrf.mxu0
        %4286 = vmatprep.mubr.bf16.mxu0 0
        %4287 = vmatmul.mubr.bf16.gmra.mxu0 %v4189
        %v4288 = vpop.f32.mrf.mxu0
        %v4289 = vadd.f32 0.0, %v4288
        %v4290 = vpop.f32.mrf.mxu0
        %v4291 = vpop.f32.mrf.mxu0
        %v4292 = vadd.f32 0.0, %v4291
        %v4293 = vpop.f32.mrf.mxu0
        %4294 = vmatprep.mubr.bf16.mxu0 0
        %4295 = vmatmul.mubr.bf16.gmra.mxu0 %v4192
        %v4296 = vpop.f32.mrf.mxu0
        %v4297 = vadd.f32 0.0, %v4296
        %v4298 = vpop.f32.mrf.mxu0
        %v4299 = vpop.f32.mrf.mxu0
        %v4300 = vadd.f32 0.0, %v4299
        %v4301 = vpop.f32.mrf.mxu0
        %4302 = vmatprep.mubr.bf16.mxu0 0
        %4303 = vmatmul.mubr.bf16.gmra.mxu0 %v4195
        %v4304 = vpop.f32.mrf.mxu0
        %v4305 = vadd.f32 0.0, %v4304
        %v4306 = vpop.f32.mrf.mxu0
        %v4307 = vpop.f32.mrf.mxu0
        %v4308 = vadd.f32 0.0, %v4307
        %v4309 = vpop.f32.mrf.mxu0
        %4310 = vmatprep.mubr.bf16.mxu0 0
        %4311 = vmatmul.mubr.bf16.gmra.mxu0 %v4198
        %v4312 = vpop.f32.mrf.mxu0
        %v4313 = vadd.f32 0.0, %v4312
        %v4314 = vpop.f32.mrf.mxu0
        %v4315 = vpop.f32.mrf.mxu0
        %v4316 = vadd.f32 0.0, %v4315
        %v4317 = vpop.f32.mrf.mxu0
        %4318 = vmatprep.mubr.bf16.mxu0 0
        %4319 = vmatmul.mubr.bf16.gmra.mxu0 %v4201
        %v4320 = vpop.f32.mrf.mxu0
        %v4321 = vadd.f32 0.0, %v4320
        %v4322 = vpop.f32.mrf.mxu0
        %v4323 = vpop.f32.mrf.mxu0
        %v4324 = vadd.f32 0.0, %v4323
        %v4325 = vpop.f32.mrf.mxu0
        %4326 = vmatprep.mubr.bf16.mxu0 0
        %4327 = vmatmul.mubr.bf16.gmra.mxu0 %v4204
        %v4328 = vpop.f32.mrf.mxu0
        %v4329 = vadd.f32 0.0, %v4328
        %v4330 = vpop.f32.mrf.mxu0
        %v4331 = vpop.f32.mrf.mxu0
        %v4332 = vadd.f32 0.0, %v4331
        %v4333 = vpop.f32.mrf.mxu0
        %4334 = vmatprep.mubr.bf16.mxu0 0
        %4335 = vmatmul.mubr.bf16.gmra.mxu0 %v4207
        %v4336 = vpop.f32.mrf.mxu0
        %v4337 = vadd.f32 0.0, %v4336
        %v4338 = vpop.f32.mrf.mxu0
        %v4339 = vpop.f32.mrf.mxu0
        %v4340 = vadd.f32 0.0, %v4339
        %v4341 = vpop.f32.mrf.mxu0
        %4342 = vmatprep.mubr.bf16.mxu0 0
        %4343 = vmatmul.mubr.bf16.gmra.mxu0 %v4210
        %v4344 = vpop.f32.mrf.mxu0
        %v4345 = vadd.f32 0.0, %v4344
        %v4346 = vpop.f32.mrf.mxu0
        %v4347 = vpop.f32.mrf.mxu0
        %v4348 = vadd.f32 0.0, %v4347
        %v4349 = vpop.f32.mrf.mxu0
        %4350 = vmatprep.mubr.bf16.mxu0 0
        %4351 = vmatmul.mubr.bf16.gmra.mxu0 %v4213
        %v4352 = vpop.f32.mrf.mxu0
        %v4353 = vadd.f32 0.0, %v4352
        %v4354 = vpop.f32.mrf.mxu0
        %v4355 = vpop.f32.mrf.mxu0
        %v4356 = vadd.f32 0.0, %v4355
        %v4357 = vpop.f32.mrf.mxu0
        %4358 = vmatprep.mubr.bf16.mxu0 0
        %4359 = vmatmul.mubr.bf16.gmra.mxu0 %v4216
        %v4360 = vpop.f32.mrf.mxu0
        %v4361 = vadd.f32 0.0, %v4360
        %v4362 = vpop.f32.mrf.mxu0
        %v4363 = vpop.f32.mrf.mxu0
        %v4364 = vadd.f32 0.0, %v4363
        %v4365 = vpop.f32.mrf.mxu0
        %4366 = vmatprep.mubr.bf16.mxu0 0
        %4367 = vmatmul.mubr.bf16.gmra.mxu0 %v4219
        %v4368 = vpop.f32.mrf.mxu0
        %v4369 = vadd.f32 0.0, %v4368
        %v4370 = vpop.f32.mrf.mxu0
        %v4371 = vpop.f32.mrf.mxu0
        %v4372 = vadd.f32 0.0, %v4371
        %v4373 = vpop.f32.mrf.mxu0
        %4374 = vmatprep.mubr.bf16.mxu0 0
        %4375 = vmatmul.mubr.bf16.gmra.mxu0 %v4222
        %v4376 = vpop.f32.mrf.mxu0
        %v4377 = vadd.f32 0.0, %v4376
        %v4378 = vpop.f32.mrf.mxu0
        %v4379 = vpop.f32.mrf.mxu0
        %v4380 = vadd.f32 0.0, %v4379
        %v4381 = vpop.f32.mrf.mxu0
        %4382 = vmatprep.mubr.bf16.mxu0 0
        %4383 = vmatmul.mubr.bf16.gmra.mxu0 %v4225
        %v4384 = vpop.f32.mrf.mxu0
        %v4385 = vadd.f32 0.0, %v4384
        %v4386 = vpop.f32.mrf.mxu0
        %v4387 = vpop.f32.mrf.mxu0
        %v4388 = vadd.f32 0.0, %v4387
        %v4389 = vpop.f32.mrf.mxu0
        %4390 = vdwg.mxu0
        %v4391 = vadd.f32 %v3665, %v4265
        %v4392 = vadd.f32 %v3666, %v4268
        %v4393 = vadd.f32 %v3667, %v4273
        %v4394 = vadd.f32 %v3668, %v4276
        %v4395 = vadd.f32 %v3669, %v4281
        %v4396 = vadd.f32 %v3670, %v4284
        %v4397 = vadd.f32 %v3671, %v4289
        %v4398 = vadd.f32 %v3672, %v4292
        %v4399 = vadd.f32 %v3673, %v4297
        %v4400 = vadd.f32 %v3674, %v4300
        %v4401 = vadd.f32 %v3675, %v4305
        %v4402 = vadd.f32 %v3676, %v4308
        %v4403 = vadd.f32 %v3677, %v4313
        %v4404 = vadd.f32 %v3678, %v4316
        %v4405 = vadd.f32 %v3679, %v4321
        %v4406 = vadd.f32 %v3680, %v4324
        %v4407 = vadd.f32 %v3681, %v4329
        %v4408 = vadd.f32 %v3682, %v4332
        %v4409 = vadd.f32 %v3683, %v4337
        %v4410 = vadd.f32 %v3684, %v4340
        %v4411 = vadd.f32 %v3685, %v4345
        %v4412 = vadd.f32 %v3686, %v4348
        %v4413 = vadd.f32 %v3687, %v4353
        %v4414 = vadd.f32 %v3688, %v4356
        %v4415 = vadd.f32 %v3689, %v4361
        %v4416 = vadd.f32 %v3690, %v4364
        %v4417 = vadd.f32 %v3691, %v4369
        %v4418 = vadd.f32 %v3692, %v4372
        %v4419 = vadd.f32 %v3693, %v4377
        %v4420 = vadd.f32 %v3694, %v4380
        %v4421 = vadd.f32 %v3695, %v4385
        %v4422 = vadd.f32 %v3696, %v4388
        %v4423 = vld [vmem:[%s3338] sm:$0xe]
        %v4424 = vld [vmem:[%s3338 + $0xc] sm:$0xe]
        %v4425 = vld [vmem:[%s3338 + $0x18] sm:$0xe]
        %v4426 = vld [vmem:[%s3338 + $0x24] sm:$0xe]
        %v4427 = vld [vmem:[%s3338 + $0x30] sm:$0xe]
        %v4428 = vld [vmem:[%s3338 + $0x3c] sm:$0xe]
        %v4429 = vld [vmem:[%s3338 + $0x48] sm:$0xe]
        %v4430 = vld [vmem:[%s3338 + $0x54] sm:$0xe]
        %v4431 = vld [vmem:[%s3338 + $0x60] sm:$0xe]
        %v4432 = vld [vmem:[%s3338 + $0x6c] sm:$0xe]
        %v4433 = vld [vmem:[%s3338 + $0x78] sm:$0xe]
        %v4434 = vld [vmem:[%s3338 + $0x84] sm:$0xe]
        %v4435 = vld [vmem:[%s3338 + $0x90] sm:$0xe]
        %v4436 = vld [vmem:[%s3338 + $0x9c] sm:$0xe]
        %v4437 = vld [vmem:[%s3338 + $0xa8] sm:$0xe]
        %v4438 = vld [vmem:[%s3338 + $0xb4] sm:$0xe]
        %v4487 = vrot.slane %v4423, 5
        %v4488 = vrot.slane %v4487, 4
        %v4489 = vrot.slane %v3698, 5
        %v4490 = vsel %vm1376, %v4488, %v4489
        %v4491 = vrot.slane %v4489, 4
        %v4492 = vrot.slane %v3699, 5
        %v4493 = vsel %vm1376, %v4491, %v4492
        %v4494 = vrot.slane %v4424, 5
        %v4495 = vrot.slane %v4494, 4
        %v4496 = vrot.slane %v3701, 5
        %v4497 = vsel %vm1376, %v4495, %v4496
        %v4498 = vrot.slane %v4496, 4
        %v4499 = vrot.slane %v3702, 5
        %v4500 = vsel %vm1376, %v4498, %v4499
        %v4501 = vrot.slane %v4425, 5
        %v4502 = vrot.slane %v4501, 4
        %v4503 = vrot.slane %v3704, 5
        %v4504 = vsel %vm1376, %v4502, %v4503
        %v4505 = vrot.slane %v4503, 4
        %v4506 = vrot.slane %v3705, 5
        %v4507 = vsel %vm1376, %v4505, %v4506
        %v4508 = vrot.slane %v4426, 5
        %v4509 = vrot.slane %v4508, 4
        %v4510 = vrot.slane %v3707, 5
        %v4511 = vsel %vm1376, %v4509, %v4510
        %v4512 = vrot.slane %v4510, 4
        %v4513 = vrot.slane %v3708, 5
        %v4514 = vsel %vm1376, %v4512, %v4513
        %v4515 = vrot.slane %v4427, 5
        %v4516 = vrot.slane %v4515, 4
        %v4517 = vrot.slane %v3710, 5
        %v4518 = vsel %vm1376, %v4516, %v4517
        %v4519 = vrot.slane %v4517, 4
        %v4520 = vrot.slane %v3711, 5
        %v4521 = vsel %vm1376, %v4519, %v4520
        %v4522 = vrot.slane %v4428, 5
        %v4523 = vrot.slane %v4522, 4
        %v4524 = vrot.slane %v3713, 5
        %v4525 = vsel %vm1376, %v4523, %v4524
        %v4526 = vrot.slane %v4524, 4
        %v4527 = vrot.slane %v3714, 5
        %v4528 = vsel %vm1376, %v4526, %v4527
        %v4529 = vrot.slane %v4429, 5
        %v4530 = vrot.slane %v4529, 4
        %v4531 = vrot.slane %v3716, 5
        %v4532 = vsel %vm1376, %v4530, %v4531
        %v4533 = vrot.slane %v4531, 4
        %v4534 = vrot.slane %v3717, 5
        %v4535 = vsel %vm1376, %v4533, %v4534
        %v4536 = vrot.slane %v4430, 5
        %v4537 = vrot.slane %v4536, 4
        %v4538 = vrot.slane %v3719, 5
        %v4539 = vsel %vm1376, %v4537, %v4538
        %v4540 = vrot.slane %v4538, 4
        %v4541 = vrot.slane %v3720, 5
        %v4542 = vsel %vm1376, %v4540, %v4541
        %v4543 = vrot.slane %v4431, 5
        %v4544 = vrot.slane %v4543, 4
        %v4545 = vrot.slane %v3722, 5
        %v4546 = vsel %vm1376, %v4544, %v4545
        %v4547 = vrot.slane %v4545, 4
        %v4548 = vrot.slane %v3723, 5
        %v4549 = vsel %vm1376, %v4547, %v4548
        %v4550 = vrot.slane %v4432, 5
        %v4551 = vrot.slane %v4550, 4
        %v4552 = vrot.slane %v3725, 5
        %v4553 = vsel %vm1376, %v4551, %v4552
        %v4554 = vrot.slane %v4552, 4
        %v4555 = vrot.slane %v3726, 5
        %v4556 = vsel %vm1376, %v4554, %v4555
        %v4557 = vrot.slane %v4433, 5
        %v4558 = vrot.slane %v4557, 4
        %v4559 = vrot.slane %v3728, 5
        %v4560 = vsel %vm1376, %v4558, %v4559
        %v4561 = vrot.slane %v4559, 4
        %v4562 = vrot.slane %v3729, 5
        %v4563 = vsel %vm1376, %v4561, %v4562
        %v4564 = vrot.slane %v4434, 5
        %v4565 = vrot.slane %v4564, 4
        %v4566 = vrot.slane %v3731, 5
        %v4567 = vsel %vm1376, %v4565, %v4566
        %v4568 = vrot.slane %v4566, 4
        %v4569 = vrot.slane %v3732, 5
        %v4570 = vsel %vm1376, %v4568, %v4569
        %v4571 = vrot.slane %v4435, 5
        %v4572 = vrot.slane %v4571, 4
        %v4573 = vrot.slane %v3734, 5
        %v4574 = vsel %vm1376, %v4572, %v4573
        %v4575 = vrot.slane %v4573, 4
        %v4576 = vrot.slane %v3735, 5
        %v4577 = vsel %vm1376, %v4575, %v4576
        %v4578 = vrot.slane %v4436, 5
        %v4579 = vrot.slane %v4578, 4
        %v4580 = vrot.slane %v3737, 5
        %v4581 = vsel %vm1376, %v4579, %v4580
        %v4582 = vrot.slane %v4580, 4
        %v4583 = vrot.slane %v3738, 5
        %v4584 = vsel %vm1376, %v4582, %v4583
        %v4585 = vrot.slane %v4437, 5
        %v4586 = vrot.slane %v4585, 4
        %v4587 = vrot.slane %v3740, 5
        %v4588 = vsel %vm1376, %v4586, %v4587
        %v4589 = vrot.slane %v4587, 4
        %v4590 = vrot.slane %v3741, 5
        %v4591 = vsel %vm1376, %v4589, %v4590
        %v4592 = vrot.slane %v4438, 5
        %v4593 = vrot.slane %v4592, 4
        %v4594 = vrot.slane %v3743, 5
        %v4595 = vsel %vm1376, %v4593, %v4594
        %v4596 = vrot.slane %v4594, 4
        %v4597 = vrot.slane %v3744, 5
        %v4598 = vsel %vm1376, %v4596, %v4597
        %s4599 = scalar_lea.vmem %s210, 16
        %v4600 = vld [vmem:[%s4599] sm:$0x3]
        %v4601 = vunpack.c.l.b16 %v4490
        %v4602 = vunpack.c.l.b16 %v4493
        %v4603 = vunpack.c.l.b16 %v4497
        %v4604 = vunpack.c.l.b16 %v4500
        %v4605 = vunpack.c.l.b16 %v4504
        %v4606 = vunpack.c.l.b16 %v4507
        %v4607 = vunpack.c.l.b16 %v4511
        %v4608 = vunpack.c.l.b16 %v4514
        %v4609 = vunpack.c.l.b16 %v4518
        %v4610 = vunpack.c.l.b16 %v4521
        %v4611 = vunpack.c.l.b16 %v4525
        %v4612 = vunpack.c.l.b16 %v4528
        %v4613 = vunpack.c.l.b16 %v4532
        %v4614 = vunpack.c.l.b16 %v4535
        %v4615 = vunpack.c.l.b16 %v4539
        %v4616 = vunpack.c.l.b16 %v4542
        %v4617 = vunpack.c.l.b16 %v4546
        %v4618 = vunpack.c.l.b16 %v4549
        %v4619 = vunpack.c.l.b16 %v4553
        %v4620 = vunpack.c.l.b16 %v4556
        %v4621 = vunpack.c.l.b16 %v4560
        %v4622 = vunpack.c.l.b16 %v4563
        %v4623 = vunpack.c.l.b16 %v4567
        %v4624 = vunpack.c.l.b16 %v4570
        %v4625 = vunpack.c.l.b16 %v4574
        %v4626 = vunpack.c.l.b16 %v4577
        %v4627 = vunpack.c.l.b16 %v4581
        %v4628 = vunpack.c.l.b16 %v4584
        %v4629 = vunpack.c.l.b16 %v4588
        %v4630 = vunpack.c.l.b16 %v4591
        %v4631 = vunpack.c.l.b16 %v4595
        %v4632 = vunpack.c.l.b16 %v4598
        %v4633 = vpack.c.b16 %v4602, %v4601
        %v4634 = vpack.c.b16 %v4604, %v4603
        %v4635 = vpack.c.b16 %v4606, %v4605
        %v4636 = vpack.c.b16 %v4608, %v4607
        %v4637 = vpack.c.b16 %v4610, %v4609
        %v4638 = vpack.c.b16 %v4612, %v4611
        %v4639 = vpack.c.b16 %v4614, %v4613
        %v4640 = vpack.c.b16 %v4616, %v4615
        %v4641 = vpack.c.b16 %v4618, %v4617
        %v4642 = vpack.c.b16 %v4620, %v4619
        %v4643 = vpack.c.b16 %v4622, %v4621
        %v4644 = vpack.c.b16 %v4624, %v4623
        %v4645 = vpack.c.b16 %v4626, %v4625
        %v4646 = vpack.c.b16 %v4628, %v4627
        %v4647 = vpack.c.b16 %v4630, %v4629
        %v4648 = vpack.c.b16 %v4632, %v4631
        %v4650 = vsel %vm335, %v4633, 0
        %v4653 = vsel %vm335, %v4634, 0
        %v4656 = vsel %vm335, %v4635, 0
        %v4659 = vsel %vm335, %v4636, 0
        %v4662 = vsel %vm335, %v4637, 0
        %v4665 = vsel %vm335, %v4638, 0
        %v4668 = vsel %vm335, %v4639, 0
        %v4671 = vsel %vm335, %v4640, 0
        %v4674 = vsel %vm335, %v4641, 0
        %v4677 = vsel %vm335, %v4642, 0
        %v4680 = vsel %vm335, %v4643, 0
        %v4683 = vsel %vm335, %v4644, 0
        %v4686 = vsel %vm335, %v4645, 0
        %v4689 = vsel %vm335, %v4646, 0
        %v4692 = vsel %vm335, %v4647, 0
        %v4695 = vsel %vm335, %v4648, 0
        %v4698 = vsel %vm384, %v4600, 0
        %4700 = vmatprep.subr.bf16.mxu0 0
        %4701 = vmatpush1.bf16.msra.mxu0 0
        %4702 = vmatprep.subr.bf16.mxu0 0
        %4703 = vmatpush1.bf16.msra.mxu0 0
        %4704 = vmatprep.subr.bf16.mxu0 0
        %4705 = vmatpush1.bf16.msra.mxu0 0
        %4706 = vmatprep.subr.bf16.mxu0 0
        %4707 = vmatpush1.bf16.msra.mxu0 0
        %4708 = vmatprep.subr.bf16.mxu0 0
        %4709 = vmatpush1.bf16.msra.mxu0 0
        %4710 = vmatprep.subr.bf16.mxu0 0
        %4711 = vmatpush1.bf16.msra.mxu0 0
        %4712 = vmatprep.subr.bf16.mxu0 0
        %4713 = vmatpush1.bf16.msra.mxu0 0
        %4714 = vmatprep.subr.bf16.mxu0 0
        %4715 = vmatpush1.bf16.msra.mxu0 %v4698
        %4716 = vmatprep.subr.bf16.mxu0 0
        %4717 = vmatpush2.bf16.msra.mxu0 0
        %4718 = vmatprep.subr.bf16.mxu0 0
        %4719 = vmatpush2.bf16.msra.mxu0 0
        %4720 = vmatprep.subr.bf16.mxu0 0
        %4721 = vmatpush2.bf16.msra.mxu0 0
        %4722 = vmatprep.subr.bf16.mxu0 0
        %4723 = vmatpush2.bf16.msra.mxu0 0
        %4724 = vmatprep.subr.bf16.mxu0 0
        %4725 = vmatpush2.bf16.msra.mxu0 0
        %4726 = vmatprep.subr.bf16.mxu0 0
        %4727 = vmatpush2.bf16.msra.mxu0 0
        %4728 = vmatprep.subr.bf16.mxu0 0
        %4729 = vmatpush2.bf16.msra.mxu0 0
        %4730 = vmatprep.subr.bf16.mxu0 0
        %4731 = vmatpush2.bf16.msra.mxu0 0
        %4732 = vmatprep.mubr.bf16.mxu0 0
        %4733 = vmatmul.mubr.bf16.gmra.mxu0 %v4650
        %v4734 = vpop.f32.mrf.mxu0
        %v4735 = vadd.f32 0.0, %v4734
        %v4736 = vpop.f32.mrf.mxu0
        %v4737 = vpop.f32.mrf.mxu0
        %v4738 = vadd.f32 0.0, %v4737
        %v4739 = vpop.f32.mrf.mxu0
        %4740 = vmatprep.mubr.bf16.mxu0 0
        %4741 = vmatmul.mubr.bf16.gmra.mxu0 %v4653
        %v4742 = vpop.f32.mrf.mxu0
        %v4743 = vadd.f32 0.0, %v4742
        %v4744 = vpop.f32.mrf.mxu0
        %v4745 = vpop.f32.mrf.mxu0
        %v4746 = vadd.f32 0.0, %v4745
        %v4747 = vpop.f32.mrf.mxu0
        %4748 = vmatprep.mubr.bf16.mxu0 0
        %4749 = vmatmul.mubr.bf16.gmra.mxu0 %v4656
        %v4750 = vpop.f32.mrf.mxu0
        %v4751 = vadd.f32 0.0, %v4750
        %v4752 = vpop.f32.mrf.mxu0
        %v4753 = vpop.f32.mrf.mxu0
        %v4754 = vadd.f32 0.0, %v4753
        %v4755 = vpop.f32.mrf.mxu0
        %4756 = vmatprep.mubr.bf16.mxu0 0
        %4757 = vmatmul.mubr.bf16.gmra.mxu0 %v4659
        %v4758 = vpop.f32.mrf.mxu0
        %v4759 = vadd.f32 0.0, %v4758
        %v4760 = vpop.f32.mrf.mxu0
        %v4761 = vpop.f32.mrf.mxu0
        %v4762 = vadd.f32 0.0, %v4761
        %v4763 = vpop.f32.mrf.mxu0
        %4764 = vmatprep.mubr.bf16.mxu0 0
        %4765 = vmatmul.mubr.bf16.gmra.mxu0 %v4662
        %v4766 = vpop.f32.mrf.mxu0
        %v4767 = vadd.f32 0.0, %v4766
        %v4768 = vpop.f32.mrf.mxu0
        %v4769 = vpop.f32.mrf.mxu0
        %v4770 = vadd.f32 0.0, %v4769
        %v4771 = vpop.f32.mrf.mxu0
        %4772 = vmatprep.mubr.bf16.mxu0 0
        %4773 = vmatmul.mubr.bf16.gmra.mxu0 %v4665
        %v4774 = vpop.f32.mrf.mxu0
        %v4775 = vadd.f32 0.0, %v4774
        %v4776 = vpop.f32.mrf.mxu0
        %v4777 = vpop.f32.mrf.mxu0
        %v4778 = vadd.f32 0.0, %v4777
        %v4779 = vpop.f32.mrf.mxu0
        %4780 = vmatprep.mubr.bf16.mxu0 0
        %4781 = vmatmul.mubr.bf16.gmra.mxu0 %v4668
        %v4782 = vpop.f32.mrf.mxu0
        %v4783 = vadd.f32 0.0, %v4782
        %v4784 = vpop.f32.mrf.mxu0
        %v4785 = vpop.f32.mrf.mxu0
        %v4786 = vadd.f32 0.0, %v4785
        %v4787 = vpop.f32.mrf.mxu0
        %4788 = vmatprep.mubr.bf16.mxu0 0
        %4789 = vmatmul.mubr.bf16.gmra.mxu0 %v4671
        %v4790 = vpop.f32.mrf.mxu0
        %v4791 = vadd.f32 0.0, %v4790
        %v4792 = vpop.f32.mrf.mxu0
        %v4793 = vpop.f32.mrf.mxu0
        %v4794 = vadd.f32 0.0, %v4793
        %v4795 = vpop.f32.mrf.mxu0
        %4796 = vmatprep.mubr.bf16.mxu0 0
        %4797 = vmatmul.mubr.bf16.gmra.mxu0 %v4674
        %v4798 = vpop.f32.mrf.mxu0
        %v4799 = vadd.f32 0.0, %v4798
        %v4800 = vpop.f32.mrf.mxu0
        %v4801 = vpop.f32.mrf.mxu0
        %v4802 = vadd.f32 0.0, %v4801
        %v4803 = vpop.f32.mrf.mxu0
        %4804 = vmatprep.mubr.bf16.mxu0 0
        %4805 = vmatmul.mubr.bf16.gmra.mxu0 %v4677
        %v4806 = vpop.f32.mrf.mxu0
        %v4807 = vadd.f32 0.0, %v4806
        %v4808 = vpop.f32.mrf.mxu0
        %v4809 = vpop.f32.mrf.mxu0
        %v4810 = vadd.f32 0.0, %v4809
        %v4811 = vpop.f32.mrf.mxu0
        %4812 = vmatprep.mubr.bf16.mxu0 0
        %4813 = vmatmul.mubr.bf16.gmra.mxu0 %v4680
        %v4814 = vpop.f32.mrf.mxu0
        %v4815 = vadd.f32 0.0, %v4814
        %v4816 = vpop.f32.mrf.mxu0
        %v4817 = vpop.f32.mrf.mxu0
        %v4818 = vadd.f32 0.0, %v4817
        %v4819 = vpop.f32.mrf.mxu0
        %4820 = vmatprep.mubr.bf16.mxu0 0
        %4821 = vmatmul.mubr.bf16.gmra.mxu0 %v4683
        %v4822 = vpop.f32.mrf.mxu0
        %v4823 = vadd.f32 0.0, %v4822
        %v4824 = vpop.f32.mrf.mxu0
        %v4825 = vpop.f32.mrf.mxu0
        %v4826 = vadd.f32 0.0, %v4825
        %v4827 = vpop.f32.mrf.mxu0
        %4828 = vmatprep.mubr.bf16.mxu0 0
        %4829 = vmatmul.mubr.bf16.gmra.mxu0 %v4686
        %v4830 = vpop.f32.mrf.mxu0
        %v4831 = vadd.f32 0.0, %v4830
        %v4832 = vpop.f32.mrf.mxu0
        %v4833 = vpop.f32.mrf.mxu0
        %v4834 = vadd.f32 0.0, %v4833
        %v4835 = vpop.f32.mrf.mxu0
        %4836 = vmatprep.mubr.bf16.mxu0 0
        %4837 = vmatmul.mubr.bf16.gmra.mxu0 %v4689
        %v4838 = vpop.f32.mrf.mxu0
        %v4839 = vadd.f32 0.0, %v4838
        %v4840 = vpop.f32.mrf.mxu0
        %v4841 = vpop.f32.mrf.mxu0
        %v4842 = vadd.f32 0.0, %v4841
        %v4843 = vpop.f32.mrf.mxu0
        %4844 = vmatprep.mubr.bf16.mxu0 0
        %4845 = vmatmul.mubr.bf16.gmra.mxu0 %v4692
        %v4846 = vpop.f32.mrf.mxu0
        %v4847 = vadd.f32 0.0, %v4846
        %v4848 = vpop.f32.mrf.mxu0
        %v4849 = vpop.f32.mrf.mxu0
        %v4850 = vadd.f32 0.0, %v4849
        %v4851 = vpop.f32.mrf.mxu0
        %4852 = vmatprep.mubr.bf16.mxu0 0
        %4853 = vmatmul.mubr.bf16.gmra.mxu0 %v4695
        %v4854 = vpop.f32.mrf.mxu0
        %v4855 = vadd.f32 0.0, %v4854
        %v4856 = vpop.f32.mrf.mxu0
        %v4857 = vpop.f32.mrf.mxu0
        %v4858 = vadd.f32 0.0, %v4857
        %v4859 = vpop.f32.mrf.mxu0
        %4860 = vdwg.mxu0
        %v4861 = vadd.f32 %v4391, %v4735
        %v4862 = vadd.f32 %v4392, %v4738
        %v4863 = vadd.f32 %v4393, %v4743
        %v4864 = vadd.f32 %v4394, %v4746
        %v4865 = vadd.f32 %v4395, %v4751
        %v4866 = vadd.f32 %v4396, %v4754
        %v4867 = vadd.f32 %v4397, %v4759
        %v4868 = vadd.f32 %v4398, %v4762
        %v4869 = vadd.f32 %v4399, %v4767
        %v4870 = vadd.f32 %v4400, %v4770
        %v4871 = vadd.f32 %v4401, %v4775
        %v4872 = vadd.f32 %v4402, %v4778
        %v4873 = vadd.f32 %v4403, %v4783
        %v4874 = vadd.f32 %v4404, %v4786
        %v4875 = vadd.f32 %v4405, %v4791
        %v4876 = vadd.f32 %v4406, %v4794
        %v4877 = vadd.f32 %v4407, %v4799
        %v4878 = vadd.f32 %v4408, %v4802
        %v4879 = vadd.f32 %v4409, %v4807
        %v4880 = vadd.f32 %v4410, %v4810
        %v4881 = vadd.f32 %v4411, %v4815
        %v4882 = vadd.f32 %v4412, %v4818
        %v4883 = vadd.f32 %v4413, %v4823
        %v4884 = vadd.f32 %v4414, %v4826
        %v4885 = vadd.f32 %v4415, %v4831
        %v4886 = vadd.f32 %v4416, %v4834
        %v4887 = vadd.f32 %v4417, %v4839
        %v4888 = vadd.f32 %v4418, %v4842
        %v4889 = vadd.f32 %v4419, %v4847
        %v4890 = vadd.f32 %v4420, %v4850
        %v4891 = vadd.f32 %v4421, %v4855
        %v4892 = vadd.f32 %v4422, %v4858
        %v4893 = vmax.f32 %v4861, 0.0
        %v4894 = vmax.f32 %v4862, 0.0
        %v4895 = vmax.f32 %v4863, 0.0
        %v4896 = vmax.f32 %v4864, 0.0
        %v4897 = vmax.f32 %v4865, 0.0
        %v4898 = vmax.f32 %v4866, 0.0
        %v4899 = vmax.f32 %v4867, 0.0
        %v4900 = vmax.f32 %v4868, 0.0
        %v4901 = vmax.f32 %v4869, 0.0
        %v4902 = vmax.f32 %v4870, 0.0
        %v4903 = vmax.f32 %v4871, 0.0
        %v4904 = vmax.f32 %v4872, 0.0
        %v4905 = vmax.f32 %v4873, 0.0
        %v4906 = vmax.f32 %v4874, 0.0
        %v4907 = vmax.f32 %v4875, 0.0
        %v4908 = vmax.f32 %v4876, 0.0
        %v4909 = vmax.f32 %v4877, 0.0
        %v4910 = vmax.f32 %v4878, 0.0
        %v4911 = vmax.f32 %v4879, 0.0
        %v4912 = vmax.f32 %v4880, 0.0
        %v4913 = vmax.f32 %v4881, 0.0
        %v4914 = vmax.f32 %v4882, 0.0
        %v4915 = vmax.f32 %v4883, 0.0
        %v4916 = vmax.f32 %v4884, 0.0
        %v4917 = vmax.f32 %v4885, 0.0
        %v4918 = vmax.f32 %v4886, 0.0
        %v4919 = vmax.f32 %v4887, 0.0
        %v4920 = vmax.f32 %v4888, 0.0
        %v4921 = vmax.f32 %v4889, 0.0
        %v4922 = vmax.f32 %v4890, 0.0
        %v4923 = vmax.f32 %v4891, 0.0
        %v4924 = vmax.f32 %v4892, 0.0
        %4925 = vst [vmem:[%s201] sm:$0xff] %v4893
        %4926 = vst [vmem:[%s201 + $0x8] sm:$0xff] %v4894
        %4927 = vst [vmem:[%s201 + $0x10] sm:$0xff] %v4895
        %4928 = vst [vmem:[%s201 + $0x18] sm:$0xff] %v4896
        %4929 = vst [vmem:[%s201 + $0x20] sm:$0xff] %v4897
        %4930 = vst [vmem:[%s201 + $0x28] sm:$0xff] %v4898
        %4931 = vst [vmem:[%s201 + $0x30] sm:$0xff] %v4899
        %4932 = vst [vmem:[%s201 + $0x38] sm:$0xff] %v4900
        %4933 = vst [vmem:[%s201 + $0x40] sm:$0xff] %v4901
        %4934 = vst [vmem:[%s201 + $0x48] sm:$0xff] %v4902
        %4935 = vst [vmem:[%s201 + $0x50] sm:$0xff] %v4903
        %4936 = vst [vmem:[%s201 + $0x58] sm:$0xff] %v4904
        %4937 = vst [vmem:[%s201 + $0x60] sm:$0xff] %v4905
        %4938 = vst [vmem:[%s201 + $0x68] sm:$0xff] %v4906
        %4939 = vst [vmem:[%s201 + $0x70] sm:$0xff] %v4907
        %4940 = vst [vmem:[%s201 + $0x78] sm:$0xff] %v4908
        %4941 = vst [vmem:[%s201 + $0x80] sm:$0xff] %v4909
        %4942 = vst [vmem:[%s201 + $0x88] sm:$0xff] %v4910
        %4943 = vst [vmem:[%s201 + $0x90] sm:$0xff] %v4911
        %4944 = vst [vmem:[%s201 + $0x98] sm:$0xff] %v4912
        %4945 = vst [vmem:[%s201 + $0xa0] sm:$0xff] %v4913
        %4946 = vst [vmem:[%s201 + $0xa8] sm:$0xff] %v4914
        %4947 = vst [vmem:[%s201 + $0xb0] sm:$0xff] %v4915
        %4948 = vst [vmem:[%s201 + $0xb8] sm:$0xff] %v4916
        %4949 = vst [vmem:[%s201 + $0xc0] sm:$0xff] %v4917
        %4950 = vst [vmem:[%s201 + $0xc8] sm:$0xff] %v4918
        %4951 = vst [vmem:[%s201 + $0xd0] sm:$0xff] %v4919
        %4952 = vst [vmem:[%s201 + $0xd8] sm:$0xff] %v4920
        %4953 = vst [vmem:[%s201 + $0xe0] sm:$0xff] %v4921
        %4954 = vst [vmem:[%s201 + $0xe8] sm:$0xff] %v4922
        %4955 = vst [vmem:[%s201 + $0xf0] sm:$0xff] %v4923
        %4956 = vst [vmem:[%s201 + $0xf8] sm:$0xff] %v4924
        %s4957 = sand.u32 %s117, 1
        %s4958 = scalar_lea.sflag [#allocation3], %s4957
        %s4959 = sand.u32 %s117, 1
        %s4960 = smul.addr %s4959, 256
        %s4961 = scalar_lea.vmem [#allocation2], %s4960
        // Predicated region
        $region33: #{tpu_custom_call.1} parent=31 // pred_check
          %p4962 = pneg %p127
        $region34: #{tpu_custom_call.1} parent=31 // pred_check_branch
          %4964 = sbr.rel (%p4962) target = $region36
        $region35: #{tpu_custom_call.1} parent=31 // pred_region
          %s4966 = ssub.s32 4096, 4096
          %4967 = vsyncadd %s4958, %s4966
          %s4968 = smul.addr %s21, 32
          %s4969 = sadd.s32 %s22, %s4968
          %s4970 = smul.addr %s4969, 128
          %s4971 = scalar_lea.hbm %s3, %s4970
          %s4972 = sshll.u32 %s4961, 4
          %s4973 = int_to_ptr.vmem [resolvable:$true] %s4972
          %4978 = dma.vmem_to_hbm [thread:$0]  %s4973, 4096, %s4971, %s4958, 128, 128, 8
        $region36: #{tpu_custom_call.1} parent=31 // pred_fallthru
          _
      $region32: #{tpu_custom_call.1} parent=5 // pred_fallthru
        _
      %p4979 = scmp.le.s32.totalorder 2, %s12
      // Predicated region
      $region37: #{tpu_custom_call.1} parent=5 // pred_check
        %p4980 = pneg %p4979
      $region38: #{tpu_custom_call.1} parent=5 // pred_check_branch
        %4982 = sbr.rel (%p4980) target = $region40
      $region39: #{tpu_custom_call.1} parent=5 // pred_region
        %s4983 = ssub.s32 %s12, 2
        // Predicated region
        $region41: #{tpu_custom_call.1} parent=39 // pred_check
          %p4984 = pneg %p133
        $region42: #{tpu_custom_call.1} parent=39 // pred_check_branch
          %4986 = sbr.rel (%p4984) target = $region44
        $region43: #{tpu_custom_call.1} parent=39 // pred_region
          %s4987 = sand.u32 %s118, 1
          %s4988 = scalar_lea.sflag [#allocation3], %s4987
          %s4989 = sand.u32 %s118, 1
          %s4990 = smul.addr %s4989, 256
          %s4991 = scalar_lea.vmem [#allocation2], %s4990
          %4992 = dma.done %s4988, 4096
        $region44: #{tpu_custom_call.1} parent=39 // pred_fallthru
          _
      $region40: #{tpu_custom_call.1} parent=5 // pred_fallthru
        _
    $region6: #{tpu_custom_call.1} parent=1 // loop_footer
      %s16 = sadd.s32 1, %s12
    $region7: #{tpu_custom_call.1} parent=1 // loop_footer_branch
      %11 = sbr.rel target = $region3
    $region8: #{tpu_custom_call.1} parent=1 // loop_exit
      _
    %4993 = vsyncpa [#allocation3], 1
    %s4994 = scalar_lea.sflag [#allocation3], 1
    %4995 = vsyncpa %s4994, 1

</llo_original>
